<compile_context>
chip_gen: v6e
topology: v6e:2x2x1
jax: 0.10.0
libtpu: 0.0.40
codegen_flags: <defaults>
</compile_context>

<pallas_src>
import math

import jax
import jax.numpy as jnp
import numpy as np
from jax.experimental import pallas as pl
from jax.experimental.pallas import tpu as pltpu

# ---- small, module-consistent shapes ----
BATCH = 2
GRID_H = GRID_W = 8
SEQ = GRID_H * GRID_W          # 64 tokens
D_MODEL = 32
NUM_HEADS = 4
D_K = D_MODEL // NUM_HEADS     # 8
D_FF = 64
MAX_DIST = 8
EPS = 1e-5                     # nn.LayerNorm default

_INV_SQRT2 = 1.0 / math.sqrt(2.0)


def _erf_poly(z):
    """Abramowitz & Stegun 7.1.26 erf approximation, |abs error| <= 1.5e-7.
    Built only from elementwise ops that always lower in Mosaic."""
    p = 0.3275911
    a1, a2, a3, a4, a5 = (0.254829592, -0.284496736, 1.421413741,
                          -1.453152027, 1.061405429)
    az = jnp.abs(z)
    t = 1.0 / (1.0 + p * az)
    poly = ((((a5 * t + a4) * t + a3) * t + a2) * t + a1) * t
    e = 1.0 - poly * jnp.exp(-(az * az))
    return jnp.where(z >= 0, e, -e)


def _gelu_exact(x):
    """nn.GELU() default (erf form)."""
    return 0.5 * x * (1.0 + _erf_poly(x * _INV_SQRT2))


def decoder_block_kernel(x_ref,
                         wqkv_ref, wo_ref,
                         g1_ref, b1_ref, g2_ref, b2_ref,
                         w1_ref, bf1_ref, w2_ref, bf2_ref,
                         o_ref):
    """Whole forward in one invocation over the (B*S, D) slab:
    two LayerNorms, fused QKV projection, per-(batch, head) softmax attention
    via static slices, output projection, GELU feed-forward, both residuals."""
    x = x_ref[...]                                   # (B*S, D) = (128, 32)

    # ---------------- norm1 ----------------
    mu = jnp.mean(x, axis=-1, keepdims=True)
    var = jnp.mean((x - mu) ** 2, axis=-1, keepdims=True)
    h = (x - mu) * jax.lax.rsqrt(var + EPS) * g1_ref[...] + b1_ref[...]

    # ---------------- fused QKV projection ----------------
    # wqkv = [Wq / sqrt(d_k) | Wk | Wv]  -> columns [0:D), [D:2D), [2D:3D)
    qkv = jnp.dot(h, wqkv_ref[...], preferred_element_type=jnp.float32)  # (128, 96)

    # ---------------- multi-head attention (per batch, per head) ----------
    # Static row slices keep batches independent; static lane slices pick the
    # head; no reshape/transpose relayouts.
    batch_outs = []
    for b in range(BATCH):
        r0 = b * SEQ
        head_outs = []
        for hh in range(NUM_HEADS):
            c = hh * D_K
            q_bh = qkv[r0:r0 + SEQ, c:c + D_K]                          # (64, 8)
            k_bh = qkv[r0:r0 + SEQ, D_MODEL + c:D_MODEL + c + D_K]      # (64, 8)
            v_bh = qkv[r0:r0 + SEQ, 2 * D_MODEL + c:2 * D_MODEL + c + D_K]
            # scores = q @ k^T  (contraction over d_k; no explicit transpose)
            scores = jax.lax.dot_general(
                q_bh, k_bh, (((1,), (1,)), ((), ())),
                preferred_element_type=jnp.float32)                     # (64, 64)
            m = jnp.max(scores, axis=-1, keepdims=True)
            p = jnp.exp(scores - m)
            unnorm = jnp.dot(p, v_bh, preferred_element_type=jnp.float32)  # (64, 8)
            denom = jnp.sum(p, axis=-1, keepdims=True)                  # (64, 1)
            head_outs.append(unnorm / denom)        # deferred softmax normalization
        batch_outs.append(jnp.concatenate(head_outs, axis=-1))          # (64, 32)
    attn = jnp.concatenate(batch_outs, axis=0)                          # (128, 32)

    attn_out = jnp.dot(attn, wo_ref[...], preferred_element_type=jnp.float32)

    # residual 1 (dropout is identity in eval)
    x1 = x + attn_out

    # ---------------- norm2 ----------------
    mu2 = jnp.mean(x1, axis=-1, keepdims=True)
    var2 = jnp.mean((x1 - mu2) ** 2, axis=-1, keepdims=True)
    h2 = (x1 - mu2) * jax.lax.rsqrt(var2 + EPS) * g2_ref[...] + b2_ref[...]

    # ---------------- feed-forward (Linear -> exact GELU -> Linear) --------
    f = jnp.dot(h2, w1_ref[...], preferred_element_type=jnp.float32) + bf1_ref[...]
    f = _gelu_exact(f)                               # nn.GELU() default: erf form
    f = jnp.dot(f, w2_ref[...], preferred_element_type=jnp.float32) + bf2_ref[...]

    # residual 2, fused into the store
    o_ref[...] = x1 + f


def transformer_decoder_block_2d(x, params):
    B, S, D = x.shape
    assert (B, S, D) == (BATCH, SEQ, D_MODEL)
    (wq, wk, wv, wo, g1, b1, g2, b2, w1, bf1, w2, bf2) = params

    # Host-side folds: 1/sqrt(d_k) into Wq, and Q/K/V fused into one weight.
    wqkv = jnp.concatenate([wq * (1.0 / math.sqrt(D_K)), wk, wv], axis=1)  # (D, 3D)

    # Fold batch into a single (B*S, D) slab (free view) — one kernel step.
    x2d = x.reshape(B * S, D)

    def fixed(arr):
        nd = arr.ndim
        return pl.BlockSpec(arr.shape, lambda i, _nd=nd: (0,) * _nd)

    in_arrays = (x2d, wqkv, wo, g1, b1, g2, b2, w1, bf1, w2, bf2)
    in_specs = [fixed(a) for a in in_arrays]
    out_specs = pl.BlockSpec((B * S, D), lambda i: (0, 0))

    out = pl.pallas_call(
        decoder_block_kernel,
        out_shape=jax.ShapeDtypeStruct((B * S, D), jnp.float32),
        grid=(1,),
        in_specs=in_specs,
        out_specs=out_specs,
        compiler_params=pltpu.CompilerParams(
            dimension_semantics=("arbitrary",)),
    )(*in_arrays)
    return out.reshape(B, S, D)


def reference_forward(x, params):
    """Pure-JAX replica of the executed PyTorch forward (eval mode, SDPA path)."""
    (wq, wk, wv, wo, g1, b1, g2, b2, w1, bf1, w2, bf2) = params

    def ln(z, g, bb):
        mu = jnp.mean(z, axis=-1, keepdims=True)
        var = jnp.mean((z - mu) ** 2, axis=-1, keepdims=True)
        return (z - mu) / jnp.sqrt(var + EPS) * g + bb

    h = ln(x, g1[0], b1[0])
    B, S, D = x.shape
    q = (h @ wq).reshape(B, S, NUM_HEADS, D_K).transpose(0, 2, 1, 3)
    k = (h @ wk).reshape(B, S, NUM_HEADS, D_K).transpose(0, 2, 1, 3)
    v = (h @ wv).reshape(B, S, NUM_HEADS, D_K).transpose(0, 2, 1, 3)
    s = jnp.einsum('bhqd,bhkd->bhqk', q, k) / math.sqrt(D_K)
    w = jax.nn.softmax(s, axis=-1)
    o = jnp.einsum('bhqk,bhkd->bhqd', w, v).transpose(0, 2, 1, 3).reshape(B, S, D)
    x1 = x + o @ wo
    h2 = ln(x1, g2[0], b2[0])
    f = jax.nn.gelu(h2 @ w1 + bf1[0], approximate=False) @ w2 + bf2[0]
    return x1 + f


def make_params(key):
    ks = jax.random.split(key, 12)
    scale = 1.0 / math.sqrt(D_MODEL)
    # Linear weights stored pre-transposed to (in, out) so the kernel does x @ W.
    wq = jax.random.normal(ks[0], (D_MODEL, D_MODEL), jnp.float32) * scale
    wk = jax.random.normal(ks[1], (D_MODEL, D_MODEL), jnp.float32) * scale
    wv = jax.random.normal(ks[2], (D_MODEL, D_MODEL), jnp.float32) * scale
    wo = jax.random.normal(ks[3], (D_MODEL, D_MODEL), jnp.float32) * scale
    g1 = jnp.ones((1, D_MODEL), jnp.float32)
    b1 = jnp.zeros((1, D_MODEL), jnp.float32)
    g2 = jnp.ones((1, D_MODEL), jnp.float32)
    b2 = jnp.zeros((1, D_MODEL), jnp.float32)
    w1 = jax.random.normal(ks[4], (D_MODEL, D_FF), jnp.float32) * scale
    bf1 = jax.random.normal(ks[5], (1, D_FF), jnp.float32) * 0.02
    w2 = jax.random.normal(ks[6], (D_FF, D_MODEL), jnp.float32) / math.sqrt(D_FF)
    bf2 = jax.random.normal(ks[7], (1, D_MODEL), jnp.float32) * 0.02
    return (wq, wk, wv, wo, g1, b1, g2, b2, w1, bf1, w2, bf2)


def make_rel_bias_and_idx(key):
    """Mirrors RelativeMultiHeadAttention.__init__ parameter shapes.
    Unused by the executed forward path (the SDPA branch discards the biased
    scores), so it is intentionally not consumed by the kernel."""
    # TODO(synk): if torch < 2.0 semantics (softmax(scores+bias)) are ever
    # required, gather rel_bias[rel_idx] host-side and add it to `scores`
    # inside the per-head loop.
    coords = jnp.stack(jnp.meshgrid(jnp.arange(GRID_H), jnp.arange(GRID_W),
                                    indexing='ij'), axis=-1).reshape(SEQ, 2)
    diff = coords[:, None, :] - coords[None, :, :]
    diff = jnp.clip(diff, -MAX_DIST, MAX_DIST) + MAX_DIST
    rel_idx = diff[..., 0] * (2 * MAX_DIST + 1) + diff[..., 1]
    num_rel = (2 * MAX_DIST + 1) ** 2
    rel_bias = jax.random.normal(key, (num_rel, NUM_HEADS),
                                 jnp.float32) * MAX_DIST ** (-0.5)
    return rel_bias, rel_idx


if __name__ == "__main__":
    key = jax.random.PRNGKey(0)
    kx, kp, kb = jax.random.split(key, 3)

    x = jax.random.normal(kx, (BATCH, SEQ, D_MODEL), jnp.float32)
    params = make_params(kp)
    _rel_bias, _rel_idx = make_rel_bias_and_idx(kb)  # constructed, unused (see header)

    out = transformer_decoder_block_2d(x, params)
    out = jax.block_until_ready(out)

    ref = reference_forward(x, params)
    np.testing.assert_allclose(np.asarray(out), np.asarray(ref),
                               rtol=2e-5, atol=2e-5)
    print("KERNEL_OK")
</pallas_src>

<mosaic_0001>
module attributes {stable_mosaic.version = 11 : i64} {
  func.func @decoder_block_kernel(%arg0: i32, %arg1: memref<128x32xf32, #tpu.memory_space<vmem>>, %arg2: memref<32x96xf32, #tpu.memory_space<vmem>>, %arg3: memref<32x32xf32, #tpu.memory_space<vmem>>, %arg4: memref<1x32xf32, #tpu.memory_space<vmem>>, %arg5: memref<1x32xf32, #tpu.memory_space<vmem>>, %arg6: memref<1x32xf32, #tpu.memory_space<vmem>>, %arg7: memref<1x32xf32, #tpu.memory_space<vmem>>, %arg8: memref<32x64xf32, #tpu.memory_space<vmem>>, %arg9: memref<1x64xf32, #tpu.memory_space<vmem>>, %arg10: memref<64x32xf32, #tpu.memory_space<vmem>>, %arg11: memref<1x32xf32, #tpu.memory_space<vmem>>, %arg12: memref<128x32xf32, #tpu.memory_space<vmem>>) attributes {dimension_semantics = [#tpu.dimension_semantics<arbitrary>], iteration_bounds = array<i64: 1>, scalar_prefetch = 0 : i64, scratch_operands = 0 : i64, tpu.core_type = #tpu.core_type<tc>, window_params = [{pipeline_mode = #tpu.pipeline_mode<synchronous>, transform_indices = @transform_0, window_bounds = array<i64: 128, 32>}, {pipeline_mode = #tpu.pipeline_mode<synchronous>, transform_indices = @transform_1, window_bounds = array<i64: 32, 96>}, {pipeline_mode = #tpu.pipeline_mode<synchronous>, transform_indices = @transform_2, window_bounds = array<i64: 32, 32>}, {pipeline_mode = #tpu.pipeline_mode<synchronous>, transform_indices = @transform_3, window_bounds = array<i64: 1, 32>}, {pipeline_mode = #tpu.pipeline_mode<synchronous>, transform_indices = @transform_4, window_bounds = array<i64: 1, 32>}, {pipeline_mode = #tpu.pipeline_mode<synchronous>, transform_indices = @transform_5, window_bounds = array<i64: 1, 32>}, {pipeline_mode = #tpu.pipeline_mode<synchronous>, transform_indices = @transform_6, window_bounds = array<i64: 1, 32>}, {pipeline_mode = #tpu.pipeline_mode<synchronous>, transform_indices = @transform_7, window_bounds = array<i64: 32, 64>}, {pipeline_mode = #tpu.pipeline_mode<synchronous>, transform_indices = @transform_8, window_bounds = array<i64: 1, 64>}, {pipeline_mode = #tpu.pipeline_mode<synchronous>, transform_indices = @transform_9, window_bounds = array<i64: 64, 32>}, {pipeline_mode = #tpu.pipeline_mode<synchronous>, transform_indices = @transform_10, window_bounds = array<i64: 1, 32>}, {pipeline_mode = #tpu.pipeline_mode<synchronous>, transform_indices = @transform_11, window_bounds = array<i64: 128, 32>}]} {
    %c0 = arith.constant 0 : index
    %c0_0 = arith.constant 0 : index
    %0 = vector.load %arg1[%c0, %c0_0] : memref<128x32xf32, #tpu.memory_space<vmem>>, vector<128x32xf32>
    %cst = arith.constant dense<0.000000e+00> : vector<128xf32>
    %1 = vector.multi_reduction <add>, %0, %cst [1] : vector<128x32xf32> to vector<128xf32>
    %2 = vector.shape_cast %1 : vector<128xf32> to vector<128x1xf32>
    %cst_1 = arith.constant 3.200000e+01 : f32
    %3 = vector.broadcast %cst_1 : f32 to vector<128x1xf32>
    %4 = arith.divf %2, %3 : vector<128x1xf32>
    %5 = vector.broadcast %4 : vector<128x1xf32> to vector<128x32xf32>
    %6 = arith.subf %0, %5 : vector<128x32xf32>
    %7 = arith.mulf %6, %6 : vector<128x32xf32>
    %cst_2 = arith.constant dense<0.000000e+00> : vector<128xf32>
    %8 = vector.multi_reduction <add>, %7, %cst_2 [1] : vector<128x32xf32> to vector<128xf32>
    %9 = vector.shape_cast %8 : vector<128xf32> to vector<128x1xf32>
    %cst_3 = arith.constant 3.200000e+01 : f32
    %10 = vector.broadcast %cst_3 : f32 to vector<128x1xf32>
    %11 = arith.divf %9, %10 : vector<128x1xf32>
    %12 = vector.broadcast %4 : vector<128x1xf32> to vector<128x32xf32>
    %13 = arith.subf %0, %12 : vector<128x32xf32>
    %cst_4 = arith.constant 9.99999974E-6 : f32
    %14 = vector.broadcast %cst_4 : f32 to vector<128x1xf32>
    %15 = arith.addf %11, %14 : vector<128x1xf32>
    %16 = math.rsqrt %15 : vector<128x1xf32>
    %17 = vector.broadcast %16 : vector<128x1xf32> to vector<128x32xf32>
    %18 = arith.mulf %13, %17 : vector<128x32xf32>
    %c0_5 = arith.constant 0 : index
    %c0_6 = arith.constant 0 : index
    %19 = vector.load %arg4[%c0_5, %c0_6] : memref<1x32xf32, #tpu.memory_space<vmem>>, vector<1x32xf32>
    %20 = vector.broadcast %19 : vector<1x32xf32> to vector<128x32xf32>
    %21 = arith.mulf %18, %20 : vector<128x32xf32>
    %c0_7 = arith.constant 0 : index
    %c0_8 = arith.constant 0 : index
    %22 = vector.load %arg5[%c0_7, %c0_8] : memref<1x32xf32, #tpu.memory_space<vmem>>, vector<1x32xf32>
    %23 = vector.broadcast %22 : vector<1x32xf32> to vector<128x32xf32>
    %24 = arith.addf %21, %23 : vector<128x32xf32>
    %c0_9 = arith.constant 0 : index
    %c0_10 = arith.constant 0 : index
    %25 = vector.load %arg2[%c0_9, %c0_10] : memref<32x96xf32, #tpu.memory_space<vmem>>, vector<32x96xf32>
    %cst_11 = arith.constant dense<0.000000e+00> : vector<128x96xf32>
    %26 = tpu.matmul %24, %25, %cst_11 {dimension_numbers = #tpu.dot_dimension_numbers<[1], [0], [0], [1], [0, 0, 1, 1], [], []>} : vector<128x32xf32>, vector<32x96xf32>, vector<128x96xf32> -> vector<128x96xf32>
    %27 = vector.extract_strided_slice %26 {offsets = [0, 0], sizes = [64, 8], strides = [1, 1]} : vector<128x96xf32> to vector<64x8xf32>
    %28 = vector.extract_strided_slice %26 {offsets = [0, 32], sizes = [64, 8], strides = [1, 1]} : vector<128x96xf32> to vector<64x8xf32>
    %29 = vector.extract_strided_slice %26 {offsets = [0, 64], sizes = [64, 8], strides = [1, 1]} : vector<128x96xf32> to vector<64x8xf32>
    %cst_12 = arith.constant dense<0.000000e+00> : vector<64x64xf32>
    %30 = tpu.matmul %27, %28, %cst_12 {dimension_numbers = #tpu.dot_dimension_numbers<[1], [1], [0], [0], [0, 0, 1, 0], [], []>} : vector<64x8xf32>, vector<64x8xf32>, vector<64x64xf32> -> vector<64x64xf32>
    %cst_13 = arith.constant dense<0xFF800000> : vector<64xf32>
    %31 = vector.multi_reduction <maximumf>, %30, %cst_13 [1] : vector<64x64xf32> to vector<64xf32>
    %32 = vector.shape_cast %31 : vector<64xf32> to vector<64x1xf32>
    %33 = vector.broadcast %32 : vector<64x1xf32> to vector<64x64xf32>
    %34 = arith.subf %30, %33 : vector<64x64xf32>
    %35 = math.exp %34 : vector<64x64xf32>
    %cst_14 = arith.constant dense<0.000000e+00> : vector<64x8xf32>
    %36 = tpu.matmul %35, %29, %cst_14 {dimension_numbers = #tpu.dot_dimension_numbers<[1], [0], [0], [1], [0, 0, 1, 1], [], []>} : vector<64x64xf32>, vector<64x8xf32>, vector<64x8xf32> -> vector<64x8xf32>
    %cst_15 = arith.constant dense<0.000000e+00> : vector<64xf32>
    %37 = vector.multi_reduction <add>, %35, %cst_15 [1] : vector<64x64xf32> to vector<64xf32>
    %38 = vector.shape_cast %37 : vector<64xf32> to vector<64x1xf32>
    %39 = vector.broadcast %38 : vector<64x1xf32> to vector<64x8xf32>
    %40 = arith.divf %36, %39 : vector<64x8xf32>
    %41 = vector.extract_strided_slice %26 {offsets = [0, 8], sizes = [64, 8], strides = [1, 1]} : vector<128x96xf32> to vector<64x8xf32>
    %42 = vector.extract_strided_slice %26 {offsets = [0, 40], sizes = [64, 8], strides = [1, 1]} : vector<128x96xf32> to vector<64x8xf32>
    %43 = vector.extract_strided_slice %26 {offsets = [0, 72], sizes = [64, 8], strides = [1, 1]} : vector<128x96xf32> to vector<64x8xf32>
    %cst_16 = arith.constant dense<0.000000e+00> : vector<64x64xf32>
    %44 = tpu.matmul %41, %42, %cst_16 {dimension_numbers = #tpu.dot_dimension_numbers<[1], [1], [0], [0], [0, 0, 1, 0], [], []>} : vector<64x8xf32>, vector<64x8xf32>, vector<64x64xf32> -> vector<64x64xf32>
    %cst_17 = arith.constant dense<0xFF800000> : vector<64xf32>
    %45 = vector.multi_reduction <maximumf>, %44, %cst_17 [1] : vector<64x64xf32> to vector<64xf32>
    %46 = vector.shape_cast %45 : vector<64xf32> to vector<64x1xf32>
    %47 = vector.broadcast %46 : vector<64x1xf32> to vector<64x64xf32>
    %48 = arith.subf %44, %47 : vector<64x64xf32>
    %49 = math.exp %48 : vector<64x64xf32>
    %cst_18 = arith.constant dense<0.000000e+00> : vector<64x8xf32>
    %50 = tpu.matmul %49, %43, %cst_18 {dimension_numbers = #tpu.dot_dimension_numbers<[1], [0], [0], [1], [0, 0, 1, 1], [], []>} : vector<64x64xf32>, vector<64x8xf32>, vector<64x8xf32> -> vector<64x8xf32>
    %cst_19 = arith.constant dense<0.000000e+00> : vector<64xf32>
    %51 = vector.multi_reduction <add>, %49, %cst_19 [1] : vector<64x64xf32> to vector<64xf32>
    %52 = vector.shape_cast %51 : vector<64xf32> to vector<64x1xf32>
    %53 = vector.broadcast %52 : vector<64x1xf32> to vector<64x8xf32>
    %54 = arith.divf %50, %53 : vector<64x8xf32>
    %55 = vector.extract_strided_slice %26 {offsets = [0, 16], sizes = [64, 8], strides = [1, 1]} : vector<128x96xf32> to vector<64x8xf32>
    %56 = vector.extract_strided_slice %26 {offsets = [0, 48], sizes = [64, 8], strides = [1, 1]} : vector<128x96xf32> to vector<64x8xf32>
    %57 = vector.extract_strided_slice %26 {offsets = [0, 80], sizes = [64, 8], strides = [1, 1]} : vector<128x96xf32> to vector<64x8xf32>
    %cst_20 = arith.constant dense<0.000000e+00> : vector<64x64xf32>
    %58 = tpu.matmul %55, %56, %cst_20 {dimension_numbers = #tpu.dot_dimension_numbers<[1], [1], [0], [0], [0, 0, 1, 0], [], []>} : vector<64x8xf32>, vector<64x8xf32>, vector<64x64xf32> -> vector<64x64xf32>
    %cst_21 = arith.constant dense<0xFF800000> : vector<64xf32>
    %59 = vector.multi_reduction <maximumf>, %58, %cst_21 [1] : vector<64x64xf32> to vector<64xf32>
    %60 = vector.shape_cast %59 : vector<64xf32> to vector<64x1xf32>
    %61 = vector.broadcast %60 : vector<64x1xf32> to vector<64x64xf32>
    %62 = arith.subf %58, %61 : vector<64x64xf32>
    %63 = math.exp %62 : vector<64x64xf32>
    %cst_22 = arith.constant dense<0.000000e+00> : vector<64x8xf32>
    %64 = tpu.matmul %63, %57, %cst_22 {dimension_numbers = #tpu.dot_dimension_numbers<[1], [0], [0], [1], [0, 0, 1, 1], [], []>} : vector<64x64xf32>, vector<64x8xf32>, vector<64x8xf32> -> vector<64x8xf32>
    %cst_23 = arith.constant dense<0.000000e+00> : vector<64xf32>
    %65 = vector.multi_reduction <add>, %63, %cst_23 [1] : vector<64x64xf32> to vector<64xf32>
    %66 = vector.shape_cast %65 : vector<64xf32> to vector<64x1xf32>
    %67 = vector.broadcast %66 : vector<64x1xf32> to vector<64x8xf32>
    %68 = arith.divf %64, %67 : vector<64x8xf32>
    %69 = vector.extract_strided_slice %26 {offsets = [0, 24], sizes = [64, 8], strides = [1, 1]} : vector<128x96xf32> to vector<64x8xf32>
    %70 = vector.extract_strided_slice %26 {offsets = [0, 56], sizes = [64, 8], strides = [1, 1]} : vector<128x96xf32> to vector<64x8xf32>
    %71 = vector.extract_strided_slice %26 {offsets = [0, 88], sizes = [64, 8], strides = [1, 1]} : vector<128x96xf32> to vector<64x8xf32>
    %cst_24 = arith.constant dense<0.000000e+00> : vector<64x64xf32>
    %72 = tpu.matmul %69, %70, %cst_24 {dimension_numbers = #tpu.dot_dimension_numbers<[1], [1], [0], [0], [0, 0, 1, 0], [], []>} : vector<64x8xf32>, vector<64x8xf32>, vector<64x64xf32> -> vector<64x64xf32>
    %cst_25 = arith.constant dense<0xFF800000> : vector<64xf32>
    %73 = vector.multi_reduction <maximumf>, %72, %cst_25 [1] : vector<64x64xf32> to vector<64xf32>
    %74 = vector.shape_cast %73 : vector<64xf32> to vector<64x1xf32>
    %75 = vector.broadcast %74 : vector<64x1xf32> to vector<64x64xf32>
    %76 = arith.subf %72, %75 : vector<64x64xf32>
    %77 = math.exp %76 : vector<64x64xf32>
    %cst_26 = arith.constant dense<0.000000e+00> : vector<64x8xf32>
    %78 = tpu.matmul %77, %71, %cst_26 {dimension_numbers = #tpu.dot_dimension_numbers<[1], [0], [0], [1], [0, 0, 1, 1], [], []>} : vector<64x64xf32>, vector<64x8xf32>, vector<64x8xf32> -> vector<64x8xf32>
    %cst_27 = arith.constant dense<0.000000e+00> : vector<64xf32>
    %79 = vector.multi_reduction <add>, %77, %cst_27 [1] : vector<64x64xf32> to vector<64xf32>
    %80 = vector.shape_cast %79 : vector<64xf32> to vector<64x1xf32>
    %81 = vector.broadcast %80 : vector<64x1xf32> to vector<64x8xf32>
    %82 = arith.divf %78, %81 : vector<64x8xf32>
    %83 = tpu.concatenate %40, %54, %68, %82 in 1 : vector<64x8xf32>, vector<64x8xf32>, vector<64x8xf32>, vector<64x8xf32> -> vector<64x32xf32>
    %84 = vector.extract_strided_slice %26 {offsets = [64, 0], sizes = [64, 8], strides = [1, 1]} : vector<128x96xf32> to vector<64x8xf32>
    %85 = vector.extract_strided_slice %26 {offsets = [64, 32], sizes = [64, 8], strides = [1, 1]} : vector<128x96xf32> to vector<64x8xf32>
    %86 = vector.extract_strided_slice %26 {offsets = [64, 64], sizes = [64, 8], strides = [1, 1]} : vector<128x96xf32> to vector<64x8xf32>
    %cst_28 = arith.constant dense<0.000000e+00> : vector<64x64xf32>
    %87 = tpu.matmul %84, %85, %cst_28 {dimension_numbers = #tpu.dot_dimension_numbers<[1], [1], [0], [0], [0, 0, 1, 0], [], []>} : vector<64x8xf32>, vector<64x8xf32>, vector<64x64xf32> -> vector<64x64xf32>
    %cst_29 = arith.constant dense<0xFF800000> : vector<64xf32>
    %88 = vector.multi_reduction <maximumf>, %87, %cst_29 [1] : vector<64x64xf32> to vector<64xf32>
    %89 = vector.shape_cast %88 : vector<64xf32> to vector<64x1xf32>
    %90 = vector.broadcast %89 : vector<64x1xf32> to vector<64x64xf32>
    %91 = arith.subf %87, %90 : vector<64x64xf32>
    %92 = math.exp %91 : vector<64x64xf32>
    %cst_30 = arith.constant dense<0.000000e+00> : vector<64x8xf32>
    %93 = tpu.matmul %92, %86, %cst_30 {dimension_numbers = #tpu.dot_dimension_numbers<[1], [0], [0], [1], [0, 0, 1, 1], [], []>} : vector<64x64xf32>, vector<64x8xf32>, vector<64x8xf32> -> vector<64x8xf32>
    %cst_31 = arith.constant dense<0.000000e+00> : vector<64xf32>
    %94 = vector.multi_reduction <add>, %92, %cst_31 [1] : vector<64x64xf32> to vector<64xf32>
    %95 = vector.shape_cast %94 : vector<64xf32> to vector<64x1xf32>
    %96 = vector.broadcast %95 : vector<64x1xf32> to vector<64x8xf32>
    %97 = arith.divf %93, %96 : vector<64x8xf32>
    %98 = vector.extract_strided_slice %26 {offsets = [64, 8], sizes = [64, 8], strides = [1, 1]} : vector<128x96xf32> to vector<64x8xf32>
    %99 = vector.extract_strided_slice %26 {offsets = [64, 40], sizes = [64, 8], strides = [1, 1]} : vector<128x96xf32> to vector<64x8xf32>
    %100 = vector.extract_strided_slice %26 {offsets = [64, 72], sizes = [64, 8], strides = [1, 1]} : vector<128x96xf32> to vector<64x8xf32>
    %cst_32 = arith.constant dense<0.000000e+00> : vector<64x64xf32>
    %101 = tpu.matmul %98, %99, %cst_32 {dimension_numbers = #tpu.dot_dimension_numbers<[1], [1], [0], [0], [0, 0, 1, 0], [], []>} : vector<64x8xf32>, vector<64x8xf32>, vector<64x64xf32> -> vector<64x64xf32>
    %cst_33 = arith.constant dense<0xFF800000> : vector<64xf32>
    %102 = vector.multi_reduction <maximumf>, %101, %cst_33 [1] : vector<64x64xf32> to vector<64xf32>
    %103 = vector.shape_cast %102 : vector<64xf32> to vector<64x1xf32>
    %104 = vector.broadcast %103 : vector<64x1xf32> to vector<64x64xf32>
    %105 = arith.subf %101, %104 : vector<64x64xf32>
    %106 = math.exp %105 : vector<64x64xf32>
    %cst_34 = arith.constant dense<0.000000e+00> : vector<64x8xf32>
    %107 = tpu.matmul %106, %100, %cst_34 {dimension_numbers = #tpu.dot_dimension_numbers<[1], [0], [0], [1], [0, 0, 1, 1], [], []>} : vector<64x64xf32>, vector<64x8xf32>, vector<64x8xf32> -> vector<64x8xf32>
    %cst_35 = arith.constant dense<0.000000e+00> : vector<64xf32>
    %108 = vector.multi_reduction <add>, %106, %cst_35 [1] : vector<64x64xf32> to vector<64xf32>
    %109 = vector.shape_cast %108 : vector<64xf32> to vector<64x1xf32>
    %110 = vector.broadcast %109 : vector<64x1xf32> to vector<64x8xf32>
    %111 = arith.divf %107, %110 : vector<64x8xf32>
    %112 = vector.extract_strided_slice %26 {offsets = [64, 16], sizes = [64, 8], strides = [1, 1]} : vector<128x96xf32> to vector<64x8xf32>
    %113 = vector.extract_strided_slice %26 {offsets = [64, 48], sizes = [64, 8], strides = [1, 1]} : vector<128x96xf32> to vector<64x8xf32>
    %114 = vector.extract_strided_slice %26 {offsets = [64, 80], sizes = [64, 8], strides = [1, 1]} : vector<128x96xf32> to vector<64x8xf32>
    %cst_36 = arith.constant dense<0.000000e+00> : vector<64x64xf32>
    %115 = tpu.matmul %112, %113, %cst_36 {dimension_numbers = #tpu.dot_dimension_numbers<[1], [1], [0], [0], [0, 0, 1, 0], [], []>} : vector<64x8xf32>, vector<64x8xf32>, vector<64x64xf32> -> vector<64x64xf32>
    %cst_37 = arith.constant dense<0xFF800000> : vector<64xf32>
    %116 = vector.multi_reduction <maximumf>, %115, %cst_37 [1] : vector<64x64xf32> to vector<64xf32>
    %117 = vector.shape_cast %116 : vector<64xf32> to vector<64x1xf32>
    %118 = vector.broadcast %117 : vector<64x1xf32> to vector<64x64xf32>
    %119 = arith.subf %115, %118 : vector<64x64xf32>
    %120 = math.exp %119 : vector<64x64xf32>
    %cst_38 = arith.constant dense<0.000000e+00> : vector<64x8xf32>
    %121 = tpu.matmul %120, %114, %cst_38 {dimension_numbers = #tpu.dot_dimension_numbers<[1], [0], [0], [1], [0, 0, 1, 1], [], []>} : vector<64x64xf32>, vector<64x8xf32>, vector<64x8xf32> -> vector<64x8xf32>
    %cst_39 = arith.constant dense<0.000000e+00> : vector<64xf32>
    %122 = vector.multi_reduction <add>, %120, %cst_39 [1] : vector<64x64xf32> to vector<64xf32>
    %123 = vector.shape_cast %122 : vector<64xf32> to vector<64x1xf32>
    %124 = vector.broadcast %123 : vector<64x1xf32> to vector<64x8xf32>
    %125 = arith.divf %121, %124 : vector<64x8xf32>
    %126 = vector.extract_strided_slice %26 {offsets = [64, 24], sizes = [64, 8], strides = [1, 1]} : vector<128x96xf32> to vector<64x8xf32>
    %127 = vector.extract_strided_slice %26 {offsets = [64, 56], sizes = [64, 8], strides = [1, 1]} : vector<128x96xf32> to vector<64x8xf32>
    %128 = vector.extract_strided_slice %26 {offsets = [64, 88], sizes = [64, 8], strides = [1, 1]} : vector<128x96xf32> to vector<64x8xf32>
    %cst_40 = arith.constant dense<0.000000e+00> : vector<64x64xf32>
    %129 = tpu.matmul %126, %127, %cst_40 {dimension_numbers = #tpu.dot_dimension_numbers<[1], [1], [0], [0], [0, 0, 1, 0], [], []>} : vector<64x8xf32>, vector<64x8xf32>, vector<64x64xf32> -> vector<64x64xf32>
    %cst_41 = arith.constant dense<0xFF800000> : vector<64xf32>
    %130 = vector.multi_reduction <maximumf>, %129, %cst_41 [1] : vector<64x64xf32> to vector<64xf32>
    %131 = vector.shape_cast %130 : vector<64xf32> to vector<64x1xf32>
    %132 = vector.broadcast %131 : vector<64x1xf32> to vector<64x64xf32>
    %133 = arith.subf %129, %132 : vector<64x64xf32>
    %134 = math.exp %133 : vector<64x64xf32>
    %cst_42 = arith.constant dense<0.000000e+00> : vector<64x8xf32>
    %135 = tpu.matmul %134, %128, %cst_42 {dimension_numbers = #tpu.dot_dimension_numbers<[1], [0], [0], [1], [0, 0, 1, 1], [], []>} : vector<64x64xf32>, vector<64x8xf32>, vector<64x8xf32> -> vector<64x8xf32>
    %cst_43 = arith.constant dense<0.000000e+00> : vector<64xf32>
    %136 = vector.multi_reduction <add>, %134, %cst_43 [1] : vector<64x64xf32> to vector<64xf32>
    %137 = vector.shape_cast %136 : vector<64xf32> to vector<64x1xf32>
    %138 = vector.broadcast %137 : vector<64x1xf32> to vector<64x8xf32>
    %139 = arith.divf %135, %138 : vector<64x8xf32>
    %140 = tpu.concatenate %97, %111, %125, %139 in 1 : vector<64x8xf32>, vector<64x8xf32>, vector<64x8xf32>, vector<64x8xf32> -> vector<64x32xf32>
    %141 = tpu.concatenate %83, %140 in 0 : vector<64x32xf32>, vector<64x32xf32> -> vector<128x32xf32>
    %c0_44 = arith.constant 0 : index
    %c0_45 = arith.constant 0 : index
    %142 = vector.load %arg3[%c0_44, %c0_45] : memref<32x32xf32, #tpu.memory_space<vmem>>, vector<32x32xf32>
    %cst_46 = arith.constant dense<0.000000e+00> : vector<128x32xf32>
    %143 = tpu.matmul %141, %142, %cst_46 {dimension_numbers = #tpu.dot_dimension_numbers<[1], [0], [0], [1], [0, 0, 1, 1], [], []>} : vector<128x32xf32>, vector<32x32xf32>, vector<128x32xf32> -> vector<128x32xf32>
    %144 = arith.addf %0, %143 : vector<128x32xf32>
    %cst_47 = arith.constant dense<0.000000e+00> : vector<128xf32>
    %145 = vector.multi_reduction <add>, %144, %cst_47 [1] : vector<128x32xf32> to vector<128xf32>
    %146 = vector.shape_cast %145 : vector<128xf32> to vector<128x1xf32>
    %cst_48 = arith.constant 3.200000e+01 : f32
    %147 = vector.broadcast %cst_48 : f32 to vector<128x1xf32>
    %148 = arith.divf %146, %147 : vector<128x1xf32>
    %149 = vector.broadcast %148 : vector<128x1xf32> to vector<128x32xf32>
    %150 = arith.subf %144, %149 : vector<128x32xf32>
    %151 = arith.mulf %150, %150 : vector<128x32xf32>
    %cst_49 = arith.constant dense<0.000000e+00> : vector<128xf32>
    %152 = vector.multi_reduction <add>, %151, %cst_49 [1] : vector<128x32xf32> to vector<128xf32>
    %153 = vector.shape_cast %152 : vector<128xf32> to vector<128x1xf32>
    %cst_50 = arith.constant 3.200000e+01 : f32
    %154 = vector.broadcast %cst_50 : f32 to vector<128x1xf32>
    %155 = arith.divf %153, %154 : vector<128x1xf32>
    %156 = vector.broadcast %148 : vector<128x1xf32> to vector<128x32xf32>
    %157 = arith.subf %144, %156 : vector<128x32xf32>
    %cst_51 = arith.constant 9.99999974E-6 : f32
    %158 = vector.broadcast %cst_51 : f32 to vector<128x1xf32>
    %159 = arith.addf %155, %158 : vector<128x1xf32>
    %160 = math.rsqrt %159 : vector<128x1xf32>
    %161 = vector.broadcast %160 : vector<128x1xf32> to vector<128x32xf32>
    %162 = arith.mulf %157, %161 : vector<128x32xf32>
    %c0_52 = arith.constant 0 : index
    %c0_53 = arith.constant 0 : index
    %163 = vector.load %arg6[%c0_52, %c0_53] : memref<1x32xf32, #tpu.memory_space<vmem>>, vector<1x32xf32>
    %164 = vector.broadcast %163 : vector<1x32xf32> to vector<128x32xf32>
    %165 = arith.mulf %162, %164 : vector<128x32xf32>
    %c0_54 = arith.constant 0 : index
    %c0_55 = arith.constant 0 : index
    %166 = vector.load %arg7[%c0_54, %c0_55] : memref<1x32xf32, #tpu.memory_space<vmem>>, vector<1x32xf32>
    %167 = vector.broadcast %166 : vector<1x32xf32> to vector<128x32xf32>
    %168 = arith.addf %165, %167 : vector<128x32xf32>
    %c0_56 = arith.constant 0 : index
    %c0_57 = arith.constant 0 : index
    %169 = vector.load %arg8[%c0_56, %c0_57] : memref<32x64xf32, #tpu.memory_space<vmem>>, vector<32x64xf32>
    %cst_58 = arith.constant dense<0.000000e+00> : vector<128x64xf32>
    %170 = tpu.matmul %168, %169, %cst_58 {dimension_numbers = #tpu.dot_dimension_numbers<[1], [0], [0], [1], [0, 0, 1, 1], [], []>} : vector<128x32xf32>, vector<32x64xf32>, vector<128x64xf32> -> vector<128x64xf32>
    %c0_59 = arith.constant 0 : index
    %c0_60 = arith.constant 0 : index
    %171 = vector.load %arg9[%c0_59, %c0_60] : memref<1x64xf32, #tpu.memory_space<vmem>>, vector<1x64xf32>
    %172 = vector.broadcast %171 : vector<1x64xf32> to vector<128x64xf32>
    %173 = arith.addf %170, %172 : vector<128x64xf32>
    %cst_61 = arith.constant 5.000000e-01 : f32
    %174 = vector.broadcast %cst_61 : f32 to vector<128x64xf32>
    %175 = arith.mulf %174, %173 : vector<128x64xf32>
    %cst_62 = arith.constant 0.707106769 : f32
    %176 = vector.broadcast %cst_62 : f32 to vector<128x64xf32>
    %177 = arith.mulf %173, %176 : vector<128x64xf32>
    %178 = math.absf %177 : vector<128x64xf32>
    %cst_63 = arith.constant 0.327591091 : f32
    %179 = vector.broadcast %cst_63 : f32 to vector<128x64xf32>
    %180 = arith.mulf %179, %178 : vector<128x64xf32>
    %cst_64 = arith.constant 1.000000e+00 : f32
    %181 = vector.broadcast %cst_64 : f32 to vector<128x64xf32>
    %182 = arith.addf %181, %180 : vector<128x64xf32>
    %cst_65 = arith.constant 1.000000e+00 : f32
    %183 = vector.broadcast %cst_65 : f32 to vector<128x64xf32>
    %184 = arith.divf %183, %182 : vector<128x64xf32>
    %cst_66 = arith.constant 1.06140542 : f32
    %185 = vector.broadcast %cst_66 : f32 to vector<128x64xf32>
    %186 = arith.mulf %185, %184 : vector<128x64xf32>
    %cst_67 = arith.constant -1.45315206 : f32
    %187 = vector.broadcast %cst_67 : f32 to vector<128x64xf32>
    %188 = arith.addf %186, %187 : vector<128x64xf32>
    %189 = arith.mulf %188, %184 : vector<128x64xf32>
    %cst_68 = arith.constant 1.42141378 : f32
    %190 = vector.broadcast %cst_68 : f32 to vector<128x64xf32>
    %191 = arith.addf %189, %190 : vector<128x64xf32>
    %192 = arith.mulf %191, %184 : vector<128x64xf32>
    %cst_69 = arith.constant -0.284496725 : f32
    %193 = vector.broadcast %cst_69 : f32 to vector<128x64xf32>
    %194 = arith.addf %192, %193 : vector<128x64xf32>
    %195 = arith.mulf %194, %184 : vector<128x64xf32>
    %cst_70 = arith.constant 0.254829586 : f32
    %196 = vector.broadcast %cst_70 : f32 to vector<128x64xf32>
    %197 = arith.addf %195, %196 : vector<128x64xf32>
    %198 = arith.mulf %197, %184 : vector<128x64xf32>
    %199 = arith.mulf %178, %178 : vector<128x64xf32>
    %cst_71 = arith.constant 0.000000e+00 : f32
    %200 = vector.broadcast %cst_71 : f32 to vector<128x64xf32>
    %201 = arith.subf %200, %199 : vector<128x64xf32>
    %202 = math.exp %201 : vector<128x64xf32>
    %203 = arith.mulf %198, %202 : vector<128x64xf32>
    %cst_72 = arith.constant 1.000000e+00 : f32
    %204 = vector.broadcast %cst_72 : f32 to vector<128x64xf32>
    %205 = arith.subf %204, %203 : vector<128x64xf32>
    %cst_73 = arith.constant 0.000000e+00 : f32
    %206 = vector.broadcast %cst_73 : f32 to vector<128x64xf32>
    %207 = arith.cmpf oge, %177, %206 : vector<128x64xf32>
    %cst_74 = arith.constant 0.000000e+00 : f32
    %208 = vector.broadcast %cst_74 : f32 to vector<128x64xf32>
    %209 = arith.subf %208, %205 : vector<128x64xf32>
    %210 = arith.select %207, %205, %209 : vector<128x64xi1>, vector<128x64xf32>
    %cst_75 = arith.constant 1.000000e+00 : f32
    %211 = vector.broadcast %cst_75 : f32 to vector<128x64xf32>
    %212 = arith.addf %211, %210 : vector<128x64xf32>
    %213 = arith.mulf %175, %212 : vector<128x64xf32>
    %c0_76 = arith.constant 0 : index
    %c0_77 = arith.constant 0 : index
    %214 = vector.load %arg10[%c0_76, %c0_77] : memref<64x32xf32, #tpu.memory_space<vmem>>, vector<64x32xf32>
    %cst_78 = arith.constant dense<0.000000e+00> : vector<128x32xf32>
    %215 = tpu.matmul %213, %214, %cst_78 {dimension_numbers = #tpu.dot_dimension_numbers<[1], [0], [0], [1], [0, 0, 1, 1], [], []>} : vector<128x64xf32>, vector<64x32xf32>, vector<128x32xf32> -> vector<128x32xf32>
    %c0_79 = arith.constant 0 : index
    %c0_80 = arith.constant 0 : index
    %216 = vector.load %arg11[%c0_79, %c0_80] : memref<1x32xf32, #tpu.memory_space<vmem>>, vector<1x32xf32>
    %217 = vector.broadcast %216 : vector<1x32xf32> to vector<128x32xf32>
    %218 = arith.addf %215, %217 : vector<128x32xf32>
    %219 = arith.addf %144, %218 : vector<128x32xf32>
    %c0_81 = arith.constant 0 : index
    %c0_82 = arith.constant 0 : index
    %220 = vector.load %arg12[%c0_81, %c0_82] : memref<128x32xf32, #tpu.memory_space<vmem>>, vector<128x32xf32>
    tpu.vector_store %arg12[%c0_81, %c0_82], %219 {strides = array<i32>} : memref<128x32xf32, #tpu.memory_space<vmem>>, vector<128x32xf32>,
    return
  }
  func.func @transform_0(%arg0: i32) -> (i32, i32) {
    %c0_i32 = arith.constant 0 : i32
    %c0_i32_0 = arith.constant 0 : i32
    %c0_i32_1 = arith.constant 0 : i32
    return %c0_i32, %c0_i32_0 : i32, i32
  }
  func.func @transform_1(%arg0: i32) -> (i32, i32) {
    %c0_i32 = arith.constant 0 : i32
    %c0_i32_0 = arith.constant 0 : i32
    %c0_i32_1 = arith.constant 0 : i32
    return %c0_i32, %c0_i32_0 : i32, i32
  }
  func.func @transform_2(%arg0: i32) -> (i32, i32) {
    %c0_i32 = arith.constant 0 : i32
    %c0_i32_0 = arith.constant 0 : i32
    %c0_i32_1 = arith.constant 0 : i32
    return %c0_i32, %c0_i32_0 : i32, i32
  }
  func.func @transform_3(%arg0: i32) -> (i32, i32) {
    %c0_i32 = arith.constant 0 : i32
    %c0_i32_0 = arith.constant 0 : i32
    %c0_i32_1 = arith.constant 0 : i32
    return %c0_i32, %c0_i32_0 : i32, i32
  }
  func.func @transform_4(%arg0: i32) -> (i32, i32) {
    %c0_i32 = arith.constant 0 : i32
    %c0_i32_0 = arith.constant 0 : i32
    %c0_i32_1 = arith.constant 0 : i32
    return %c0_i32, %c0_i32_0 : i32, i32
  }
  func.func @transform_5(%arg0: i32) -> (i32, i32) {
    %c0_i32 = arith.constant 0 : i32
    %c0_i32_0 = arith.constant 0 : i32
    %c0_i32_1 = arith.constant 0 : i32
    return %c0_i32, %c0_i32_0 : i32, i32
  }
  func.func @transform_6(%arg0: i32) -> (i32, i32) {
    %c0_i32 = arith.constant 0 : i32
    %c0_i32_0 = arith.constant 0 : i32
    %c0_i32_1 = arith.constant 0 : i32
    return %c0_i32, %c0_i32_0 : i32, i32
  }
  func.func @transform_7(%arg0: i32) -> (i32, i32) {
    %c0_i32 = arith.constant 0 : i32
    %c0_i32_0 = arith.constant 0 : i32
    %c0_i32_1 = arith.constant 0 : i32
    return %c0_i32, %c0_i32_0 : i32, i32
  }
  func.func @transform_8(%arg0: i32) -> (i32, i32) {
    %c0_i32 = arith.constant 0 : i32
    %c0_i32_0 = arith.constant 0 : i32
    %c0_i32_1 = arith.constant 0 : i32
    return %c0_i32, %c0_i32_0 : i32, i32
  }
  func.func @transform_9(%arg0: i32) -> (i32, i32) {
    %c0_i32 = arith.constant 0 : i32
    %c0_i32_0 = arith.constant 0 : i32
    %c0_i32_1 = arith.constant 0 : i32
    return %c0_i32, %c0_i32_0 : i32, i32
  }
  func.func @transform_10(%arg0: i32) -> (i32, i32) {
    %c0_i32 = arith.constant 0 : i32
    %c0_i32_0 = arith.constant 0 : i32
    %c0_i32_1 = arith.constant 0 : i32
    return %c0_i32, %c0_i32_0 : i32, i32
  }
  func.func @transform_11(%arg0: i32) -> (i32, i32) {
    %c0_i32 = arith.constant 0 : i32
    %c0_i32_0 = arith.constant 0 : i32
    %c0_i32_1 = arith.constant 0 : i32
    return %c0_i32, %c0_i32_0 : i32, i32
  }
}

</mosaic_0001>

<llo_original>
// kernel: tpu_custom_call.1
$region0: #{tpu_custom_call.1}
  #allocation0 [shape = 'u32[]', space=smem, size = 0x4, offset = 0x4, fixed_abs, tag = 'smem constant byte address 0x4 - core index']
  #allocation1 [shape = 'u32[144,128]{1,0:T(1,128)}', space=vmem, size = 0x12000, scoped, tag = 'internal scratch']
  %s0 = inlined_call_operand.vmem [shape: f32[128,32], index: 0, kind: input, shape index: {}]
  %s1 = inlined_call_operand.vmem [shape: f32[32,96], index: 1, kind: input, shape index: {}]
  %s2 = inlined_call_operand.vmem [shape: f32[32,32], index: 2, kind: input, shape index: {}]
  %s3 = inlined_call_operand.vmem [shape: f32[1,32], index: 3, kind: input, shape index: {}]
  %s4 = inlined_call_operand.vmem [shape: f32[1,32], index: 4, kind: input, shape index: {}]
  %s5 = inlined_call_operand.vmem [shape: f32[1,32], index: 5, kind: input, shape index: {}]
  %s6 = inlined_call_operand.vmem [shape: f32[1,32], index: 6, kind: input, shape index: {}]
  %s7 = inlined_call_operand.vmem [shape: f32[32,64], index: 7, kind: input, shape index: {}]
  %s8 = inlined_call_operand.vmem [shape: f32[1,64], index: 8, kind: input, shape index: {}]
  %s9 = inlined_call_operand.vmem [shape: f32[64,32], index: 9, kind: input, shape index: {}]
  %s10 = inlined_call_operand.vmem [shape: f32[1,32], index: 10, kind: input, shape index: {}]
  %s11 = inlined_call_operand.vmem [shape: f32[128,32], index: 11, kind: output, shape index: {}]
  %s12 = sld [smem:[#allocation0]]
  $region54: #{tpu_custom_call.1} parent=0
    _
  %s14 = ssub.s32 1, %s12
  %s15 = scalar_select 0, %s14, %s12
  // Predicated region
  $region2: #{tpu_custom_call.1} parent=0 // pred_check
    _
  $region3: #{tpu_custom_call.1} parent=0 // pred_check_branch
    %17 = sbr.rel (0) target = $region5
  $region4: #{tpu_custom_call.1} parent=0 // pred_region
    _
  $region5: #{tpu_custom_call.1} parent=0 // pred_fallthru
    _
  // Predicated region
  $region6: #{tpu_custom_call.1} parent=0 // pred_check
    _
  $region7: #{tpu_custom_call.1} parent=0 // pred_check_branch
    %19 = sbr.rel (0) target = $region9
  $region8: #{tpu_custom_call.1} parent=0 // pred_region
    _
  $region9: #{tpu_custom_call.1} parent=0 // pred_fallthru
    _
  // Predicated region
  $region10: #{tpu_custom_call.1} parent=0 // pred_check
    _
  $region11: #{tpu_custom_call.1} parent=0 // pred_check_branch
    %21 = sbr.rel (0) target = $region13
  $region12: #{tpu_custom_call.1} parent=0 // pred_region
    _
  $region13: #{tpu_custom_call.1} parent=0 // pred_fallthru
    _
  // Predicated region
  $region14: #{tpu_custom_call.1} parent=0 // pred_check
    _
  $region15: #{tpu_custom_call.1} parent=0 // pred_check_branch
    %23 = sbr.rel (0) target = $region17
  $region16: #{tpu_custom_call.1} parent=0 // pred_region
    _
  $region17: #{tpu_custom_call.1} parent=0 // pred_fallthru
    _
  // Predicated region
  $region18: #{tpu_custom_call.1} parent=0 // pred_check
    _
  $region19: #{tpu_custom_call.1} parent=0 // pred_check_branch
    %25 = sbr.rel (0) target = $region21
  $region20: #{tpu_custom_call.1} parent=0 // pred_region
    _
  $region21: #{tpu_custom_call.1} parent=0 // pred_fallthru
    _
  // Predicated region
  $region22: #{tpu_custom_call.1} parent=0 // pred_check
    _
  $region23: #{tpu_custom_call.1} parent=0 // pred_check_branch
    %27 = sbr.rel (0) target = $region25
  $region24: #{tpu_custom_call.1} parent=0 // pred_region
    _
  $region25: #{tpu_custom_call.1} parent=0 // pred_fallthru
    _
  // Predicated region
  $region26: #{tpu_custom_call.1} parent=0 // pred_check
    _
  $region27: #{tpu_custom_call.1} parent=0 // pred_check_branch
    %29 = sbr.rel (0) target = $region29
  $region28: #{tpu_custom_call.1} parent=0 // pred_region
    _
  $region29: #{tpu_custom_call.1} parent=0 // pred_fallthru
    _
  // Predicated region
  $region30: #{tpu_custom_call.1} parent=0 // pred_check
    _
  $region31: #{tpu_custom_call.1} parent=0 // pred_check_branch
    %31 = sbr.rel (0) target = $region33
  $region32: #{tpu_custom_call.1} parent=0 // pred_region
    _
  $region33: #{tpu_custom_call.1} parent=0 // pred_fallthru
    _
  // Predicated region
  $region34: #{tpu_custom_call.1} parent=0 // pred_check
    _
  $region35: #{tpu_custom_call.1} parent=0 // pred_check_branch
    %33 = sbr.rel (0) target = $region37
  $region36: #{tpu_custom_call.1} parent=0 // pred_region
    _
  $region37: #{tpu_custom_call.1} parent=0 // pred_fallthru
    _
  // Predicated region
  $region38: #{tpu_custom_call.1} parent=0 // pred_check
    _
  $region39: #{tpu_custom_call.1} parent=0 // pred_check_branch
    %35 = sbr.rel (0) target = $region41
  $region40: #{tpu_custom_call.1} parent=0 // pred_region
    _
  $region41: #{tpu_custom_call.1} parent=0 // pred_fallthru
    _
  // Predicated region
  $region42: #{tpu_custom_call.1} parent=0 // pred_check
    _
  $region43: #{tpu_custom_call.1} parent=0 // pred_check_branch
    %37 = sbr.rel (0) target = $region45
  $region44: #{tpu_custom_call.1} parent=0 // pred_region
    _
  $region45: #{tpu_custom_call.1} parent=0 // pred_fallthru
    _
  %v38 = vld [vmem:[%s0] sm:$0xff]
  %v39 = vld [vmem:[%s0 + $0x8] sm:$0xff]
  %v40 = vld [vmem:[%s0 + $0x10] sm:$0xff]
  %v41 = vld [vmem:[%s0 + $0x18] sm:$0xff]
  %v42 = vld [vmem:[%s0 + $0x20] sm:$0xff]
  %v43 = vld [vmem:[%s0 + $0x28] sm:$0xff]
  %v44 = vld [vmem:[%s0 + $0x30] sm:$0xff]
  %v45 = vld [vmem:[%s0 + $0x38] sm:$0xff]
  %v46 = vld [vmem:[%s0 + $0x40] sm:$0xff]
  %v47 = vld [vmem:[%s0 + $0x48] sm:$0xff]
  %v48 = vld [vmem:[%s0 + $0x50] sm:$0xff]
  %v49 = vld [vmem:[%s0 + $0x58] sm:$0xff]
  %v50 = vld [vmem:[%s0 + $0x60] sm:$0xff]
  %v51 = vld [vmem:[%s0 + $0x68] sm:$0xff]
  %v52 = vld [vmem:[%s0 + $0x70] sm:$0xff]
  %v53 = vld [vmem:[%s0 + $0x78] sm:$0xff]
  %vm54 = vcmask 261120
  %v55 = vsel %vm54, %v38, 0.0
  %56 = vadd.xlane.f32.xlu0 %v55
  %v57 = vpop.xlane.xlu0 %56
  %v58 = vsel %vm54, %v39, 0.0
  %59 = vadd.xlane.f32.xlu0 %v58
  %v60 = vpop.xlane.xlu0 %59
  %v61 = vsel %vm54, %v40, 0.0
  %62 = vadd.xlane.f32.xlu0 %v61
  %v63 = vpop.xlane.xlu0 %62
  %v64 = vsel %vm54, %v41, 0.0
  %65 = vadd.xlane.f32.xlu0 %v64
  %v66 = vpop.xlane.xlu0 %65
  %v67 = vsel %vm54, %v42, 0.0
  %68 = vadd.xlane.f32.xlu0 %v67
  %v69 = vpop.xlane.xlu0 %68
  %v70 = vsel %vm54, %v43, 0.0
  %71 = vadd.xlane.f32.xlu0 %v70
  %v72 = vpop.xlane.xlu0 %71
  %v73 = vsel %vm54, %v44, 0.0
  %74 = vadd.xlane.f32.xlu0 %v73
  %v75 = vpop.xlane.xlu0 %74
  %v76 = vsel %vm54, %v45, 0.0
  %77 = vadd.xlane.f32.xlu0 %v76
  %v78 = vpop.xlane.xlu0 %77
  %v79 = vsel %vm54, %v46, 0.0
  %80 = vadd.xlane.f32.xlu0 %v79
  %v81 = vpop.xlane.xlu0 %80
  %v82 = vsel %vm54, %v47, 0.0
  %83 = vadd.xlane.f32.xlu0 %v82
  %v84 = vpop.xlane.xlu0 %83
  %v85 = vsel %vm54, %v48, 0.0
  %86 = vadd.xlane.f32.xlu0 %v85
  %v87 = vpop.xlane.xlu0 %86
  %v88 = vsel %vm54, %v49, 0.0
  %89 = vadd.xlane.f32.xlu0 %v88
  %v90 = vpop.xlane.xlu0 %89
  %v91 = vsel %vm54, %v50, 0.0
  %92 = vadd.xlane.f32.xlu0 %v91
  %v93 = vpop.xlane.xlu0 %92
  %v94 = vsel %vm54, %v51, 0.0
  %95 = vadd.xlane.f32.xlu0 %v94
  %v96 = vpop.xlane.xlu0 %95
  %v97 = vsel %vm54, %v52, 0.0
  %98 = vadd.xlane.f32.xlu0 %v97
  %v99 = vpop.xlane.xlu0 %98
  %v100 = vsel %vm54, %v53, 0.0
  %101 = vadd.xlane.f32.xlu0 %v100
  %v102 = vpop.xlane.xlu0 %101
  %v103 = vrcp.pop 32.0
  %v104 = vmul.f32 %v57, %v103
  %v105 = vmul.f32 %v60, %v103
  %v106 = vmul.f32 %v63, %v103
  %v107 = vmul.f32 %v66, %v103
  %v108 = vmul.f32 %v69, %v103
  %v109 = vmul.f32 %v72, %v103
  %v110 = vmul.f32 %v75, %v103
  %v111 = vmul.f32 %v78, %v103
  %v112 = vmul.f32 %v81, %v103
  %v113 = vmul.f32 %v84, %v103
  %v114 = vmul.f32 %v87, %v103
  %v115 = vmul.f32 %v90, %v103
  %v116 = vmul.f32 %v93, %v103
  %v117 = vmul.f32 %v96, %v103
  %v118 = vmul.f32 %v99, %v103
  %v119 = vmul.f32 %v102, %v103
  %v120 = vsub.f32 %v38, %v104
  %v121 = vsub.f32 %v39, %v105
  %v122 = vsub.f32 %v40, %v106
  %v123 = vsub.f32 %v41, %v107
  %v124 = vsub.f32 %v42, %v108
  %v125 = vsub.f32 %v43, %v109
  %v126 = vsub.f32 %v44, %v110
  %v127 = vsub.f32 %v45, %v111
  %v128 = vsub.f32 %v46, %v112
  %v129 = vsub.f32 %v47, %v113
  %v130 = vsub.f32 %v48, %v114
  %v131 = vsub.f32 %v49, %v115
  %v132 = vsub.f32 %v50, %v116
  %v133 = vsub.f32 %v51, %v117
  %v134 = vsub.f32 %v52, %v118
  %v135 = vsub.f32 %v53, %v119
  %v136 = vmul.f32 %v120, %v120
  %v137 = vmul.f32 %v121, %v121
  %v138 = vmul.f32 %v122, %v122
  %v139 = vmul.f32 %v123, %v123
  %v140 = vmul.f32 %v124, %v124
  %v141 = vmul.f32 %v125, %v125
  %v142 = vmul.f32 %v126, %v126
  %v143 = vmul.f32 %v127, %v127
  %v144 = vmul.f32 %v128, %v128
  %v145 = vmul.f32 %v129, %v129
  %v146 = vmul.f32 %v130, %v130
  %v147 = vmul.f32 %v131, %v131
  %v148 = vmul.f32 %v132, %v132
  %v149 = vmul.f32 %v133, %v133
  %v150 = vmul.f32 %v134, %v134
  %v151 = vmul.f32 %v135, %v135
  %v152 = vsel %vm54, %v136, 0.0
  %153 = vadd.xlane.f32.xlu0 %v152
  %v154 = vpop.xlane.xlu0 %153
  %v155 = vsel %vm54, %v137, 0.0
  %156 = vadd.xlane.f32.xlu0 %v155
  %v157 = vpop.xlane.xlu0 %156
  %v158 = vsel %vm54, %v138, 0.0
  %159 = vadd.xlane.f32.xlu0 %v158
  %v160 = vpop.xlane.xlu0 %159
  %v161 = vsel %vm54, %v139, 0.0
  %162 = vadd.xlane.f32.xlu0 %v161
  %v163 = vpop.xlane.xlu0 %162
  %v164 = vsel %vm54, %v140, 0.0
  %165 = vadd.xlane.f32.xlu0 %v164
  %v166 = vpop.xlane.xlu0 %165
  %v167 = vsel %vm54, %v141, 0.0
  %168 = vadd.xlane.f32.xlu0 %v167
  %v169 = vpop.xlane.xlu0 %168
  %v170 = vsel %vm54, %v142, 0.0
  %171 = vadd.xlane.f32.xlu0 %v170
  %v172 = vpop.xlane.xlu0 %171
  %v173 = vsel %vm54, %v143, 0.0
  %174 = vadd.xlane.f32.xlu0 %v173
  %v175 = vpop.xlane.xlu0 %174
  %v176 = vsel %vm54, %v144, 0.0
  %177 = vadd.xlane.f32.xlu0 %v176
  %v178 = vpop.xlane.xlu0 %177
  %v179 = vsel %vm54, %v145, 0.0
  %180 = vadd.xlane.f32.xlu0 %v179
  %v181 = vpop.xlane.xlu0 %180
  %v182 = vsel %vm54, %v146, 0.0
  %183 = vadd.xlane.f32.xlu0 %v182
  %v184 = vpop.xlane.xlu0 %183
  %v185 = vsel %vm54, %v147, 0.0
  %186 = vadd.xlane.f32.xlu0 %v185
  %v187 = vpop.xlane.xlu0 %186
  %v188 = vsel %vm54, %v148, 0.0
  %189 = vadd.xlane.f32.xlu0 %v188
  %v190 = vpop.xlane.xlu0 %189
  %v191 = vsel %vm54, %v149, 0.0
  %192 = vadd.xlane.f32.xlu0 %v191
  %v193 = vpop.xlane.xlu0 %192
  %v194 = vsel %vm54, %v150, 0.0
  %195 = vadd.xlane.f32.xlu0 %v194
  %v196 = vpop.xlane.xlu0 %195
  %v197 = vsel %vm54, %v151, 0.0
  %198 = vadd.xlane.f32.xlu0 %v197
  %v199 = vpop.xlane.xlu0 %198
  %v200 = vmul.f32 %v154, %v103
  %v201 = vmul.f32 %v157, %v103
  %v202 = vmul.f32 %v160, %v103
  %v203 = vmul.f32 %v163, %v103
  %v204 = vmul.f32 %v166, %v103
  %v205 = vmul.f32 %v169, %v103
  %v206 = vmul.f32 %v172, %v103
  %v207 = vmul.f32 %v175, %v103
  %v208 = vmul.f32 %v178, %v103
  %v209 = vmul.f32 %v181, %v103
  %v210 = vmul.f32 %v184, %v103
  %v211 = vmul.f32 %v187, %v103
  %v212 = vmul.f32 %v190, %v103
  %v213 = vmul.f32 %v193, %v103
  %v214 = vmul.f32 %v196, %v103
  %v215 = vmul.f32 %v199, %v103
  %v216 = vadd.f32 %v200, 1e-05
  %v217 = vadd.f32 %v201, 1e-05
  %v218 = vadd.f32 %v202, 1e-05
  %v219 = vadd.f32 %v203, 1e-05
  %v220 = vadd.f32 %v204, 1e-05
  %v221 = vadd.f32 %v205, 1e-05
  %v222 = vadd.f32 %v206, 1e-05
  %v223 = vadd.f32 %v207, 1e-05
  %v224 = vadd.f32 %v208, 1e-05
  %v225 = vadd.f32 %v209, 1e-05
  %v226 = vadd.f32 %v210, 1e-05
  %v227 = vadd.f32 %v211, 1e-05
  %v228 = vadd.f32 %v212, 1e-05
  %v229 = vadd.f32 %v213, 1e-05
  %v230 = vadd.f32 %v214, 1e-05
  %v231 = vadd.f32 %v215, 1e-05
  %v232 = vrsqrt.pop %v216
  %v233 = vrsqrt.pop %v217
  %v234 = vrsqrt.pop %v218
  %v235 = vrsqrt.pop %v219
  %v236 = vrsqrt.pop %v220
  %v237 = vrsqrt.pop %v221
  %v238 = vrsqrt.pop %v222
  %v239 = vrsqrt.pop %v223
  %v240 = vrsqrt.pop %v224
  %v241 = vrsqrt.pop %v225
  %v242 = vrsqrt.pop %v226
  %v243 = vrsqrt.pop %v227
  %v244 = vrsqrt.pop %v228
  %v245 = vrsqrt.pop %v229
  %v246 = vrsqrt.pop %v230
  %v247 = vrsqrt.pop %v231
  %v248 = vmul.f32 %v120, %v232
  %v249 = vmul.f32 %v121, %v233
  %v250 = vmul.f32 %v122, %v234
  %v251 = vmul.f32 %v123, %v235
  %v252 = vmul.f32 %v124, %v236
  %v253 = vmul.f32 %v125, %v237
  %v254 = vmul.f32 %v126, %v238
  %v255 = vmul.f32 %v127, %v239
  %v256 = vmul.f32 %v128, %v240
  %v257 = vmul.f32 %v129, %v241
  %v258 = vmul.f32 %v130, %v242
  %v259 = vmul.f32 %v131, %v243
  %v260 = vmul.f32 %v132, %v244
  %v261 = vmul.f32 %v133, %v245
  %v262 = vmul.f32 %v134, %v246
  %v263 = vmul.f32 %v135, %v247
  %v264 = vld [vmem:[%s3] sm:$0x1]
  %v266 = vlaneseq
  %v267 = vshrl.u32 %v266, 7
  %v268 = vsub.s32 0, %v267
  %v269 = vrot.slane %v264, %v268
  %v271 = vmul.f32 %v248, %v269
  %v272 = vmul.f32 %v249, %v269
  %v273 = vmul.f32 %v250, %v269
  %v274 = vmul.f32 %v251, %v269
  %v275 = vmul.f32 %v252, %v269
  %v276 = vmul.f32 %v253, %v269
  %v277 = vmul.f32 %v254, %v269
  %v278 = vmul.f32 %v255, %v269
  %v279 = vmul.f32 %v256, %v269
  %v280 = vmul.f32 %v257, %v269
  %v281 = vmul.f32 %v258, %v269
  %v282 = vmul.f32 %v259, %v269
  %v283 = vmul.f32 %v260, %v269
  %v284 = vmul.f32 %v261, %v269
  %v285 = vmul.f32 %v262, %v269
  %v286 = vmul.f32 %v263, %v269
  %v287 = vld [vmem:[%s4] sm:$0x1]
  %v289 = vlaneseq
  %v290 = vshrl.u32 %v289, 7
  %v291 = vsub.s32 0, %v290
  %v292 = vrot.slane %v287, %v291
  %v294 = vadd.f32 %v271, %v292
  %v295 = vadd.f32 %v272, %v292
  %v296 = vadd.f32 %v273, %v292
  %v297 = vadd.f32 %v274, %v292
  %v298 = vadd.f32 %v275, %v292
  %v299 = vadd.f32 %v276, %v292
  %v300 = vadd.f32 %v277, %v292
  %v301 = vadd.f32 %v278, %v292
  %v302 = vadd.f32 %v279, %v292
  %v303 = vadd.f32 %v280, %v292
  %v304 = vadd.f32 %v281, %v292
  %v305 = vadd.f32 %v282, %v292
  %v306 = vadd.f32 %v283, %v292
  %v307 = vadd.f32 %v284, %v292
  %v308 = vadd.f32 %v285, %v292
  %v309 = vadd.f32 %v286, %v292
  %v310 = vld [vmem:[%s1] sm:$0xff]
  %v311 = vld [vmem:[%s1 + $0x8] sm:$0xff]
  %v312 = vld [vmem:[%s1 + $0x10] sm:$0xff]
  %v313 = vld [vmem:[%s1 + $0x18] sm:$0xff]
  %v315 = vsel %vm54, %v294, 0
  %v318 = vsel %vm54, %v295, 0
  %v321 = vsel %vm54, %v296, 0
  %v324 = vsel %vm54, %v297, 0
  %v327 = vsel %vm54, %v298, 0
  %v330 = vsel %vm54, %v299, 0
  %v333 = vsel %vm54, %v300, 0
  %v336 = vsel %vm54, %v301, 0
  %v339 = vsel %vm54, %v302, 0
  %v342 = vsel %vm54, %v303, 0
  %v345 = vsel %vm54, %v304, 0
  %v348 = vsel %vm54, %v305, 0
  %v351 = vsel %vm54, %v306, 0
  %v354 = vsel %vm54, %v307, 0
  %v357 = vsel %vm54, %v308, 0
  %v360 = vsel %vm54, %v309, 0
  %362 = vmatprep.subr.mxu0 0.0
  %363 = vmatpush1.msra.mxu0 0.0
  %364 = vmatprep.subr.mxu0 0.0
  %365 = vmatpush1.msra.mxu0 0.0
  %366 = vmatprep.subr.mxu0 0.0
  %367 = vmatpush1.msra.mxu0 0.0
  %368 = vmatprep.subr.mxu0 0.0
  %369 = vmatpush1.msra.mxu0 0.0
  %370 = vmatprep.subr.mxu0 0.0
  %371 = vmatpush1.msra.mxu0 0.0
  %372 = vmatprep.subr.mxu0 0.0
  %373 = vmatpush1.msra.mxu0 0.0
  %374 = vmatprep.subr.mxu0 0.0
  %375 = vmatpush1.msra.mxu0 0.0
  %376 = vmatprep.subr.mxu0 0.0
  %377 = vmatpush1.msra.mxu0 0.0
  %378 = vmatprep.subr.mxu0 0.0
  %379 = vmatpush1.msra.mxu0 0.0
  %380 = vmatprep.subr.mxu0 0.0
  %381 = vmatpush1.msra.mxu0 0.0
  %382 = vmatprep.subr.mxu0 0.0
  %383 = vmatpush1.msra.mxu0 0.0
  %384 = vmatprep.subr.mxu0 0.0
  %385 = vmatpush1.msra.mxu0 0.0
  %386 = vmatprep.subr.mxu0 0.0
  %387 = vmatpush1.msra.mxu0 %v313
  %388 = vmatprep.subr.mxu0 0.0
  %389 = vmatpush1.msra.mxu0 %v312
  %390 = vmatprep.subr.mxu0 0.0
  %391 = vmatpush1.msra.mxu0 %v311
  %392 = vmatprep.subr.mxu0 0.0
  %393 = vmatpush1.msra.mxu0 %v310
  %394 = vmatprep.subr.mxu0 0.0
  %395 = vmatpush2.msra.mxu0 0.0
  %396 = vmatprep.subr.mxu0 0.0
  %397 = vmatpush2.msra.mxu0 0.0
  %398 = vmatprep.subr.mxu0 0.0
  %399 = vmatpush2.msra.mxu0 0.0
  %400 = vmatprep.subr.mxu0 0.0
  %401 = vmatpush2.msra.mxu0 0.0
  %402 = vmatprep.subr.mxu0 0.0
  %403 = vmatpush2.msra.mxu0 0.0
  %404 = vmatprep.subr.mxu0 0.0
  %405 = vmatpush2.msra.mxu0 0.0
  %406 = vmatprep.subr.mxu0 0.0
  %407 = vmatpush2.msra.mxu0 0.0
  %408 = vmatprep.subr.mxu0 0.0
  %409 = vmatpush2.msra.mxu0 0.0
  %410 = vmatprep.subr.mxu0 0.0
  %411 = vmatpush2.msra.mxu0 0.0
  %412 = vmatprep.subr.mxu0 0.0
  %413 = vmatpush2.msra.mxu0 0.0
  %414 = vmatprep.subr.mxu0 0.0
  %415 = vmatpush2.msra.mxu0 0.0
  %416 = vmatprep.subr.mxu0 0.0
  %417 = vmatpush2.msra.mxu0 0.0
  %418 = vmatprep.subr.mxu0 0.0
  %419 = vmatpush2.msra.mxu0 0.0
  %420 = vmatprep.subr.mxu0 0.0
  %421 = vmatpush2.msra.mxu0 0.0
  %422 = vmatprep.subr.mxu0 0.0
  %423 = vmatpush2.msra.mxu0 0.0
  %424 = vmatprep.subr.mxu0 0.0
  %425 = vmatpush2.msra.mxu0 0.0
  %426 = vmatprep.mubr.f32.mxu0 0.0
  %427 = vmatmul.mubr.f32.gmra.mxu0 %v315
  %v428 = vpop.f32.mrf.mxu0
  %v429 = vadd.f32 0.0, %v428
  %v430 = vpop.f32.mrf.mxu0
  %431 = vmatprep.mubr.f32.mxu0 0.0
  %432 = vmatmul.mubr.f32.gmra.mxu0 %v318
  %v433 = vpop.f32.mrf.mxu0
  %v434 = vadd.f32 0.0, %v433
  %v435 = vpop.f32.mrf.mxu0
  %436 = vmatprep.mubr.f32.mxu0 0.0
  %437 = vmatmul.mubr.f32.gmra.mxu0 %v321
  %v438 = vpop.f32.mrf.mxu0
  %v439 = vadd.f32 0.0, %v438
  %v440 = vpop.f32.mrf.mxu0
  %441 = vmatprep.mubr.f32.mxu0 0.0
  %442 = vmatmul.mubr.f32.gmra.mxu0 %v324
  %v443 = vpop.f32.mrf.mxu0
  %v444 = vadd.f32 0.0, %v443
  %v445 = vpop.f32.mrf.mxu0
  %446 = vmatprep.mubr.f32.mxu0 0.0
  %447 = vmatmul.mubr.f32.gmra.mxu0 %v327
  %v448 = vpop.f32.mrf.mxu0
  %v449 = vadd.f32 0.0, %v448
  %v450 = vpop.f32.mrf.mxu0
  %451 = vmatprep.mubr.f32.mxu0 0.0
  %452 = vmatmul.mubr.f32.gmra.mxu0 %v330
  %v453 = vpop.f32.mrf.mxu0
  %v454 = vadd.f32 0.0, %v453
  %v455 = vpop.f32.mrf.mxu0
  %456 = vmatprep.mubr.f32.mxu0 0.0
  %457 = vmatmul.mubr.f32.gmra.mxu0 %v333
  %v458 = vpop.f32.mrf.mxu0
  %v459 = vadd.f32 0.0, %v458
  %v460 = vpop.f32.mrf.mxu0
  %461 = vmatprep.mubr.f32.mxu0 0.0
  %462 = vmatmul.mubr.f32.gmra.mxu0 %v336
  %v463 = vpop.f32.mrf.mxu0
  %v464 = vadd.f32 0.0, %v463
  %v465 = vpop.f32.mrf.mxu0
  %466 = vmatprep.mubr.f32.mxu0 0.0
  %467 = vmatmul.mubr.f32.gmra.mxu0 %v339
  %v468 = vpop.f32.mrf.mxu0
  %v469 = vadd.f32 0.0, %v468
  %v470 = vpop.f32.mrf.mxu0
  %471 = vmatprep.mubr.f32.mxu0 0.0
  %472 = vmatmul.mubr.f32.gmra.mxu0 %v342
  %v473 = vpop.f32.mrf.mxu0
  %v474 = vadd.f32 0.0, %v473
  %v475 = vpop.f32.mrf.mxu0
  %476 = vmatprep.mubr.f32.mxu0 0.0
  %477 = vmatmul.mubr.f32.gmra.mxu0 %v345
  %v478 = vpop.f32.mrf.mxu0
  %v479 = vadd.f32 0.0, %v478
  %v480 = vpop.f32.mrf.mxu0
  %481 = vmatprep.mubr.f32.mxu0 0.0
  %482 = vmatmul.mubr.f32.gmra.mxu0 %v348
  %v483 = vpop.f32.mrf.mxu0
  %v484 = vadd.f32 0.0, %v483
  %v485 = vpop.f32.mrf.mxu0
  %486 = vmatprep.mubr.f32.mxu0 0.0
  %487 = vmatmul.mubr.f32.gmra.mxu0 %v351
  %v488 = vpop.f32.mrf.mxu0
  %v489 = vadd.f32 0.0, %v488
  %v490 = vpop.f32.mrf.mxu0
  %491 = vmatprep.mubr.f32.mxu0 0.0
  %492 = vmatmul.mubr.f32.gmra.mxu0 %v354
  %v493 = vpop.f32.mrf.mxu0
  %v494 = vadd.f32 0.0, %v493
  %v495 = vpop.f32.mrf.mxu0
  %496 = vmatprep.mubr.f32.mxu0 0.0
  %497 = vmatmul.mubr.f32.gmra.mxu0 %v357
  %v498 = vpop.f32.mrf.mxu0
  %v499 = vadd.f32 0.0, %v498
  %v500 = vpop.f32.mrf.mxu0
  %501 = vmatprep.mubr.f32.mxu0 0.0
  %502 = vmatmul.mubr.f32.gmra.mxu0 %v360
  %v503 = vpop.f32.mrf.mxu0
  %v504 = vadd.f32 0.0, %v503
  %v505 = vpop.f32.mrf.mxu0
  %506 = vdwg.mxu0
  %515 = vrot.lane.b32.xlu0 %v429, 96
  %v516 = vpop.permute.xlu0 %515
  %517 = vrot.lane.b32.xlu0 %v434, 96
  %v518 = vpop.permute.xlu0 %517
  %519 = vrot.lane.b32.xlu0 %v439, 96
  %v520 = vpop.permute.xlu0 %519
  %521 = vrot.lane.b32.xlu0 %v444, 96
  %v522 = vpop.permute.xlu0 %521
  %523 = vrot.lane.b32.xlu0 %v449, 96
  %v524 = vpop.permute.xlu0 %523
  %525 = vrot.lane.b32.xlu0 %v454, 96
  %v526 = vpop.permute.xlu0 %525
  %527 = vrot.lane.b32.xlu0 %v459, 96
  %v528 = vpop.permute.xlu0 %527
  %529 = vrot.lane.b32.xlu0 %v464, 96
  %v530 = vpop.permute.xlu0 %529
  %vm531 = vcmask 64512
  %v532 = vsel %vm531, %v429, 0
  %v534 = vsel %vm531, %v434, 0
  %v536 = vsel %vm531, %v439, 0
  %v538 = vsel %vm531, %v444, 0
  %v540 = vsel %vm531, %v449, 0
  %v542 = vsel %vm531, %v454, 0
  %v544 = vsel %vm531, %v459, 0
  %v546 = vsel %vm531, %v464, 0
  %v548 = vsel %vm531, %v516, 0
  %v550 = vsel %vm531, %v518, 0
  %v552 = vsel %vm531, %v520, 0
  %v554 = vsel %vm531, %v522, 0
  %v556 = vsel %vm531, %v524, 0
  %v558 = vsel %vm531, %v526, 0
  %v560 = vsel %vm531, %v528, 0
  %v562 = vsel %vm531, %v530, 0
  %564 = vmatprep.subr.mxu0 0.0
  %565 = vmatpush1.xpose.msra.mxu0 0.0
  %566 = vmatprep.subr.mxu0 0.0
  %567 = vmatpush1.xpose.msra.mxu0 0.0
  %568 = vmatprep.subr.mxu0 0.0
  %569 = vmatpush1.xpose.msra.mxu0 0.0
  %570 = vmatprep.subr.mxu0 0.0
  %571 = vmatpush1.xpose.msra.mxu0 0.0
  %572 = vmatprep.subr.mxu0 0.0
  %573 = vmatpush1.xpose.msra.mxu0 0.0
  %574 = vmatprep.subr.mxu0 0.0
  %575 = vmatpush1.xpose.msra.mxu0 0.0
  %576 = vmatprep.subr.mxu0 0.0
  %577 = vmatpush1.xpose.msra.mxu0 0.0
  %578 = vmatprep.subr.mxu0 0.0
  %579 = vmatpush1.xpose.msra.mxu0 0.0
  %580 = vmatprep.subr.mxu0 0.0
  %581 = vmatpush1.xpose.msra.mxu0 %v562
  %582 = vmatprep.subr.mxu0 0.0
  %583 = vmatpush1.xpose.msra.mxu0 %v560
  %584 = vmatprep.subr.mxu0 0.0
  %585 = vmatpush1.xpose.msra.mxu0 %v558
  %586 = vmatprep.subr.mxu0 0.0
  %587 = vmatpush1.xpose.msra.mxu0 %v556
  %588 = vmatprep.subr.mxu0 0.0
  %589 = vmatpush1.xpose.msra.mxu0 %v554
  %590 = vmatprep.subr.mxu0 0.0
  %591 = vmatpush1.xpose.msra.mxu0 %v552
  %592 = vmatprep.subr.mxu0 0.0
  %593 = vmatpush1.xpose.msra.mxu0 %v550
  %594 = vmatprep.subr.mxu0 0.0
  %595 = vmatpush1.xpose.msra.mxu0 %v548
  %596 = vmatprep.subr.mxu0 0.0
  %597 = vmatpush2.xpose.msra.mxu0 0.0
  %598 = vmatprep.subr.mxu0 0.0
  %599 = vmatpush2.xpose.msra.mxu0 0.0
  %600 = vmatprep.subr.mxu0 0.0
  %601 = vmatpush2.xpose.msra.mxu0 0.0
  %602 = vmatprep.subr.mxu0 0.0
  %603 = vmatpush2.xpose.msra.mxu0 0.0
  %604 = vmatprep.subr.mxu0 0.0
  %605 = vmatpush2.xpose.msra.mxu0 0.0
  %606 = vmatprep.subr.mxu0 0.0
  %607 = vmatpush2.xpose.msra.mxu0 0.0
  %608 = vmatprep.subr.mxu0 0.0
  %609 = vmatpush2.xpose.msra.mxu0 0.0
  %610 = vmatprep.subr.mxu0 0.0
  %611 = vmatpush2.xpose.msra.mxu0 0.0
  %612 = vmatprep.subr.mxu0 0.0
  %613 = vmatpush2.xpose.msra.mxu0 0.0
  %614 = vmatprep.subr.mxu0 0.0
  %615 = vmatpush2.xpose.msra.mxu0 0.0
  %616 = vmatprep.subr.mxu0 0.0
  %617 = vmatpush2.xpose.msra.mxu0 0.0
  %618 = vmatprep.subr.mxu0 0.0
  %619 = vmatpush2.xpose.msra.mxu0 0.0
  %620 = vmatprep.subr.mxu0 0.0
  %621 = vmatpush2.xpose.msra.mxu0 0.0
  %622 = vmatprep.subr.mxu0 0.0
  %623 = vmatpush2.xpose.msra.mxu0 0.0
  %624 = vmatprep.subr.mxu0 0.0
  %625 = vmatpush2.xpose.msra.mxu0 0.0
  %626 = vmatprep.subr.mxu0 0.0
  %627 = vmatpush2.xpose.msra.mxu0 0.0
  %628 = vmatprep.mubr.f32.mxu0 0.0
  %629 = vmatmul.mubr.f32.gmra.mxu0 %v532
  %v630 = vpop.f32.mrf.mxu0
  %v631 = vadd.f32 0.0, %v630
  %v632 = vpop.f32.mrf.mxu0
  %633 = vmatprep.mubr.f32.mxu0 0.0
  %634 = vmatmul.mubr.f32.gmra.mxu0 %v534
  %v635 = vpop.f32.mrf.mxu0
  %v636 = vadd.f32 0.0, %v635
  %v637 = vpop.f32.mrf.mxu0
  %638 = vmatprep.mubr.f32.mxu0 0.0
  %639 = vmatmul.mubr.f32.gmra.mxu0 %v536
  %v640 = vpop.f32.mrf.mxu0
  %v641 = vadd.f32 0.0, %v640
  %v642 = vpop.f32.mrf.mxu0
  %643 = vmatprep.mubr.f32.mxu0 0.0
  %644 = vmatmul.mubr.f32.gmra.mxu0 %v538
  %v645 = vpop.f32.mrf.mxu0
  %v646 = vadd.f32 0.0, %v645
  %v647 = vpop.f32.mrf.mxu0
  %648 = vmatprep.mubr.f32.mxu0 0.0
  %649 = vmatmul.mubr.f32.gmra.mxu0 %v540
  %v650 = vpop.f32.mrf.mxu0
  %v651 = vadd.f32 0.0, %v650
  %v652 = vpop.f32.mrf.mxu0
  %653 = vmatprep.mubr.f32.mxu0 0.0
  %654 = vmatmul.mubr.f32.gmra.mxu0 %v542
  %v655 = vpop.f32.mrf.mxu0
  %v656 = vadd.f32 0.0, %v655
  %v657 = vpop.f32.mrf.mxu0
  %658 = vmatprep.mubr.f32.mxu0 0.0
  %659 = vmatmul.mubr.f32.gmra.mxu0 %v544
  %v660 = vpop.f32.mrf.mxu0
  %v661 = vadd.f32 0.0, %v660
  %v662 = vpop.f32.mrf.mxu0
  %663 = vmatprep.mubr.f32.mxu0 0.0
  %664 = vmatmul.mubr.f32.gmra.mxu0 %v546
  %v665 = vpop.f32.mrf.mxu0
  %v666 = vadd.f32 0.0, %v665
  %v667 = vpop.f32.mrf.mxu0
  %668 = vdwg.mxu0
  %vm669 = vcmask 523264
  %v670 = vsel %vm669, %v631, -inf
  %671 = vmax.xlane.f32.xlu0 %v670
  %v672 = vpop.xlane.xlu0 %671
  %v673 = vsel %vm669, %v636, -inf
  %674 = vmax.xlane.f32.xlu0 %v673
  %v675 = vpop.xlane.xlu0 %674
  %v676 = vsel %vm669, %v641, -inf
  %677 = vmax.xlane.f32.xlu0 %v676
  %v678 = vpop.xlane.xlu0 %677
  %v679 = vsel %vm669, %v646, -inf
  %680 = vmax.xlane.f32.xlu0 %v679
  %v681 = vpop.xlane.xlu0 %680
  %v682 = vsel %vm669, %v651, -inf
  %683 = vmax.xlane.f32.xlu0 %v682
  %v684 = vpop.xlane.xlu0 %683
  %v685 = vsel %vm669, %v656, -inf
  %686 = vmax.xlane.f32.xlu0 %v685
  %v687 = vpop.xlane.xlu0 %686
  %v688 = vsel %vm669, %v661, -inf
  %689 = vmax.xlane.f32.xlu0 %v688
  %v690 = vpop.xlane.xlu0 %689
  %v691 = vsel %vm669, %v666, -inf
  %692 = vmax.xlane.f32.xlu0 %v691
  %v693 = vpop.xlane.xlu0 %692
  %v694 = vsub.f32 %v631, %v672
  %v695 = vsub.f32 %v636, %v675
  %v696 = vsub.f32 %v641, %v678
  %v697 = vsub.f32 %v646, %v681
  %v698 = vsub.f32 %v651, %v684
  %v699 = vsub.f32 %v656, %v687
  %v700 = vsub.f32 %v661, %v690
  %v701 = vsub.f32 %v666, %v693
  %v702 = vmul.f32 %v694, 1.442695
  %v703 = vpow.pop %v702
  %v704 = vmul.f32 %v695, 1.442695
  %v705 = vpow.pop %v704
  %v706 = vmul.f32 %v696, 1.442695
  %v707 = vpow.pop %v706
  %v708 = vmul.f32 %v697, 1.442695
  %v709 = vpow.pop %v708
  %v710 = vmul.f32 %v698, 1.442695
  %v711 = vpow.pop %v710
  %v712 = vmul.f32 %v699, 1.442695
  %v713 = vpow.pop %v712
  %v714 = vmul.f32 %v700, 1.442695
  %v715 = vpow.pop %v714
  %v716 = vmul.f32 %v701, 1.442695
  %v717 = vpow.pop %v716
  %718 = vrot.lane.b32.xlu0 %v429, 64
  %v719 = vpop.permute.xlu0 %718
  %720 = vrot.lane.b32.xlu0 %v434, 64
  %v721 = vpop.permute.xlu0 %720
  %722 = vrot.lane.b32.xlu0 %v439, 64
  %v723 = vpop.permute.xlu0 %722
  %724 = vrot.lane.b32.xlu0 %v444, 64
  %v725 = vpop.permute.xlu0 %724
  %726 = vrot.lane.b32.xlu0 %v449, 64
  %v727 = vpop.permute.xlu0 %726
  %728 = vrot.lane.b32.xlu0 %v454, 64
  %v729 = vpop.permute.xlu0 %728
  %730 = vrot.lane.b32.xlu0 %v459, 64
  %v731 = vpop.permute.xlu0 %730
  %732 = vrot.lane.b32.xlu0 %v464, 64
  %v733 = vpop.permute.xlu0 %732
  %v743 = vsel %vm669, %v703, 0
  %v746 = vsel %vm669, %v705, 0
  %v749 = vsel %vm669, %v707, 0
  %v752 = vsel %vm669, %v709, 0
  %v755 = vsel %vm669, %v711, 0
  %v758 = vsel %vm669, %v713, 0
  %v761 = vsel %vm669, %v715, 0
  %v764 = vsel %vm669, %v717, 0
  %766 = vmatprep.subr.mxu0 0.0
  %767 = vmatpush1.msra.mxu0 0.0
  %768 = vmatprep.subr.mxu0 0.0
  %769 = vmatpush1.msra.mxu0 0.0
  %770 = vmatprep.subr.mxu0 0.0
  %771 = vmatpush1.msra.mxu0 0.0
  %772 = vmatprep.subr.mxu0 0.0
  %773 = vmatpush1.msra.mxu0 0.0
  %774 = vmatprep.subr.mxu0 0.0
  %775 = vmatpush1.msra.mxu0 0.0
  %776 = vmatprep.subr.mxu0 0.0
  %777 = vmatpush1.msra.mxu0 0.0
  %778 = vmatprep.subr.mxu0 0.0
  %779 = vmatpush1.msra.mxu0 0.0
  %780 = vmatprep.subr.mxu0 0.0
  %781 = vmatpush1.msra.mxu0 0.0
  %782 = vmatprep.subr.mxu0 0.0
  %783 = vmatpush1.msra.mxu0 %v733
  %784 = vmatprep.subr.mxu0 0.0
  %785 = vmatpush1.msra.mxu0 %v731
  %786 = vmatprep.subr.mxu0 0.0
  %787 = vmatpush1.msra.mxu0 %v729
  %788 = vmatprep.subr.mxu0 0.0
  %789 = vmatpush1.msra.mxu0 %v727
  %790 = vmatprep.subr.mxu0 0.0
  %791 = vmatpush1.msra.mxu0 %v725
  %792 = vmatprep.subr.mxu0 0.0
  %793 = vmatpush1.msra.mxu0 %v723
  %794 = vmatprep.subr.mxu0 0.0
  %795 = vmatpush1.msra.mxu0 %v721
  %796 = vmatprep.subr.mxu0 0.0
  %797 = vmatpush1.msra.mxu0 %v719
  %798 = vmatprep.subr.mxu0 0.0
  %799 = vmatpush2.msra.mxu0 0.0
  %800 = vmatprep.subr.mxu0 0.0
  %801 = vmatpush2.msra.mxu0 0.0
  %802 = vmatprep.subr.mxu0 0.0
  %803 = vmatpush2.msra.mxu0 0.0
  %804 = vmatprep.subr.mxu0 0.0
  %805 = vmatpush2.msra.mxu0 0.0
  %806 = vmatprep.subr.mxu0 0.0
  %807 = vmatpush2.msra.mxu0 0.0
  %808 = vmatprep.subr.mxu0 0.0
  %809 = vmatpush2.msra.mxu0 0.0
  %810 = vmatprep.subr.mxu0 0.0
  %811 = vmatpush2.msra.mxu0 0.0
  %812 = vmatprep.subr.mxu0 0.0
  %813 = vmatpush2.msra.mxu0 0.0
  %814 = vmatprep.subr.mxu0 0.0
  %815 = vmatpush2.msra.mxu0 0.0
  %816 = vmatprep.subr.mxu0 0.0
  %817 = vmatpush2.msra.mxu0 0.0
  %818 = vmatprep.subr.mxu0 0.0
  %819 = vmatpush2.msra.mxu0 0.0
  %820 = vmatprep.subr.mxu0 0.0
  %821 = vmatpush2.msra.mxu0 0.0
  %822 = vmatprep.subr.mxu0 0.0
  %823 = vmatpush2.msra.mxu0 0.0
  %824 = vmatprep.subr.mxu0 0.0
  %825 = vmatpush2.msra.mxu0 0.0
  %826 = vmatprep.subr.mxu0 0.0
  %827 = vmatpush2.msra.mxu0 0.0
  %828 = vmatprep.subr.mxu0 0.0
  %829 = vmatpush2.msra.mxu0 0.0
  %830 = vmatprep.mubr.f32.mxu0 0.0
  %831 = vmatmul.mubr.f32.gmra.mxu0 %v743
  %v832 = vpop.f32.mrf.mxu0
  %v833 = vadd.f32 0.0, %v832
  %v834 = vpop.f32.mrf.mxu0
  %835 = vmatprep.mubr.f32.mxu0 0.0
  %836 = vmatmul.mubr.f32.gmra.mxu0 %v746
  %v837 = vpop.f32.mrf.mxu0
  %v838 = vadd.f32 0.0, %v837
  %v839 = vpop.f32.mrf.mxu0
  %840 = vmatprep.mubr.f32.mxu0 0.0
  %841 = vmatmul.mubr.f32.gmra.mxu0 %v749
  %v842 = vpop.f32.mrf.mxu0
  %v843 = vadd.f32 0.0, %v842
  %v844 = vpop.f32.mrf.mxu0
  %845 = vmatprep.mubr.f32.mxu0 0.0
  %846 = vmatmul.mubr.f32.gmra.mxu0 %v752
  %v847 = vpop.f32.mrf.mxu0
  %v848 = vadd.f32 0.0, %v847
  %v849 = vpop.f32.mrf.mxu0
  %850 = vmatprep.mubr.f32.mxu0 0.0
  %851 = vmatmul.mubr.f32.gmra.mxu0 %v755
  %v852 = vpop.f32.mrf.mxu0
  %v853 = vadd.f32 0.0, %v852
  %v854 = vpop.f32.mrf.mxu0
  %855 = vmatprep.mubr.f32.mxu0 0.0
  %856 = vmatmul.mubr.f32.gmra.mxu0 %v758
  %v857 = vpop.f32.mrf.mxu0
  %v858 = vadd.f32 0.0, %v857
  %v859 = vpop.f32.mrf.mxu0
  %860 = vmatprep.mubr.f32.mxu0 0.0
  %861 = vmatmul.mubr.f32.gmra.mxu0 %v761
  %v862 = vpop.f32.mrf.mxu0
  %v863 = vadd.f32 0.0, %v862
  %v864 = vpop.f32.mrf.mxu0
  %865 = vmatprep.mubr.f32.mxu0 0.0
  %866 = vmatmul.mubr.f32.gmra.mxu0 %v764
  %v867 = vpop.f32.mrf.mxu0
  %v868 = vadd.f32 0.0, %v867
  %v869 = vpop.f32.mrf.mxu0
  %870 = vdwg.mxu0
  %v871 = vsel %vm669, %v703, 0.0
  %872 = vadd.xlane.f32.xlu0 %v871
  %v873 = vpop.xlane.xlu0 %872
  %v874 = vsel %vm669, %v705, 0.0
  %875 = vadd.xlane.f32.xlu0 %v874
  %v876 = vpop.xlane.xlu0 %875
  %v877 = vsel %vm669, %v707, 0.0
  %878 = vadd.xlane.f32.xlu0 %v877
  %v879 = vpop.xlane.xlu0 %878
  %v880 = vsel %vm669, %v709, 0.0
  %881 = vadd.xlane.f32.xlu0 %v880
  %v882 = vpop.xlane.xlu0 %881
  %v883 = vsel %vm669, %v711, 0.0
  %884 = vadd.xlane.f32.xlu0 %v883
  %v885 = vpop.xlane.xlu0 %884
  %v886 = vsel %vm669, %v713, 0.0
  %887 = vadd.xlane.f32.xlu0 %v886
  %v888 = vpop.xlane.xlu0 %887
  %v889 = vsel %vm669, %v715, 0.0
  %890 = vadd.xlane.f32.xlu0 %v889
  %v891 = vpop.xlane.xlu0 %890
  %v892 = vsel %vm669, %v717, 0.0
  %893 = vadd.xlane.f32.xlu0 %v892
  %v894 = vpop.xlane.xlu0 %893
  %v895 = vrcp.pop %v873
  %v896 = vmul.f32 %v833, %v895
  %v897 = vrcp.pop %v876
  %v898 = vmul.f32 %v838, %v897
  %v899 = vrcp.pop %v879
  %v900 = vmul.f32 %v843, %v899
  %v901 = vrcp.pop %v882
  %v902 = vmul.f32 %v848, %v901
  %v903 = vrcp.pop %v885
  %v904 = vmul.f32 %v853, %v903
  %v905 = vrcp.pop %v888
  %v906 = vmul.f32 %v858, %v905
  %v907 = vrcp.pop %v891
  %v908 = vmul.f32 %v863, %v907
  %v909 = vrcp.pop %v894
  %v910 = vmul.f32 %v868, %v909
  %911 = vrot.lane.b32.xlu0 %v429, 120
  %v912 = vpop.permute.xlu0 %911
  %913 = vrot.lane.b32.xlu0 %v434, 120
  %v914 = vpop.permute.xlu0 %913
  %915 = vrot.lane.b32.xlu0 %v439, 120
  %v916 = vpop.permute.xlu0 %915
  %917 = vrot.lane.b32.xlu0 %v444, 120
  %v918 = vpop.permute.xlu0 %917
  %919 = vrot.lane.b32.xlu0 %v449, 120
  %v920 = vpop.permute.xlu0 %919
  %921 = vrot.lane.b32.xlu0 %v454, 120
  %v922 = vpop.permute.xlu0 %921
  %923 = vrot.lane.b32.xlu0 %v459, 120
  %v924 = vpop.permute.xlu0 %923
  %925 = vrot.lane.b32.xlu0 %v464, 120
  %v926 = vpop.permute.xlu0 %925
  %927 = vrot.lane.b32.xlu0 %v429, 88
  %v928 = vpop.permute.xlu0 %927
  %929 = vrot.lane.b32.xlu0 %v434, 88
  %v930 = vpop.permute.xlu0 %929
  %931 = vrot.lane.b32.xlu0 %v439, 88
  %v932 = vpop.permute.xlu0 %931
  %933 = vrot.lane.b32.xlu0 %v444, 88
  %v934 = vpop.permute.xlu0 %933
  %935 = vrot.lane.b32.xlu0 %v449, 88
  %v936 = vpop.permute.xlu0 %935
  %937 = vrot.lane.b32.xlu0 %v454, 88
  %v938 = vpop.permute.xlu0 %937
  %939 = vrot.lane.b32.xlu0 %v459, 88
  %v940 = vpop.permute.xlu0 %939
  %941 = vrot.lane.b32.xlu0 %v464, 88
  %v942 = vpop.permute.xlu0 %941
  %v943 = vsel %vm531, %v912, 0
  %v945 = vsel %vm531, %v914, 0
  %v947 = vsel %vm531, %v916, 0
  %v949 = vsel %vm531, %v918, 0
  %v951 = vsel %vm531, %v920, 0
  %v953 = vsel %vm531, %v922, 0
  %v955 = vsel %vm531, %v924, 0
  %v957 = vsel %vm531, %v926, 0
  %v959 = vsel %vm531, %v928, 0
  %v961 = vsel %vm531, %v930, 0
  %v963 = vsel %vm531, %v932, 0
  %v965 = vsel %vm531, %v934, 0
  %v967 = vsel %vm531, %v936, 0
  %v969 = vsel %vm531, %v938, 0
  %v971 = vsel %vm531, %v940, 0
  %v973 = vsel %vm531, %v942, 0
  %975 = vmatprep.subr.mxu0 0.0
  %976 = vmatpush1.xpose.msra.mxu0 0.0
  %977 = vmatprep.subr.mxu0 0.0
  %978 = vmatpush1.xpose.msra.mxu0 0.0
  %979 = vmatprep.subr.mxu0 0.0
  %980 = vmatpush1.xpose.msra.mxu0 0.0
  %981 = vmatprep.subr.mxu0 0.0
  %982 = vmatpush1.xpose.msra.mxu0 0.0
  %983 = vmatprep.subr.mxu0 0.0
  %984 = vmatpush1.xpose.msra.mxu0 0.0
  %985 = vmatprep.subr.mxu0 0.0
  %986 = vmatpush1.xpose.msra.mxu0 0.0
  %987 = vmatprep.subr.mxu0 0.0
  %988 = vmatpush1.xpose.msra.mxu0 0.0
  %989 = vmatprep.subr.mxu0 0.0
  %990 = vmatpush1.xpose.msra.mxu0 0.0
  %991 = vmatprep.subr.mxu0 0.0
  %992 = vmatpush1.xpose.msra.mxu0 %v973
  %993 = vmatprep.subr.mxu0 0.0
  %994 = vmatpush1.xpose.msra.mxu0 %v971
  %995 = vmatprep.subr.mxu0 0.0
  %996 = vmatpush1.xpose.msra.mxu0 %v969
  %997 = vmatprep.subr.mxu0 0.0
  %998 = vmatpush1.xpose.msra.mxu0 %v967
  %999 = vmatprep.subr.mxu0 0.0
  %1000 = vmatpush1.xpose.msra.mxu0 %v965
  %1001 = vmatprep.subr.mxu0 0.0
  %1002 = vmatpush1.xpose.msra.mxu0 %v963
  %1003 = vmatprep.subr.mxu0 0.0
  %1004 = vmatpush1.xpose.msra.mxu0 %v961
  %1005 = vmatprep.subr.mxu0 0.0
  %1006 = vmatpush1.xpose.msra.mxu0 %v959
  %1007 = vmatprep.subr.mxu0 0.0
  %1008 = vmatpush2.xpose.msra.mxu0 0.0
  %1009 = vmatprep.subr.mxu0 0.0
  %1010 = vmatpush2.xpose.msra.mxu0 0.0
  %1011 = vmatprep.subr.mxu0 0.0
  %1012 = vmatpush2.xpose.msra.mxu0 0.0
  %1013 = vmatprep.subr.mxu0 0.0
  %1014 = vmatpush2.xpose.msra.mxu0 0.0
  %1015 = vmatprep.subr.mxu0 0.0
  %1016 = vmatpush2.xpose.msra.mxu0 0.0
  %1017 = vmatprep.subr.mxu0 0.0
  %1018 = vmatpush2.xpose.msra.mxu0 0.0
  %1019 = vmatprep.subr.mxu0 0.0
  %1020 = vmatpush2.xpose.msra.mxu0 0.0
  %1021 = vmatprep.subr.mxu0 0.0
  %1022 = vmatpush2.xpose.msra.mxu0 0.0
  %1023 = vmatprep.subr.mxu0 0.0
  %1024 = vmatpush2.xpose.msra.mxu0 0.0
  %1025 = vmatprep.subr.mxu0 0.0
  %1026 = vmatpush2.xpose.msra.mxu0 0.0
  %1027 = vmatprep.subr.mxu0 0.0
  %1028 = vmatpush2.xpose.msra.mxu0 0.0
  %1029 = vmatprep.subr.mxu0 0.0
  %1030 = vmatpush2.xpose.msra.mxu0 0.0
  %1031 = vmatprep.subr.mxu0 0.0
  %1032 = vmatpush2.xpose.msra.mxu0 0.0
  %1033 = vmatprep.subr.mxu0 0.0
  %1034 = vmatpush2.xpose.msra.mxu0 0.0
  %1035 = vmatprep.subr.mxu0 0.0
  %1036 = vmatpush2.xpose.msra.mxu0 0.0
  %1037 = vmatprep.subr.mxu0 0.0
  %1038 = vmatpush2.xpose.msra.mxu0 0.0
  %1039 = vmatprep.mubr.f32.mxu0 0.0
  %1040 = vmatmul.mubr.f32.gmra.mxu0 %v943
  %v1041 = vpop.f32.mrf.mxu0
  %v1042 = vadd.f32 0.0, %v1041
  %v1043 = vpop.f32.mrf.mxu0
  %1044 = vmatprep.mubr.f32.mxu0 0.0
  %1045 = vmatmul.mubr.f32.gmra.mxu0 %v945
  %v1046 = vpop.f32.mrf.mxu0
  %v1047 = vadd.f32 0.0, %v1046
  %v1048 = vpop.f32.mrf.mxu0
  %1049 = vmatprep.mubr.f32.mxu0 0.0
  %1050 = vmatmul.mubr.f32.gmra.mxu0 %v947
  %v1051 = vpop.f32.mrf.mxu0
  %v1052 = vadd.f32 0.0, %v1051
  %v1053 = vpop.f32.mrf.mxu0
  %1054 = vmatprep.mubr.f32.mxu0 0.0
  %1055 = vmatmul.mubr.f32.gmra.mxu0 %v949
  %v1056 = vpop.f32.mrf.mxu0
  %v1057 = vadd.f32 0.0, %v1056
  %v1058 = vpop.f32.mrf.mxu0
  %1059 = vmatprep.mubr.f32.mxu0 0.0
  %1060 = vmatmul.mubr.f32.gmra.mxu0 %v951
  %v1061 = vpop.f32.mrf.mxu0
  %v1062 = vadd.f32 0.0, %v1061
  %v1063 = vpop.f32.mrf.mxu0
  %1064 = vmatprep.mubr.f32.mxu0 0.0
  %1065 = vmatmul.mubr.f32.gmra.mxu0 %v953
  %v1066 = vpop.f32.mrf.mxu0
  %v1067 = vadd.f32 0.0, %v1066
  %v1068 = vpop.f32.mrf.mxu0
  %1069 = vmatprep.mubr.f32.mxu0 0.0
  %1070 = vmatmul.mubr.f32.gmra.mxu0 %v955
  %v1071 = vpop.f32.mrf.mxu0
  %v1072 = vadd.f32 0.0, %v1071
  %v1073 = vpop.f32.mrf.mxu0
  %1074 = vmatprep.mubr.f32.mxu0 0.0
  %1075 = vmatmul.mubr.f32.gmra.mxu0 %v957
  %v1076 = vpop.f32.mrf.mxu0
  %v1077 = vadd.f32 0.0, %v1076
  %v1078 = vpop.f32.mrf.mxu0
  %1079 = vdwg.mxu0
  %v1080 = vsel %vm669, %v1042, -inf
  %1081 = vmax.xlane.f32.xlu0 %v1080
  %v1082 = vpop.xlane.xlu0 %1081
  %v1083 = vsel %vm669, %v1047, -inf
  %1084 = vmax.xlane.f32.xlu0 %v1083
  %v1085 = vpop.xlane.xlu0 %1084
  %v1086 = vsel %vm669, %v1052, -inf
  %1087 = vmax.xlane.f32.xlu0 %v1086
  %v1088 = vpop.xlane.xlu0 %1087
  %v1089 = vsel %vm669, %v1057, -inf
  %1090 = vmax.xlane.f32.xlu0 %v1089
  %v1091 = vpop.xlane.xlu0 %1090
  %v1092 = vsel %vm669, %v1062, -inf
  %1093 = vmax.xlane.f32.xlu0 %v1092
  %v1094 = vpop.xlane.xlu0 %1093
  %v1095 = vsel %vm669, %v1067, -inf
  %1096 = vmax.xlane.f32.xlu0 %v1095
  %v1097 = vpop.xlane.xlu0 %1096
  %v1098 = vsel %vm669, %v1072, -inf
  %1099 = vmax.xlane.f32.xlu0 %v1098
  %v1100 = vpop.xlane.xlu0 %1099
  %v1101 = vsel %vm669, %v1077, -inf
  %1102 = vmax.xlane.f32.xlu0 %v1101
  %v1103 = vpop.xlane.xlu0 %1102
  %v1104 = vsub.f32 %v1042, %v1082
  %v1105 = vsub.f32 %v1047, %v1085
  %v1106 = vsub.f32 %v1052, %v1088
  %v1107 = vsub.f32 %v1057, %v1091
  %v1108 = vsub.f32 %v1062, %v1094
  %v1109 = vsub.f32 %v1067, %v1097
  %v1110 = vsub.f32 %v1072, %v1100
  %v1111 = vsub.f32 %v1077, %v1103
  %v1112 = vmul.f32 %v1104, 1.442695
  %v1113 = vpow.pop %v1112
  %v1114 = vmul.f32 %v1105, 1.442695
  %v1115 = vpow.pop %v1114
  %v1116 = vmul.f32 %v1106, 1.442695
  %v1117 = vpow.pop %v1116
  %v1118 = vmul.f32 %v1107, 1.442695
  %v1119 = vpow.pop %v1118
  %v1120 = vmul.f32 %v1108, 1.442695
  %v1121 = vpow.pop %v1120
  %v1122 = vmul.f32 %v1109, 1.442695
  %v1123 = vpow.pop %v1122
  %v1124 = vmul.f32 %v1110, 1.442695
  %v1125 = vpow.pop %v1124
  %v1126 = vmul.f32 %v1111, 1.442695
  %v1127 = vpow.pop %v1126
  %1128 = vrot.lane.b32.xlu0 %v429, 56
  %v1129 = vpop.permute.xlu0 %1128
  %1130 = vrot.lane.b32.xlu0 %v434, 56
  %v1131 = vpop.permute.xlu0 %1130
  %1132 = vrot.lane.b32.xlu0 %v439, 56
  %v1133 = vpop.permute.xlu0 %1132
  %1134 = vrot.lane.b32.xlu0 %v444, 56
  %v1135 = vpop.permute.xlu0 %1134
  %1136 = vrot.lane.b32.xlu0 %v449, 56
  %v1137 = vpop.permute.xlu0 %1136
  %1138 = vrot.lane.b32.xlu0 %v454, 56
  %v1139 = vpop.permute.xlu0 %1138
  %1140 = vrot.lane.b32.xlu0 %v459, 56
  %v1141 = vpop.permute.xlu0 %1140
  %1142 = vrot.lane.b32.xlu0 %v464, 56
  %v1143 = vpop.permute.xlu0 %1142
  %v1153 = vsel %vm669, %v1113, 0
  %v1156 = vsel %vm669, %v1115, 0
  %v1159 = vsel %vm669, %v1117, 0
  %v1162 = vsel %vm669, %v1119, 0
  %v1165 = vsel %vm669, %v1121, 0
  %v1168 = vsel %vm669, %v1123, 0
  %v1171 = vsel %vm669, %v1125, 0
  %v1174 = vsel %vm669, %v1127, 0
  %1176 = vmatprep.subr.mxu0 0.0
  %1177 = vmatpush1.msra.mxu0 0.0
  %1178 = vmatprep.subr.mxu0 0.0
  %1179 = vmatpush1.msra.mxu0 0.0
  %1180 = vmatprep.subr.mxu0 0.0
  %1181 = vmatpush1.msra.mxu0 0.0
  %1182 = vmatprep.subr.mxu0 0.0
  %1183 = vmatpush1.msra.mxu0 0.0
  %1184 = vmatprep.subr.mxu0 0.0
  %1185 = vmatpush1.msra.mxu0 0.0
  %1186 = vmatprep.subr.mxu0 0.0
  %1187 = vmatpush1.msra.mxu0 0.0
  %1188 = vmatprep.subr.mxu0 0.0
  %1189 = vmatpush1.msra.mxu0 0.0
  %1190 = vmatprep.subr.mxu0 0.0
  %1191 = vmatpush1.msra.mxu0 0.0
  %1192 = vmatprep.subr.mxu0 0.0
  %1193 = vmatpush1.msra.mxu0 %v1143
  %1194 = vmatprep.subr.mxu0 0.0
  %1195 = vmatpush1.msra.mxu0 %v1141
  %1196 = vmatprep.subr.mxu0 0.0
  %1197 = vmatpush1.msra.mxu0 %v1139
  %1198 = vmatprep.subr.mxu0 0.0
  %1199 = vmatpush1.msra.mxu0 %v1137
  %1200 = vmatprep.subr.mxu0 0.0
  %1201 = vmatpush1.msra.mxu0 %v1135
  %1202 = vmatprep.subr.mxu0 0.0
  %1203 = vmatpush1.msra.mxu0 %v1133
  %1204 = vmatprep.subr.mxu0 0.0
  %1205 = vmatpush1.msra.mxu0 %v1131
  %1206 = vmatprep.subr.mxu0 0.0
  %1207 = vmatpush1.msra.mxu0 %v1129
  %1208 = vmatprep.subr.mxu0 0.0
  %1209 = vmatpush2.msra.mxu0 0.0
  %1210 = vmatprep.subr.mxu0 0.0
  %1211 = vmatpush2.msra.mxu0 0.0
  %1212 = vmatprep.subr.mxu0 0.0
  %1213 = vmatpush2.msra.mxu0 0.0
  %1214 = vmatprep.subr.mxu0 0.0
  %1215 = vmatpush2.msra.mxu0 0.0
  %1216 = vmatprep.subr.mxu0 0.0
  %1217 = vmatpush2.msra.mxu0 0.0
  %1218 = vmatprep.subr.mxu0 0.0
  %1219 = vmatpush2.msra.mxu0 0.0
  %1220 = vmatprep.subr.mxu0 0.0
  %1221 = vmatpush2.msra.mxu0 0.0
  %1222 = vmatprep.subr.mxu0 0.0
  %1223 = vmatpush2.msra.mxu0 0.0
  %1224 = vmatprep.subr.mxu0 0.0
  %1225 = vmatpush2.msra.mxu0 0.0
  %1226 = vmatprep.subr.mxu0 0.0
  %1227 = vmatpush2.msra.mxu0 0.0
  %1228 = vmatprep.subr.mxu0 0.0
  %1229 = vmatpush2.msra.mxu0 0.0
  %1230 = vmatprep.subr.mxu0 0.0
  %1231 = vmatpush2.msra.mxu0 0.0
  %1232 = vmatprep.subr.mxu0 0.0
  %1233 = vmatpush2.msra.mxu0 0.0
  %1234 = vmatprep.subr.mxu0 0.0
  %1235 = vmatpush2.msra.mxu0 0.0
  %1236 = vmatprep.subr.mxu0 0.0
  %1237 = vmatpush2.msra.mxu0 0.0
  %1238 = vmatprep.subr.mxu0 0.0
  %1239 = vmatpush2.msra.mxu0 0.0
  %1240 = vmatprep.mubr.f32.mxu0 0.0
  %1241 = vmatmul.mubr.f32.gmra.mxu0 %v1153
  %v1242 = vpop.f32.mrf.mxu0
  %v1243 = vadd.f32 0.0, %v1242
  %v1244 = vpop.f32.mrf.mxu0
  %1245 = vmatprep.mubr.f32.mxu0 0.0
  %1246 = vmatmul.mubr.f32.gmra.mxu0 %v1156
  %v1247 = vpop.f32.mrf.mxu0
  %v1248 = vadd.f32 0.0, %v1247
  %v1249 = vpop.f32.mrf.mxu0
  %1250 = vmatprep.mubr.f32.mxu0 0.0
  %1251 = vmatmul.mubr.f32.gmra.mxu0 %v1159
  %v1252 = vpop.f32.mrf.mxu0
  %v1253 = vadd.f32 0.0, %v1252
  %v1254 = vpop.f32.mrf.mxu0
  %1255 = vmatprep.mubr.f32.mxu0 0.0
  %1256 = vmatmul.mubr.f32.gmra.mxu0 %v1162
  %v1257 = vpop.f32.mrf.mxu0
  %v1258 = vadd.f32 0.0, %v1257
  %v1259 = vpop.f32.mrf.mxu0
  %1260 = vmatprep.mubr.f32.mxu0 0.0
  %1261 = vmatmul.mubr.f32.gmra.mxu0 %v1165
  %v1262 = vpop.f32.mrf.mxu0
  %v1263 = vadd.f32 0.0, %v1262
  %v1264 = vpop.f32.mrf.mxu0
  %1265 = vmatprep.mubr.f32.mxu0 0.0
  %1266 = vmatmul.mubr.f32.gmra.mxu0 %v1168
  %v1267 = vpop.f32.mrf.mxu0
  %v1268 = vadd.f32 0.0, %v1267
  %v1269 = vpop.f32.mrf.mxu0
  %1270 = vmatprep.mubr.f32.mxu0 0.0
  %1271 = vmatmul.mubr.f32.gmra.mxu0 %v1171
  %v1272 = vpop.f32.mrf.mxu0
  %v1273 = vadd.f32 0.0, %v1272
  %v1274 = vpop.f32.mrf.mxu0
  %1275 = vmatprep.mubr.f32.mxu0 0.0
  %1276 = vmatmul.mubr.f32.gmra.mxu0 %v1174
  %v1277 = vpop.f32.mrf.mxu0
  %v1278 = vadd.f32 0.0, %v1277
  %v1279 = vpop.f32.mrf.mxu0
  %1280 = vdwg.mxu0
  %v1281 = vsel %vm669, %v1113, 0.0
  %1282 = vadd.xlane.f32.xlu0 %v1281
  %v1283 = vpop.xlane.xlu0 %1282
  %v1284 = vsel %vm669, %v1115, 0.0
  %1285 = vadd.xlane.f32.xlu0 %v1284
  %v1286 = vpop.xlane.xlu0 %1285
  %v1287 = vsel %vm669, %v1117, 0.0
  %1288 = vadd.xlane.f32.xlu0 %v1287
  %v1289 = vpop.xlane.xlu0 %1288
  %v1290 = vsel %vm669, %v1119, 0.0
  %1291 = vadd.xlane.f32.xlu0 %v1290
  %v1292 = vpop.xlane.xlu0 %1291
  %v1293 = vsel %vm669, %v1121, 0.0
  %1294 = vadd.xlane.f32.xlu0 %v1293
  %v1295 = vpop.xlane.xlu0 %1294
  %v1296 = vsel %vm669, %v1123, 0.0
  %1297 = vadd.xlane.f32.xlu0 %v1296
  %v1298 = vpop.xlane.xlu0 %1297
  %v1299 = vsel %vm669, %v1125, 0.0
  %1300 = vadd.xlane.f32.xlu0 %v1299
  %v1301 = vpop.xlane.xlu0 %1300
  %v1302 = vsel %vm669, %v1127, 0.0
  %1303 = vadd.xlane.f32.xlu0 %v1302
  %v1304 = vpop.xlane.xlu0 %1303
  %v1305 = vrcp.pop %v1283
  %v1306 = vmul.f32 %v1243, %v1305
  %v1307 = vrcp.pop %v1286
  %v1308 = vmul.f32 %v1248, %v1307
  %v1309 = vrcp.pop %v1289
  %v1310 = vmul.f32 %v1253, %v1309
  %v1311 = vrcp.pop %v1292
  %v1312 = vmul.f32 %v1258, %v1311
  %v1313 = vrcp.pop %v1295
  %v1314 = vmul.f32 %v1263, %v1313
  %v1315 = vrcp.pop %v1298
  %v1316 = vmul.f32 %v1268, %v1315
  %v1317 = vrcp.pop %v1301
  %v1318 = vmul.f32 %v1273, %v1317
  %v1319 = vrcp.pop %v1304
  %v1320 = vmul.f32 %v1278, %v1319
  %1321 = vrot.lane.b32.xlu0 %v429, 112
  %v1322 = vpop.permute.xlu0 %1321
  %1323 = vrot.lane.b32.xlu0 %v434, 112
  %v1324 = vpop.permute.xlu0 %1323
  %1325 = vrot.lane.b32.xlu0 %v439, 112
  %v1326 = vpop.permute.xlu0 %1325
  %1327 = vrot.lane.b32.xlu0 %v444, 112
  %v1328 = vpop.permute.xlu0 %1327
  %1329 = vrot.lane.b32.xlu0 %v449, 112
  %v1330 = vpop.permute.xlu0 %1329
  %1331 = vrot.lane.b32.xlu0 %v454, 112
  %v1332 = vpop.permute.xlu0 %1331
  %1333 = vrot.lane.b32.xlu0 %v459, 112
  %v1334 = vpop.permute.xlu0 %1333
  %1335 = vrot.lane.b32.xlu0 %v464, 112
  %v1336 = vpop.permute.xlu0 %1335
  %1337 = vrot.lane.b32.xlu0 %v429, 80
  %v1338 = vpop.permute.xlu0 %1337
  %1339 = vrot.lane.b32.xlu0 %v434, 80
  %v1340 = vpop.permute.xlu0 %1339
  %1341 = vrot.lane.b32.xlu0 %v439, 80
  %v1342 = vpop.permute.xlu0 %1341
  %1343 = vrot.lane.b32.xlu0 %v444, 80
  %v1344 = vpop.permute.xlu0 %1343
  %1345 = vrot.lane.b32.xlu0 %v449, 80
  %v1346 = vpop.permute.xlu0 %1345
  %1347 = vrot.lane.b32.xlu0 %v454, 80
  %v1348 = vpop.permute.xlu0 %1347
  %1349 = vrot.lane.b32.xlu0 %v459, 80
  %v1350 = vpop.permute.xlu0 %1349
  %1351 = vrot.lane.b32.xlu0 %v464, 80
  %v1352 = vpop.permute.xlu0 %1351
  %v1353 = vsel %vm531, %v1322, 0
  %v1355 = vsel %vm531, %v1324, 0
  %v1357 = vsel %vm531, %v1326, 0
  %v1359 = vsel %vm531, %v1328, 0
  %v1361 = vsel %vm531, %v1330, 0
  %v1363 = vsel %vm531, %v1332, 0
  %v1365 = vsel %vm531, %v1334, 0
  %v1367 = vsel %vm531, %v1336, 0
  %v1369 = vsel %vm531, %v1338, 0
  %v1371 = vsel %vm531, %v1340, 0
  %v1373 = vsel %vm531, %v1342, 0
  %v1375 = vsel %vm531, %v1344, 0
  %v1377 = vsel %vm531, %v1346, 0
  %v1379 = vsel %vm531, %v1348, 0
  %v1381 = vsel %vm531, %v1350, 0
  %v1383 = vsel %vm531, %v1352, 0
  %1385 = vmatprep.subr.mxu0 0.0
  %1386 = vmatpush1.xpose.msra.mxu0 0.0
  %1387 = vmatprep.subr.mxu0 0.0
  %1388 = vmatpush1.xpose.msra.mxu0 0.0
  %1389 = vmatprep.subr.mxu0 0.0
  %1390 = vmatpush1.xpose.msra.mxu0 0.0
  %1391 = vmatprep.subr.mxu0 0.0
  %1392 = vmatpush1.xpose.msra.mxu0 0.0
  %1393 = vmatprep.subr.mxu0 0.0
  %1394 = vmatpush1.xpose.msra.mxu0 0.0
  %1395 = vmatprep.subr.mxu0 0.0
  %1396 = vmatpush1.xpose.msra.mxu0 0.0
  %1397 = vmatprep.subr.mxu0 0.0
  %1398 = vmatpush1.xpose.msra.mxu0 0.0
  %1399 = vmatprep.subr.mxu0 0.0
  %1400 = vmatpush1.xpose.msra.mxu0 0.0
  %1401 = vmatprep.subr.mxu0 0.0
  %1402 = vmatpush1.xpose.msra.mxu0 %v1383
  %1403 = vmatprep.subr.mxu0 0.0
  %1404 = vmatpush1.xpose.msra.mxu0 %v1381
  %1405 = vmatprep.subr.mxu0 0.0
  %1406 = vmatpush1.xpose.msra.mxu0 %v1379
  %1407 = vmatprep.subr.mxu0 0.0
  %1408 = vmatpush1.xpose.msra.mxu0 %v1377
  %1409 = vmatprep.subr.mxu0 0.0
  %1410 = vmatpush1.xpose.msra.mxu0 %v1375
  %1411 = vmatprep.subr.mxu0 0.0
  %1412 = vmatpush1.xpose.msra.mxu0 %v1373
  %1413 = vmatprep.subr.mxu0 0.0
  %1414 = vmatpush1.xpose.msra.mxu0 %v1371
  %1415 = vmatprep.subr.mxu0 0.0
  %1416 = vmatpush1.xpose.msra.mxu0 %v1369
  %1417 = vmatprep.subr.mxu0 0.0
  %1418 = vmatpush2.xpose.msra.mxu0 0.0
  %1419 = vmatprep.subr.mxu0 0.0
  %1420 = vmatpush2.xpose.msra.mxu0 0.0
  %1421 = vmatprep.subr.mxu0 0.0
  %1422 = vmatpush2.xpose.msra.mxu0 0.0
  %1423 = vmatprep.subr.mxu0 0.0
  %1424 = vmatpush2.xpose.msra.mxu0 0.0
  %1425 = vmatprep.subr.mxu0 0.0
  %1426 = vmatpush2.xpose.msra.mxu0 0.0
  %1427 = vmatprep.subr.mxu0 0.0
  %1428 = vmatpush2.xpose.msra.mxu0 0.0
  %1429 = vmatprep.subr.mxu0 0.0
  %1430 = vmatpush2.xpose.msra.mxu0 0.0
  %1431 = vmatprep.subr.mxu0 0.0
  %1432 = vmatpush2.xpose.msra.mxu0 0.0
  %1433 = vmatprep.subr.mxu0 0.0
  %1434 = vmatpush2.xpose.msra.mxu0 0.0
  %1435 = vmatprep.subr.mxu0 0.0
  %1436 = vmatpush2.xpose.msra.mxu0 0.0
  %1437 = vmatprep.subr.mxu0 0.0
  %1438 = vmatpush2.xpose.msra.mxu0 0.0
  %1439 = vmatprep.subr.mxu0 0.0
  %1440 = vmatpush2.xpose.msra.mxu0 0.0
  %1441 = vmatprep.subr.mxu0 0.0
  %1442 = vmatpush2.xpose.msra.mxu0 0.0
  %1443 = vmatprep.subr.mxu0 0.0
  %1444 = vmatpush2.xpose.msra.mxu0 0.0
  %1445 = vmatprep.subr.mxu0 0.0
  %1446 = vmatpush2.xpose.msra.mxu0 0.0
  %1447 = vmatprep.subr.mxu0 0.0
  %1448 = vmatpush2.xpose.msra.mxu0 0.0
  %1449 = vmatprep.mubr.f32.mxu0 0.0
  %1450 = vmatmul.mubr.f32.gmra.mxu0 %v1353
  %v1451 = vpop.f32.mrf.mxu0
  %v1452 = vadd.f32 0.0, %v1451
  %v1453 = vpop.f32.mrf.mxu0
  %1454 = vmatprep.mubr.f32.mxu0 0.0
  %1455 = vmatmul.mubr.f32.gmra.mxu0 %v1355
  %v1456 = vpop.f32.mrf.mxu0
  %v1457 = vadd.f32 0.0, %v1456
  %v1458 = vpop.f32.mrf.mxu0
  %1459 = vmatprep.mubr.f32.mxu0 0.0
  %1460 = vmatmul.mubr.f32.gmra.mxu0 %v1357
  %v1461 = vpop.f32.mrf.mxu0
  %v1462 = vadd.f32 0.0, %v1461
  %v1463 = vpop.f32.mrf.mxu0
  %1464 = vmatprep.mubr.f32.mxu0 0.0
  %1465 = vmatmul.mubr.f32.gmra.mxu0 %v1359
  %v1466 = vpop.f32.mrf.mxu0
  %v1467 = vadd.f32 0.0, %v1466
  %v1468 = vpop.f32.mrf.mxu0
  %1469 = vmatprep.mubr.f32.mxu0 0.0
  %1470 = vmatmul.mubr.f32.gmra.mxu0 %v1361
  %v1471 = vpop.f32.mrf.mxu0
  %v1472 = vadd.f32 0.0, %v1471
  %v1473 = vpop.f32.mrf.mxu0
  %1474 = vmatprep.mubr.f32.mxu0 0.0
  %1475 = vmatmul.mubr.f32.gmra.mxu0 %v1363
  %v1476 = vpop.f32.mrf.mxu0
  %v1477 = vadd.f32 0.0, %v1476
  %v1478 = vpop.f32.mrf.mxu0
  %1479 = vmatprep.mubr.f32.mxu0 0.0
  %1480 = vmatmul.mubr.f32.gmra.mxu0 %v1365
  %v1481 = vpop.f32.mrf.mxu0
  %v1482 = vadd.f32 0.0, %v1481
  %v1483 = vpop.f32.mrf.mxu0
  %1484 = vmatprep.mubr.f32.mxu0 0.0
  %1485 = vmatmul.mubr.f32.gmra.mxu0 %v1367
  %v1486 = vpop.f32.mrf.mxu0
  %v1487 = vadd.f32 0.0, %v1486
  %v1488 = vpop.f32.mrf.mxu0
  %1489 = vdwg.mxu0
  %v1490 = vsel %vm669, %v1452, -inf
  %1491 = vmax.xlane.f32.xlu0 %v1490
  %v1492 = vpop.xlane.xlu0 %1491
  %v1493 = vsel %vm669, %v1457, -inf
  %1494 = vmax.xlane.f32.xlu0 %v1493
  %v1495 = vpop.xlane.xlu0 %1494
  %v1496 = vsel %vm669, %v1462, -inf
  %1497 = vmax.xlane.f32.xlu0 %v1496
  %v1498 = vpop.xlane.xlu0 %1497
  %v1499 = vsel %vm669, %v1467, -inf
  %1500 = vmax.xlane.f32.xlu0 %v1499
  %v1501 = vpop.xlane.xlu0 %1500
  %v1502 = vsel %vm669, %v1472, -inf
  %1503 = vmax.xlane.f32.xlu0 %v1502
  %v1504 = vpop.xlane.xlu0 %1503
  %v1505 = vsel %vm669, %v1477, -inf
  %1506 = vmax.xlane.f32.xlu0 %v1505
  %v1507 = vpop.xlane.xlu0 %1506
  %v1508 = vsel %vm669, %v1482, -inf
  %1509 = vmax.xlane.f32.xlu0 %v1508
  %v1510 = vpop.xlane.xlu0 %1509
  %v1511 = vsel %vm669, %v1487, -inf
  %1512 = vmax.xlane.f32.xlu0 %v1511
  %v1513 = vpop.xlane.xlu0 %1512
  %v1514 = vsub.f32 %v1452, %v1492
  %v1515 = vsub.f32 %v1457, %v1495
  %v1516 = vsub.f32 %v1462, %v1498
  %v1517 = vsub.f32 %v1467, %v1501
  %v1518 = vsub.f32 %v1472, %v1504
  %v1519 = vsub.f32 %v1477, %v1507
  %v1520 = vsub.f32 %v1482, %v1510
  %v1521 = vsub.f32 %v1487, %v1513
  %v1522 = vmul.f32 %v1514, 1.442695
  %v1523 = vpow.pop %v1522
  %v1524 = vmul.f32 %v1515, 1.442695
  %v1525 = vpow.pop %v1524
  %v1526 = vmul.f32 %v1516, 1.442695
  %v1527 = vpow.pop %v1526
  %v1528 = vmul.f32 %v1517, 1.442695
  %v1529 = vpow.pop %v1528
  %v1530 = vmul.f32 %v1518, 1.442695
  %v1531 = vpow.pop %v1530
  %v1532 = vmul.f32 %v1519, 1.442695
  %v1533 = vpow.pop %v1532
  %v1534 = vmul.f32 %v1520, 1.442695
  %v1535 = vpow.pop %v1534
  %v1536 = vmul.f32 %v1521, 1.442695
  %v1537 = vpow.pop %v1536
  %1538 = vrot.lane.b32.xlu0 %v429, 48
  %v1539 = vpop.permute.xlu0 %1538
  %1540 = vrot.lane.b32.xlu0 %v434, 48
  %v1541 = vpop.permute.xlu0 %1540
  %1542 = vrot.lane.b32.xlu0 %v439, 48
  %v1543 = vpop.permute.xlu0 %1542
  %1544 = vrot.lane.b32.xlu0 %v444, 48
  %v1545 = vpop.permute.xlu0 %1544
  %1546 = vrot.lane.b32.xlu0 %v449, 48
  %v1547 = vpop.permute.xlu0 %1546
  %1548 = vrot.lane.b32.xlu0 %v454, 48
  %v1549 = vpop.permute.xlu0 %1548
  %1550 = vrot.lane.b32.xlu0 %v459, 48
  %v1551 = vpop.permute.xlu0 %1550
  %1552 = vrot.lane.b32.xlu0 %v464, 48
  %v1553 = vpop.permute.xlu0 %1552
  %v1563 = vsel %vm669, %v1523, 0
  %v1566 = vsel %vm669, %v1525, 0
  %v1569 = vsel %vm669, %v1527, 0
  %v1572 = vsel %vm669, %v1529, 0
  %v1575 = vsel %vm669, %v1531, 0
  %v1578 = vsel %vm669, %v1533, 0
  %v1581 = vsel %vm669, %v1535, 0
  %v1584 = vsel %vm669, %v1537, 0
  %1586 = vmatprep.subr.mxu0 0.0
  %1587 = vmatpush1.msra.mxu0 0.0
  %1588 = vmatprep.subr.mxu0 0.0
  %1589 = vmatpush1.msra.mxu0 0.0
  %1590 = vmatprep.subr.mxu0 0.0
  %1591 = vmatpush1.msra.mxu0 0.0
  %1592 = vmatprep.subr.mxu0 0.0
  %1593 = vmatpush1.msra.mxu0 0.0
  %1594 = vmatprep.subr.mxu0 0.0
  %1595 = vmatpush1.msra.mxu0 0.0
  %1596 = vmatprep.subr.mxu0 0.0
  %1597 = vmatpush1.msra.mxu0 0.0
  %1598 = vmatprep.subr.mxu0 0.0
  %1599 = vmatpush1.msra.mxu0 0.0
  %1600 = vmatprep.subr.mxu0 0.0
  %1601 = vmatpush1.msra.mxu0 0.0
  %1602 = vmatprep.subr.mxu0 0.0
  %1603 = vmatpush1.msra.mxu0 %v1553
  %1604 = vmatprep.subr.mxu0 0.0
  %1605 = vmatpush1.msra.mxu0 %v1551
  %1606 = vmatprep.subr.mxu0 0.0
  %1607 = vmatpush1.msra.mxu0 %v1549
  %1608 = vmatprep.subr.mxu0 0.0
  %1609 = vmatpush1.msra.mxu0 %v1547
  %1610 = vmatprep.subr.mxu0 0.0
  %1611 = vmatpush1.msra.mxu0 %v1545
  %1612 = vmatprep.subr.mxu0 0.0
  %1613 = vmatpush1.msra.mxu0 %v1543
  %1614 = vmatprep.subr.mxu0 0.0
  %1615 = vmatpush1.msra.mxu0 %v1541
  %1616 = vmatprep.subr.mxu0 0.0
  %1617 = vmatpush1.msra.mxu0 %v1539
  %1618 = vmatprep.subr.mxu0 0.0
  %1619 = vmatpush2.msra.mxu0 0.0
  %1620 = vmatprep.subr.mxu0 0.0
  %1621 = vmatpush2.msra.mxu0 0.0
  %1622 = vmatprep.subr.mxu0 0.0
  %1623 = vmatpush2.msra.mxu0 0.0
  %1624 = vmatprep.subr.mxu0 0.0
  %1625 = vmatpush2.msra.mxu0 0.0
  %1626 = vmatprep.subr.mxu0 0.0
  %1627 = vmatpush2.msra.mxu0 0.0
  %1628 = vmatprep.subr.mxu0 0.0
  %1629 = vmatpush2.msra.mxu0 0.0
  %1630 = vmatprep.subr.mxu0 0.0
  %1631 = vmatpush2.msra.mxu0 0.0
  %1632 = vmatprep.subr.mxu0 0.0
  %1633 = vmatpush2.msra.mxu0 0.0
  %1634 = vmatprep.subr.mxu0 0.0
  %1635 = vmatpush2.msra.mxu0 0.0
  %1636 = vmatprep.subr.mxu0 0.0
  %1637 = vmatpush2.msra.mxu0 0.0
  %1638 = vmatprep.subr.mxu0 0.0
  %1639 = vmatpush2.msra.mxu0 0.0
  %1640 = vmatprep.subr.mxu0 0.0
  %1641 = vmatpush2.msra.mxu0 0.0
  %1642 = vmatprep.subr.mxu0 0.0
  %1643 = vmatpush2.msra.mxu0 0.0
  %1644 = vmatprep.subr.mxu0 0.0
  %1645 = vmatpush2.msra.mxu0 0.0
  %1646 = vmatprep.subr.mxu0 0.0
  %1647 = vmatpush2.msra.mxu0 0.0
  %1648 = vmatprep.subr.mxu0 0.0
  %1649 = vmatpush2.msra.mxu0 0.0
  %1650 = vmatprep.mubr.f32.mxu0 0.0
  %1651 = vmatmul.mubr.f32.gmra.mxu0 %v1563
  %v1652 = vpop.f32.mrf.mxu0
  %v1653 = vadd.f32 0.0, %v1652
  %v1654 = vpop.f32.mrf.mxu0
  %1655 = vmatprep.mubr.f32.mxu0 0.0
  %1656 = vmatmul.mubr.f32.gmra.mxu0 %v1566
  %v1657 = vpop.f32.mrf.mxu0
  %v1658 = vadd.f32 0.0, %v1657
  %v1659 = vpop.f32.mrf.mxu0
  %1660 = vmatprep.mubr.f32.mxu0 0.0
  %1661 = vmatmul.mubr.f32.gmra.mxu0 %v1569
  %v1662 = vpop.f32.mrf.mxu0
  %v1663 = vadd.f32 0.0, %v1662
  %v1664 = vpop.f32.mrf.mxu0
  %1665 = vmatprep.mubr.f32.mxu0 0.0
  %1666 = vmatmul.mubr.f32.gmra.mxu0 %v1572
  %v1667 = vpop.f32.mrf.mxu0
  %v1668 = vadd.f32 0.0, %v1667
  %v1669 = vpop.f32.mrf.mxu0
  %1670 = vmatprep.mubr.f32.mxu0 0.0
  %1671 = vmatmul.mubr.f32.gmra.mxu0 %v1575
  %v1672 = vpop.f32.mrf.mxu0
  %v1673 = vadd.f32 0.0, %v1672
  %v1674 = vpop.f32.mrf.mxu0
  %1675 = vmatprep.mubr.f32.mxu0 0.0
  %1676 = vmatmul.mubr.f32.gmra.mxu0 %v1578
  %v1677 = vpop.f32.mrf.mxu0
  %v1678 = vadd.f32 0.0, %v1677
  %v1679 = vpop.f32.mrf.mxu0
  %1680 = vmatprep.mubr.f32.mxu0 0.0
  %1681 = vmatmul.mubr.f32.gmra.mxu0 %v1581
  %v1682 = vpop.f32.mrf.mxu0
  %v1683 = vadd.f32 0.0, %v1682
  %v1684 = vpop.f32.mrf.mxu0
  %1685 = vmatprep.mubr.f32.mxu0 0.0
  %1686 = vmatmul.mubr.f32.gmra.mxu0 %v1584
  %v1687 = vpop.f32.mrf.mxu0
  %v1688 = vadd.f32 0.0, %v1687
  %v1689 = vpop.f32.mrf.mxu0
  %1690 = vdwg.mxu0
  %v1691 = vsel %vm669, %v1523, 0.0
  %1692 = vadd.xlane.f32.xlu0 %v1691
  %v1693 = vpop.xlane.xlu0 %1692
  %v1694 = vsel %vm669, %v1525, 0.0
  %1695 = vadd.xlane.f32.xlu0 %v1694
  %v1696 = vpop.xlane.xlu0 %1695
  %v1697 = vsel %vm669, %v1527, 0.0
  %1698 = vadd.xlane.f32.xlu0 %v1697
  %v1699 = vpop.xlane.xlu0 %1698
  %v1700 = vsel %vm669, %v1529, 0.0
  %1701 = vadd.xlane.f32.xlu0 %v1700
  %v1702 = vpop.xlane.xlu0 %1701
  %v1703 = vsel %vm669, %v1531, 0.0
  %1704 = vadd.xlane.f32.xlu0 %v1703
  %v1705 = vpop.xlane.xlu0 %1704
  %v1706 = vsel %vm669, %v1533, 0.0
  %1707 = vadd.xlane.f32.xlu0 %v1706
  %v1708 = vpop.xlane.xlu0 %1707
  %v1709 = vsel %vm669, %v1535, 0.0
  %1710 = vadd.xlane.f32.xlu0 %v1709
  %v1711 = vpop.xlane.xlu0 %1710
  %v1712 = vsel %vm669, %v1537, 0.0
  %1713 = vadd.xlane.f32.xlu0 %v1712
  %v1714 = vpop.xlane.xlu0 %1713
  %v1715 = vrcp.pop %v1693
  %v1716 = vmul.f32 %v1653, %v1715
  %v1717 = vrcp.pop %v1696
  %v1718 = vmul.f32 %v1658, %v1717
  %v1719 = vrcp.pop %v1699
  %v1720 = vmul.f32 %v1663, %v1719
  %v1721 = vrcp.pop %v1702
  %v1722 = vmul.f32 %v1668, %v1721
  %v1723 = vrcp.pop %v1705
  %v1724 = vmul.f32 %v1673, %v1723
  %v1725 = vrcp.pop %v1708
  %v1726 = vmul.f32 %v1678, %v1725
  %v1727 = vrcp.pop %v1711
  %v1728 = vmul.f32 %v1683, %v1727
  %v1729 = vrcp.pop %v1714
  %v1730 = vmul.f32 %v1688, %v1729
  %1731 = vrot.lane.b32.xlu0 %v429, 104
  %v1732 = vpop.permute.xlu0 %1731
  %1733 = vrot.lane.b32.xlu0 %v434, 104
  %v1734 = vpop.permute.xlu0 %1733
  %1735 = vrot.lane.b32.xlu0 %v439, 104
  %v1736 = vpop.permute.xlu0 %1735
  %1737 = vrot.lane.b32.xlu0 %v444, 104
  %v1738 = vpop.permute.xlu0 %1737
  %1739 = vrot.lane.b32.xlu0 %v449, 104
  %v1740 = vpop.permute.xlu0 %1739
  %1741 = vrot.lane.b32.xlu0 %v454, 104
  %v1742 = vpop.permute.xlu0 %1741
  %1743 = vrot.lane.b32.xlu0 %v459, 104
  %v1744 = vpop.permute.xlu0 %1743
  %1745 = vrot.lane.b32.xlu0 %v464, 104
  %v1746 = vpop.permute.xlu0 %1745
  %1747 = vrot.lane.b32.xlu0 %v429, 72
  %v1748 = vpop.permute.xlu0 %1747
  %1749 = vrot.lane.b32.xlu0 %v434, 72
  %v1750 = vpop.permute.xlu0 %1749
  %1751 = vrot.lane.b32.xlu0 %v439, 72
  %v1752 = vpop.permute.xlu0 %1751
  %1753 = vrot.lane.b32.xlu0 %v444, 72
  %v1754 = vpop.permute.xlu0 %1753
  %1755 = vrot.lane.b32.xlu0 %v449, 72
  %v1756 = vpop.permute.xlu0 %1755
  %1757 = vrot.lane.b32.xlu0 %v454, 72
  %v1758 = vpop.permute.xlu0 %1757
  %1759 = vrot.lane.b32.xlu0 %v459, 72
  %v1760 = vpop.permute.xlu0 %1759
  %1761 = vrot.lane.b32.xlu0 %v464, 72
  %v1762 = vpop.permute.xlu0 %1761
  %v1763 = vsel %vm531, %v1732, 0
  %v1765 = vsel %vm531, %v1734, 0
  %v1767 = vsel %vm531, %v1736, 0
  %v1769 = vsel %vm531, %v1738, 0
  %v1771 = vsel %vm531, %v1740, 0
  %v1773 = vsel %vm531, %v1742, 0
  %v1775 = vsel %vm531, %v1744, 0
  %v1777 = vsel %vm531, %v1746, 0
  %v1779 = vsel %vm531, %v1748, 0
  %v1781 = vsel %vm531, %v1750, 0
  %v1783 = vsel %vm531, %v1752, 0
  %v1785 = vsel %vm531, %v1754, 0
  %v1787 = vsel %vm531, %v1756, 0
  %v1789 = vsel %vm531, %v1758, 0
  %v1791 = vsel %vm531, %v1760, 0
  %v1793 = vsel %vm531, %v1762, 0
  %1795 = vmatprep.subr.mxu0 0.0
  %1796 = vmatpush1.xpose.msra.mxu0 0.0
  %1797 = vmatprep.subr.mxu0 0.0
  %1798 = vmatpush1.xpose.msra.mxu0 0.0
  %1799 = vmatprep.subr.mxu0 0.0
  %1800 = vmatpush1.xpose.msra.mxu0 0.0
  %1801 = vmatprep.subr.mxu0 0.0
  %1802 = vmatpush1.xpose.msra.mxu0 0.0
  %1803 = vmatprep.subr.mxu0 0.0
  %1804 = vmatpush1.xpose.msra.mxu0 0.0
  %1805 = vmatprep.subr.mxu0 0.0
  %1806 = vmatpush1.xpose.msra.mxu0 0.0
  %1807 = vmatprep.subr.mxu0 0.0
  %1808 = vmatpush1.xpose.msra.mxu0 0.0
  %1809 = vmatprep.subr.mxu0 0.0
  %1810 = vmatpush1.xpose.msra.mxu0 0.0
  %1811 = vmatprep.subr.mxu0 0.0
  %1812 = vmatpush1.xpose.msra.mxu0 %v1793
  %1813 = vmatprep.subr.mxu0 0.0
  %1814 = vmatpush1.xpose.msra.mxu0 %v1791
  %1815 = vmatprep.subr.mxu0 0.0
  %1816 = vmatpush1.xpose.msra.mxu0 %v1789
  %1817 = vmatprep.subr.mxu0 0.0
  %1818 = vmatpush1.xpose.msra.mxu0 %v1787
  %1819 = vmatprep.subr.mxu0 0.0
  %1820 = vmatpush1.xpose.msra.mxu0 %v1785
  %1821 = vmatprep.subr.mxu0 0.0
  %1822 = vmatpush1.xpose.msra.mxu0 %v1783
  %1823 = vmatprep.subr.mxu0 0.0
  %1824 = vmatpush1.xpose.msra.mxu0 %v1781
  %1825 = vmatprep.subr.mxu0 0.0
  %1826 = vmatpush1.xpose.msra.mxu0 %v1779
  %1827 = vmatprep.subr.mxu0 0.0
  %1828 = vmatpush2.xpose.msra.mxu0 0.0
  %1829 = vmatprep.subr.mxu0 0.0
  %1830 = vmatpush2.xpose.msra.mxu0 0.0
  %1831 = vmatprep.subr.mxu0 0.0
  %1832 = vmatpush2.xpose.msra.mxu0 0.0
  %1833 = vmatprep.subr.mxu0 0.0
  %1834 = vmatpush2.xpose.msra.mxu0 0.0
  %1835 = vmatprep.subr.mxu0 0.0
  %1836 = vmatpush2.xpose.msra.mxu0 0.0
  %1837 = vmatprep.subr.mxu0 0.0
  %1838 = vmatpush2.xpose.msra.mxu0 0.0
  %1839 = vmatprep.subr.mxu0 0.0
  %1840 = vmatpush2.xpose.msra.mxu0 0.0
  %1841 = vmatprep.subr.mxu0 0.0
  %1842 = vmatpush2.xpose.msra.mxu0 0.0
  %1843 = vmatprep.subr.mxu0 0.0
  %1844 = vmatpush2.xpose.msra.mxu0 0.0
  %1845 = vmatprep.subr.mxu0 0.0
  %1846 = vmatpush2.xpose.msra.mxu0 0.0
  %1847 = vmatprep.subr.mxu0 0.0
  %1848 = vmatpush2.xpose.msra.mxu0 0.0
  %1849 = vmatprep.subr.mxu0 0.0
  %1850 = vmatpush2.xpose.msra.mxu0 0.0
  %1851 = vmatprep.subr.mxu0 0.0
  %1852 = vmatpush2.xpose.msra.mxu0 0.0
  %1853 = vmatprep.subr.mxu0 0.0
  %1854 = vmatpush2.xpose.msra.mxu0 0.0
  %1855 = vmatprep.subr.mxu0 0.0
  %1856 = vmatpush2.xpose.msra.mxu0 0.0
  %1857 = vmatprep.subr.mxu0 0.0
  %1858 = vmatpush2.xpose.msra.mxu0 0.0
  %1859 = vmatprep.mubr.f32.mxu0 0.0
  %1860 = vmatmul.mubr.f32.gmra.mxu0 %v1763
  %v1861 = vpop.f32.mrf.mxu0
  %v1862 = vadd.f32 0.0, %v1861
  %v1863 = vpop.f32.mrf.mxu0
  %1864 = vmatprep.mubr.f32.mxu0 0.0
  %1865 = vmatmul.mubr.f32.gmra.mxu0 %v1765
  %v1866 = vpop.f32.mrf.mxu0
  %v1867 = vadd.f32 0.0, %v1866
  %v1868 = vpop.f32.mrf.mxu0
  %1869 = vmatprep.mubr.f32.mxu0 0.0
  %1870 = vmatmul.mubr.f32.gmra.mxu0 %v1767
  %v1871 = vpop.f32.mrf.mxu0
  %v1872 = vadd.f32 0.0, %v1871
  %v1873 = vpop.f32.mrf.mxu0
  %1874 = vmatprep.mubr.f32.mxu0 0.0
  %1875 = vmatmul.mubr.f32.gmra.mxu0 %v1769
  %v1876 = vpop.f32.mrf.mxu0
  %v1877 = vadd.f32 0.0, %v1876
  %v1878 = vpop.f32.mrf.mxu0
  %1879 = vmatprep.mubr.f32.mxu0 0.0
  %1880 = vmatmul.mubr.f32.gmra.mxu0 %v1771
  %v1881 = vpop.f32.mrf.mxu0
  %v1882 = vadd.f32 0.0, %v1881
  %v1883 = vpop.f32.mrf.mxu0
  %1884 = vmatprep.mubr.f32.mxu0 0.0
  %1885 = vmatmul.mubr.f32.gmra.mxu0 %v1773
  %v1886 = vpop.f32.mrf.mxu0
  %v1887 = vadd.f32 0.0, %v1886
  %v1888 = vpop.f32.mrf.mxu0
  %1889 = vmatprep.mubr.f32.mxu0 0.0
  %1890 = vmatmul.mubr.f32.gmra.mxu0 %v1775
  %v1891 = vpop.f32.mrf.mxu0
  %v1892 = vadd.f32 0.0, %v1891
  %v1893 = vpop.f32.mrf.mxu0
  %1894 = vmatprep.mubr.f32.mxu0 0.0
  %1895 = vmatmul.mubr.f32.gmra.mxu0 %v1777
  %v1896 = vpop.f32.mrf.mxu0
  %v1897 = vadd.f32 0.0, %v1896
  %v1898 = vpop.f32.mrf.mxu0
  %1899 = vdwg.mxu0
  %v1900 = vsel %vm669, %v1862, -inf
  %1901 = vmax.xlane.f32.xlu0 %v1900
  %v1902 = vpop.xlane.xlu0 %1901
  %v1903 = vsel %vm669, %v1867, -inf
  %1904 = vmax.xlane.f32.xlu0 %v1903
  %v1905 = vpop.xlane.xlu0 %1904
  %v1906 = vsel %vm669, %v1872, -inf
  %1907 = vmax.xlane.f32.xlu0 %v1906
  %v1908 = vpop.xlane.xlu0 %1907
  %v1909 = vsel %vm669, %v1877, -inf
  %1910 = vmax.xlane.f32.xlu0 %v1909
  %v1911 = vpop.xlane.xlu0 %1910
  %v1912 = vsel %vm669, %v1882, -inf
  %1913 = vmax.xlane.f32.xlu0 %v1912
  %v1914 = vpop.xlane.xlu0 %1913
  %v1915 = vsel %vm669, %v1887, -inf
  %1916 = vmax.xlane.f32.xlu0 %v1915
  %v1917 = vpop.xlane.xlu0 %1916
  %v1918 = vsel %vm669, %v1892, -inf
  %1919 = vmax.xlane.f32.xlu0 %v1918
  %v1920 = vpop.xlane.xlu0 %1919
  %v1921 = vsel %vm669, %v1897, -inf
  %1922 = vmax.xlane.f32.xlu0 %v1921
  %v1923 = vpop.xlane.xlu0 %1922
  %v1924 = vsub.f32 %v1862, %v1902
  %v1925 = vsub.f32 %v1867, %v1905
  %v1926 = vsub.f32 %v1872, %v1908
  %v1927 = vsub.f32 %v1877, %v1911
  %v1928 = vsub.f32 %v1882, %v1914
  %v1929 = vsub.f32 %v1887, %v1917
  %v1930 = vsub.f32 %v1892, %v1920
  %v1931 = vsub.f32 %v1897, %v1923
  %v1932 = vmul.f32 %v1924, 1.442695
  %v1933 = vpow.pop %v1932
  %v1934 = vmul.f32 %v1925, 1.442695
  %v1935 = vpow.pop %v1934
  %v1936 = vmul.f32 %v1926, 1.442695
  %v1937 = vpow.pop %v1936
  %v1938 = vmul.f32 %v1927, 1.442695
  %v1939 = vpow.pop %v1938
  %v1940 = vmul.f32 %v1928, 1.442695
  %v1941 = vpow.pop %v1940
  %v1942 = vmul.f32 %v1929, 1.442695
  %v1943 = vpow.pop %v1942
  %v1944 = vmul.f32 %v1930, 1.442695
  %v1945 = vpow.pop %v1944
  %v1946 = vmul.f32 %v1931, 1.442695
  %v1947 = vpow.pop %v1946
  %1948 = vrot.lane.b32.xlu0 %v429, 40
  %v1949 = vpop.permute.xlu0 %1948
  %1950 = vrot.lane.b32.xlu0 %v434, 40
  %v1951 = vpop.permute.xlu0 %1950
  %1952 = vrot.lane.b32.xlu0 %v439, 40
  %v1953 = vpop.permute.xlu0 %1952
  %1954 = vrot.lane.b32.xlu0 %v444, 40
  %v1955 = vpop.permute.xlu0 %1954
  %1956 = vrot.lane.b32.xlu0 %v449, 40
  %v1957 = vpop.permute.xlu0 %1956
  %1958 = vrot.lane.b32.xlu0 %v454, 40
  %v1959 = vpop.permute.xlu0 %1958
  %1960 = vrot.lane.b32.xlu0 %v459, 40
  %v1961 = vpop.permute.xlu0 %1960
  %1962 = vrot.lane.b32.xlu0 %v464, 40
  %v1963 = vpop.permute.xlu0 %1962
  %v1973 = vsel %vm669, %v1933, 0
  %v1976 = vsel %vm669, %v1935, 0
  %v1979 = vsel %vm669, %v1937, 0
  %v1982 = vsel %vm669, %v1939, 0
  %v1985 = vsel %vm669, %v1941, 0
  %v1988 = vsel %vm669, %v1943, 0
  %v1991 = vsel %vm669, %v1945, 0
  %v1994 = vsel %vm669, %v1947, 0
  %1996 = vmatprep.subr.mxu0 0.0
  %1997 = vmatpush1.msra.mxu0 0.0
  %1998 = vmatprep.subr.mxu0 0.0
  %1999 = vmatpush1.msra.mxu0 0.0
  %2000 = vmatprep.subr.mxu0 0.0
  %2001 = vmatpush1.msra.mxu0 0.0
  %2002 = vmatprep.subr.mxu0 0.0
  %2003 = vmatpush1.msra.mxu0 0.0
  %2004 = vmatprep.subr.mxu0 0.0
  %2005 = vmatpush1.msra.mxu0 0.0
  %2006 = vmatprep.subr.mxu0 0.0
  %2007 = vmatpush1.msra.mxu0 0.0
  %2008 = vmatprep.subr.mxu0 0.0
  %2009 = vmatpush1.msra.mxu0 0.0
  %2010 = vmatprep.subr.mxu0 0.0
  %2011 = vmatpush1.msra.mxu0 0.0
  %2012 = vmatprep.subr.mxu0 0.0
  %2013 = vmatpush1.msra.mxu0 %v1963
  %2014 = vmatprep.subr.mxu0 0.0
  %2015 = vmatpush1.msra.mxu0 %v1961
  %2016 = vmatprep.subr.mxu0 0.0
  %2017 = vmatpush1.msra.mxu0 %v1959
  %2018 = vmatprep.subr.mxu0 0.0
  %2019 = vmatpush1.msra.mxu0 %v1957
  %2020 = vmatprep.subr.mxu0 0.0
  %2021 = vmatpush1.msra.mxu0 %v1955
  %2022 = vmatprep.subr.mxu0 0.0
  %2023 = vmatpush1.msra.mxu0 %v1953
  %2024 = vmatprep.subr.mxu0 0.0
  %2025 = vmatpush1.msra.mxu0 %v1951
  %2026 = vmatprep.subr.mxu0 0.0
  %2027 = vmatpush1.msra.mxu0 %v1949
  %2028 = vmatprep.subr.mxu0 0.0
  %2029 = vmatpush2.msra.mxu0 0.0
  %2030 = vmatprep.subr.mxu0 0.0
  %2031 = vmatpush2.msra.mxu0 0.0
  %2032 = vmatprep.subr.mxu0 0.0
  %2033 = vmatpush2.msra.mxu0 0.0
  %2034 = vmatprep.subr.mxu0 0.0
  %2035 = vmatpush2.msra.mxu0 0.0
  %2036 = vmatprep.subr.mxu0 0.0
  %2037 = vmatpush2.msra.mxu0 0.0
  %2038 = vmatprep.subr.mxu0 0.0
  %2039 = vmatpush2.msra.mxu0 0.0
  %2040 = vmatprep.subr.mxu0 0.0
  %2041 = vmatpush2.msra.mxu0 0.0
  %2042 = vmatprep.subr.mxu0 0.0
  %2043 = vmatpush2.msra.mxu0 0.0
  %2044 = vmatprep.subr.mxu0 0.0
  %2045 = vmatpush2.msra.mxu0 0.0
  %2046 = vmatprep.subr.mxu0 0.0
  %2047 = vmatpush2.msra.mxu0 0.0
  %2048 = vmatprep.subr.mxu0 0.0
  %2049 = vmatpush2.msra.mxu0 0.0
  %2050 = vmatprep.subr.mxu0 0.0
  %2051 = vmatpush2.msra.mxu0 0.0
  %2052 = vmatprep.subr.mxu0 0.0
  %2053 = vmatpush2.msra.mxu0 0.0
  %2054 = vmatprep.subr.mxu0 0.0
  %2055 = vmatpush2.msra.mxu0 0.0
  %2056 = vmatprep.subr.mxu0 0.0
  %2057 = vmatpush2.msra.mxu0 0.0
  %2058 = vmatprep.subr.mxu0 0.0
  %2059 = vmatpush2.msra.mxu0 0.0
  %2060 = vmatprep.mubr.f32.mxu0 0.0
  %2061 = vmatmul.mubr.f32.gmra.mxu0 %v1973
  %v2062 = vpop.f32.mrf.mxu0
  %v2063 = vadd.f32 0.0, %v2062
  %v2064 = vpop.f32.mrf.mxu0
  %2065 = vmatprep.mubr.f32.mxu0 0.0
  %2066 = vmatmul.mubr.f32.gmra.mxu0 %v1976
  %v2067 = vpop.f32.mrf.mxu0
  %v2068 = vadd.f32 0.0, %v2067
  %v2069 = vpop.f32.mrf.mxu0
  %2070 = vmatprep.mubr.f32.mxu0 0.0
  %2071 = vmatmul.mubr.f32.gmra.mxu0 %v1979
  %v2072 = vpop.f32.mrf.mxu0
  %v2073 = vadd.f32 0.0, %v2072
  %v2074 = vpop.f32.mrf.mxu0
  %2075 = vmatprep.mubr.f32.mxu0 0.0
  %2076 = vmatmul.mubr.f32.gmra.mxu0 %v1982
  %v2077 = vpop.f32.mrf.mxu0
  %v2078 = vadd.f32 0.0, %v2077
  %v2079 = vpop.f32.mrf.mxu0
  %2080 = vmatprep.mubr.f32.mxu0 0.0
  %2081 = vmatmul.mubr.f32.gmra.mxu0 %v1985
  %v2082 = vpop.f32.mrf.mxu0
  %v2083 = vadd.f32 0.0, %v2082
  %v2084 = vpop.f32.mrf.mxu0
  %2085 = vmatprep.mubr.f32.mxu0 0.0
  %2086 = vmatmul.mubr.f32.gmra.mxu0 %v1988
  %v2087 = vpop.f32.mrf.mxu0
  %v2088 = vadd.f32 0.0, %v2087
  %v2089 = vpop.f32.mrf.mxu0
  %2090 = vmatprep.mubr.f32.mxu0 0.0
  %2091 = vmatmul.mubr.f32.gmra.mxu0 %v1991
  %v2092 = vpop.f32.mrf.mxu0
  %v2093 = vadd.f32 0.0, %v2092
  %v2094 = vpop.f32.mrf.mxu0
  %2095 = vmatprep.mubr.f32.mxu0 0.0
  %2096 = vmatmul.mubr.f32.gmra.mxu0 %v1994
  %v2097 = vpop.f32.mrf.mxu0
  %v2098 = vadd.f32 0.0, %v2097
  %v2099 = vpop.f32.mrf.mxu0
  %2100 = vdwg.mxu0
  %v2101 = vsel %vm669, %v1933, 0.0
  %2102 = vadd.xlane.f32.xlu0 %v2101
  %v2103 = vpop.xlane.xlu0 %2102
  %v2104 = vsel %vm669, %v1935, 0.0
  %2105 = vadd.xlane.f32.xlu0 %v2104
  %v2106 = vpop.xlane.xlu0 %2105
  %v2107 = vsel %vm669, %v1937, 0.0
  %2108 = vadd.xlane.f32.xlu0 %v2107
  %v2109 = vpop.xlane.xlu0 %2108
  %v2110 = vsel %vm669, %v1939, 0.0
  %2111 = vadd.xlane.f32.xlu0 %v2110
  %v2112 = vpop.xlane.xlu0 %2111
  %v2113 = vsel %vm669, %v1941, 0.0
  %2114 = vadd.xlane.f32.xlu0 %v2113
  %v2115 = vpop.xlane.xlu0 %2114
  %v2116 = vsel %vm669, %v1943, 0.0
  %2117 = vadd.xlane.f32.xlu0 %v2116
  %v2118 = vpop.xlane.xlu0 %2117
  %v2119 = vsel %vm669, %v1945, 0.0
  %2120 = vadd.xlane.f32.xlu0 %v2119
  %v2121 = vpop.xlane.xlu0 %2120
  %v2122 = vsel %vm669, %v1947, 0.0
  %2123 = vadd.xlane.f32.xlu0 %v2122
  %v2124 = vpop.xlane.xlu0 %2123
  %v2125 = vrcp.pop %v2103
  %v2126 = vmul.f32 %v2063, %v2125
  %v2127 = vrcp.pop %v2106
  %v2128 = vmul.f32 %v2068, %v2127
  %v2129 = vrcp.pop %v2109
  %v2130 = vmul.f32 %v2073, %v2129
  %v2131 = vrcp.pop %v2112
  %v2132 = vmul.f32 %v2078, %v2131
  %v2133 = vrcp.pop %v2115
  %v2134 = vmul.f32 %v2083, %v2133
  %v2135 = vrcp.pop %v2118
  %v2136 = vmul.f32 %v2088, %v2135
  %v2137 = vrcp.pop %v2121
  %v2138 = vmul.f32 %v2093, %v2137
  %v2139 = vrcp.pop %v2124
  %v2140 = vmul.f32 %v2098, %v2139
  %2149 = vrot.lane.b32.xlu0 %v1306, 8
  %v2150 = vpop.permute.xlu0 %2149
  %2151 = vrot.lane.b32.xlu0 %v1308, 8
  %v2152 = vpop.permute.xlu0 %2151
  %2153 = vrot.lane.b32.xlu0 %v1310, 8
  %v2154 = vpop.permute.xlu0 %2153
  %2155 = vrot.lane.b32.xlu0 %v1312, 8
  %v2156 = vpop.permute.xlu0 %2155
  %2157 = vrot.lane.b32.xlu0 %v1314, 8
  %v2158 = vpop.permute.xlu0 %2157
  %2159 = vrot.lane.b32.xlu0 %v1316, 8
  %v2160 = vpop.permute.xlu0 %2159
  %2161 = vrot.lane.b32.xlu0 %v1318, 8
  %v2162 = vpop.permute.xlu0 %2161
  %2163 = vrot.lane.b32.xlu0 %v1320, 8
  %v2164 = vpop.permute.xlu0 %2163
  %2181 = vrot.lane.b32.xlu0 %v1716, 16
  %v2182 = vpop.permute.xlu0 %2181
  %2183 = vrot.lane.b32.xlu0 %v1718, 16
  %v2184 = vpop.permute.xlu0 %2183
  %2185 = vrot.lane.b32.xlu0 %v1720, 16
  %v2186 = vpop.permute.xlu0 %2185
  %2187 = vrot.lane.b32.xlu0 %v1722, 16
  %v2188 = vpop.permute.xlu0 %2187
  %2189 = vrot.lane.b32.xlu0 %v1724, 16
  %v2190 = vpop.permute.xlu0 %2189
  %2191 = vrot.lane.b32.xlu0 %v1726, 16
  %v2192 = vpop.permute.xlu0 %2191
  %2193 = vrot.lane.b32.xlu0 %v1728, 16
  %v2194 = vpop.permute.xlu0 %2193
  %2195 = vrot.lane.b32.xlu0 %v1730, 16
  %v2196 = vpop.permute.xlu0 %2195
  %2213 = vrot.lane.b32.xlu0 %v2126, 24
  %v2214 = vpop.permute.xlu0 %2213
  %2215 = vrot.lane.b32.xlu0 %v2128, 24
  %v2216 = vpop.permute.xlu0 %2215
  %2217 = vrot.lane.b32.xlu0 %v2130, 24
  %v2218 = vpop.permute.xlu0 %2217
  %2219 = vrot.lane.b32.xlu0 %v2132, 24
  %v2220 = vpop.permute.xlu0 %2219
  %2221 = vrot.lane.b32.xlu0 %v2134, 24
  %v2222 = vpop.permute.xlu0 %2221
  %2223 = vrot.lane.b32.xlu0 %v2136, 24
  %v2224 = vpop.permute.xlu0 %2223
  %2225 = vrot.lane.b32.xlu0 %v2138, 24
  %v2226 = vpop.permute.xlu0 %2225
  %2227 = vrot.lane.b32.xlu0 %v2140, 24
  %v2228 = vpop.permute.xlu0 %2227
  %v2237 = vsel %vm531, %v896, %v2150
  %v2238 = vsel %vm531, %v898, %v2152
  %v2239 = vsel %vm531, %v900, %v2154
  %v2240 = vsel %vm531, %v902, %v2156
  %v2241 = vsel %vm531, %v904, %v2158
  %v2242 = vsel %vm531, %v906, %v2160
  %v2243 = vsel %vm531, %v908, %v2162
  %v2244 = vsel %vm531, %v910, %v2164
  %vm2245 = vcmask 130048
  %v2246 = vsel %vm2245, %v2237, %v2182
  %v2247 = vsel %vm2245, %v2238, %v2184
  %v2248 = vsel %vm2245, %v2239, %v2186
  %v2249 = vsel %vm2245, %v2240, %v2188
  %v2250 = vsel %vm2245, %v2241, %v2190
  %v2251 = vsel %vm2245, %v2242, %v2192
  %v2252 = vsel %vm2245, %v2243, %v2194
  %v2253 = vsel %vm2245, %v2244, %v2196
  %vm2254 = vcmask 195584
  %v2255 = vsel %vm2254, %v2246, %v2214
  %v2256 = vsel %vm2254, %v2247, %v2216
  %v2257 = vsel %vm2254, %v2248, %v2218
  %v2258 = vsel %vm2254, %v2249, %v2220
  %v2259 = vsel %vm2254, %v2250, %v2222
  %v2260 = vsel %vm2254, %v2251, %v2224
  %v2261 = vsel %vm2254, %v2252, %v2226
  %v2262 = vsel %vm2254, %v2253, %v2228
  %2271 = vrot.lane.b32.xlu0 %v469, 96
  %v2272 = vpop.permute.xlu0 %2271
  %2273 = vrot.lane.b32.xlu0 %v474, 96
  %v2274 = vpop.permute.xlu0 %2273
  %2275 = vrot.lane.b32.xlu0 %v479, 96
  %v2276 = vpop.permute.xlu0 %2275
  %2277 = vrot.lane.b32.xlu0 %v484, 96
  %v2278 = vpop.permute.xlu0 %2277
  %2279 = vrot.lane.b32.xlu0 %v489, 96
  %v2280 = vpop.permute.xlu0 %2279
  %2281 = vrot.lane.b32.xlu0 %v494, 96
  %v2282 = vpop.permute.xlu0 %2281
  %2283 = vrot.lane.b32.xlu0 %v499, 96
  %v2284 = vpop.permute.xlu0 %2283
  %2285 = vrot.lane.b32.xlu0 %v504, 96
  %v2286 = vpop.permute.xlu0 %2285
  %v2287 = vsel %vm531, %v469, 0
  %v2289 = vsel %vm531, %v474, 0
  %v2291 = vsel %vm531, %v479, 0
  %v2293 = vsel %vm531, %v484, 0
  %v2295 = vsel %vm531, %v489, 0
  %v2297 = vsel %vm531, %v494, 0
  %v2299 = vsel %vm531, %v499, 0
  %v2301 = vsel %vm531, %v504, 0
  %v2303 = vsel %vm531, %v2272, 0
  %v2305 = vsel %vm531, %v2274, 0
  %v2307 = vsel %vm531, %v2276, 0
  %v2309 = vsel %vm531, %v2278, 0
  %v2311 = vsel %vm531, %v2280, 0
  %v2313 = vsel %vm531, %v2282, 0
  %v2315 = vsel %vm531, %v2284, 0
  %v2317 = vsel %vm531, %v2286, 0
  %2319 = vmatprep.subr.mxu0 0.0
  %2320 = vmatpush1.xpose.msra.mxu0 0.0
  %2321 = vmatprep.subr.mxu0 0.0
  %2322 = vmatpush1.xpose.msra.mxu0 0.0
  %2323 = vmatprep.subr.mxu0 0.0
  %2324 = vmatpush1.xpose.msra.mxu0 0.0
  %2325 = vmatprep.subr.mxu0 0.0
  %2326 = vmatpush1.xpose.msra.mxu0 0.0
  %2327 = vmatprep.subr.mxu0 0.0
  %2328 = vmatpush1.xpose.msra.mxu0 0.0
  %2329 = vmatprep.subr.mxu0 0.0
  %2330 = vmatpush1.xpose.msra.mxu0 0.0
  %2331 = vmatprep.subr.mxu0 0.0
  %2332 = vmatpush1.xpose.msra.mxu0 0.0
  %2333 = vmatprep.subr.mxu0 0.0
  %2334 = vmatpush1.xpose.msra.mxu0 0.0
  %2335 = vmatprep.subr.mxu0 0.0
  %2336 = vmatpush1.xpose.msra.mxu0 %v2317
  %2337 = vmatprep.subr.mxu0 0.0
  %2338 = vmatpush1.xpose.msra.mxu0 %v2315
  %2339 = vmatprep.subr.mxu0 0.0
  %2340 = vmatpush1.xpose.msra.mxu0 %v2313
  %2341 = vmatprep.subr.mxu0 0.0
  %2342 = vmatpush1.xpose.msra.mxu0 %v2311
  %2343 = vmatprep.subr.mxu0 0.0
  %2344 = vmatpush1.xpose.msra.mxu0 %v2309
  %2345 = vmatprep.subr.mxu0 0.0
  %2346 = vmatpush1.xpose.msra.mxu0 %v2307
  %2347 = vmatprep.subr.mxu0 0.0
  %2348 = vmatpush1.xpose.msra.mxu0 %v2305
  %2349 = vmatprep.subr.mxu0 0.0
  %2350 = vmatpush1.xpose.msra.mxu0 %v2303
  %2351 = vmatprep.subr.mxu0 0.0
  %2352 = vmatpush2.xpose.msra.mxu0 0.0
  %2353 = vmatprep.subr.mxu0 0.0
  %2354 = vmatpush2.xpose.msra.mxu0 0.0
  %2355 = vmatprep.subr.mxu0 0.0
  %2356 = vmatpush2.xpose.msra.mxu0 0.0
  %2357 = vmatprep.subr.mxu0 0.0
  %2358 = vmatpush2.xpose.msra.mxu0 0.0
  %2359 = vmatprep.subr.mxu0 0.0
  %2360 = vmatpush2.xpose.msra.mxu0 0.0
  %2361 = vmatprep.subr.mxu0 0.0
  %2362 = vmatpush2.xpose.msra.mxu0 0.0
  %2363 = vmatprep.subr.mxu0 0.0
  %2364 = vmatpush2.xpose.msra.mxu0 0.0
  %2365 = vmatprep.subr.mxu0 0.0
  %2366 = vmatpush2.xpose.msra.mxu0 0.0
  %2367 = vmatprep.subr.mxu0 0.0
  %2368 = vmatpush2.xpose.msra.mxu0 0.0
  %2369 = vmatprep.subr.mxu0 0.0
  %2370 = vmatpush2.xpose.msra.mxu0 0.0
  %2371 = vmatprep.subr.mxu0 0.0
  %2372 = vmatpush2.xpose.msra.mxu0 0.0
  %2373 = vmatprep.subr.mxu0 0.0
  %2374 = vmatpush2.xpose.msra.mxu0 0.0
  %2375 = vmatprep.subr.mxu0 0.0
  %2376 = vmatpush2.xpose.msra.mxu0 0.0
  %2377 = vmatprep.subr.mxu0 0.0
  %2378 = vmatpush2.xpose.msra.mxu0 0.0
  %2379 = vmatprep.subr.mxu0 0.0
  %2380 = vmatpush2.xpose.msra.mxu0 0.0
  %2381 = vmatprep.subr.mxu0 0.0
  %2382 = vmatpush2.xpose.msra.mxu0 0.0
  %2383 = vmatprep.mubr.f32.mxu0 0.0
  %2384 = vmatmul.mubr.f32.gmra.mxu0 %v2287
  %v2385 = vpop.f32.mrf.mxu0
  %v2386 = vadd.f32 0.0, %v2385
  %v2387 = vpop.f32.mrf.mxu0
  %2388 = vmatprep.mubr.f32.mxu0 0.0
  %2389 = vmatmul.mubr.f32.gmra.mxu0 %v2289
  %v2390 = vpop.f32.mrf.mxu0
  %v2391 = vadd.f32 0.0, %v2390
  %v2392 = vpop.f32.mrf.mxu0
  %2393 = vmatprep.mubr.f32.mxu0 0.0
  %2394 = vmatmul.mubr.f32.gmra.mxu0 %v2291
  %v2395 = vpop.f32.mrf.mxu0
  %v2396 = vadd.f32 0.0, %v2395
  %v2397 = vpop.f32.mrf.mxu0
  %2398 = vmatprep.mubr.f32.mxu0 0.0
  %2399 = vmatmul.mubr.f32.gmra.mxu0 %v2293
  %v2400 = vpop.f32.mrf.mxu0
  %v2401 = vadd.f32 0.0, %v2400
  %v2402 = vpop.f32.mrf.mxu0
  %2403 = vmatprep.mubr.f32.mxu0 0.0
  %2404 = vmatmul.mubr.f32.gmra.mxu0 %v2295
  %v2405 = vpop.f32.mrf.mxu0
  %v2406 = vadd.f32 0.0, %v2405
  %v2407 = vpop.f32.mrf.mxu0
  %2408 = vmatprep.mubr.f32.mxu0 0.0
  %2409 = vmatmul.mubr.f32.gmra.mxu0 %v2297
  %v2410 = vpop.f32.mrf.mxu0
  %v2411 = vadd.f32 0.0, %v2410
  %v2412 = vpop.f32.mrf.mxu0
  %2413 = vmatprep.mubr.f32.mxu0 0.0
  %2414 = vmatmul.mubr.f32.gmra.mxu0 %v2299
  %v2415 = vpop.f32.mrf.mxu0
  %v2416 = vadd.f32 0.0, %v2415
  %v2417 = vpop.f32.mrf.mxu0
  %2418 = vmatprep.mubr.f32.mxu0 0.0
  %2419 = vmatmul.mubr.f32.gmra.mxu0 %v2301
  %v2420 = vpop.f32.mrf.mxu0
  %v2421 = vadd.f32 0.0, %v2420
  %v2422 = vpop.f32.mrf.mxu0
  %2423 = vdwg.mxu0
  %v2424 = vsel %vm669, %v2386, -inf
  %2425 = vmax.xlane.f32.xlu0 %v2424
  %v2426 = vpop.xlane.xlu0 %2425
  %v2427 = vsel %vm669, %v2391, -inf
  %2428 = vmax.xlane.f32.xlu0 %v2427
  %v2429 = vpop.xlane.xlu0 %2428
  %v2430 = vsel %vm669, %v2396, -inf
  %2431 = vmax.xlane.f32.xlu0 %v2430
  %v2432 = vpop.xlane.xlu0 %2431
  %v2433 = vsel %vm669, %v2401, -inf
  %2434 = vmax.xlane.f32.xlu0 %v2433
  %v2435 = vpop.xlane.xlu0 %2434
  %v2436 = vsel %vm669, %v2406, -inf
  %2437 = vmax.xlane.f32.xlu0 %v2436
  %v2438 = vpop.xlane.xlu0 %2437
  %v2439 = vsel %vm669, %v2411, -inf
  %2440 = vmax.xlane.f32.xlu0 %v2439
  %v2441 = vpop.xlane.xlu0 %2440
  %v2442 = vsel %vm669, %v2416, -inf
  %2443 = vmax.xlane.f32.xlu0 %v2442
  %v2444 = vpop.xlane.xlu0 %2443
  %v2445 = vsel %vm669, %v2421, -inf
  %2446 = vmax.xlane.f32.xlu0 %v2445
  %v2447 = vpop.xlane.xlu0 %2446
  %v2448 = vsub.f32 %v2386, %v2426
  %v2449 = vsub.f32 %v2391, %v2429
  %v2450 = vsub.f32 %v2396, %v2432
  %v2451 = vsub.f32 %v2401, %v2435
  %v2452 = vsub.f32 %v2406, %v2438
  %v2453 = vsub.f32 %v2411, %v2441
  %v2454 = vsub.f32 %v2416, %v2444
  %v2455 = vsub.f32 %v2421, %v2447
  %v2456 = vmul.f32 %v2448, 1.442695
  %v2457 = vpow.pop %v2456
  %v2458 = vmul.f32 %v2449, 1.442695
  %v2459 = vpow.pop %v2458
  %v2460 = vmul.f32 %v2450, 1.442695
  %v2461 = vpow.pop %v2460
  %v2462 = vmul.f32 %v2451, 1.442695
  %v2463 = vpow.pop %v2462
  %v2464 = vmul.f32 %v2452, 1.442695
  %v2465 = vpow.pop %v2464
  %v2466 = vmul.f32 %v2453, 1.442695
  %v2467 = vpow.pop %v2466
  %v2468 = vmul.f32 %v2454, 1.442695
  %v2469 = vpow.pop %v2468
  %v2470 = vmul.f32 %v2455, 1.442695
  %v2471 = vpow.pop %v2470
  %2472 = vrot.lane.b32.xlu0 %v469, 64
  %v2473 = vpop.permute.xlu0 %2472
  %2474 = vrot.lane.b32.xlu0 %v474, 64
  %v2475 = vpop.permute.xlu0 %2474
  %2476 = vrot.lane.b32.xlu0 %v479, 64
  %v2477 = vpop.permute.xlu0 %2476
  %2478 = vrot.lane.b32.xlu0 %v484, 64
  %v2479 = vpop.permute.xlu0 %2478
  %2480 = vrot.lane.b32.xlu0 %v489, 64
  %v2481 = vpop.permute.xlu0 %2480
  %2482 = vrot.lane.b32.xlu0 %v494, 64
  %v2483 = vpop.permute.xlu0 %2482
  %2484 = vrot.lane.b32.xlu0 %v499, 64
  %v2485 = vpop.permute.xlu0 %2484
  %2486 = vrot.lane.b32.xlu0 %v504, 64
  %v2487 = vpop.permute.xlu0 %2486
  %v2497 = vsel %vm669, %v2457, 0
  %v2500 = vsel %vm669, %v2459, 0
  %v2503 = vsel %vm669, %v2461, 0
  %v2506 = vsel %vm669, %v2463, 0
  %v2509 = vsel %vm669, %v2465, 0
  %v2512 = vsel %vm669, %v2467, 0
  %v2515 = vsel %vm669, %v2469, 0
  %v2518 = vsel %vm669, %v2471, 0
  %2520 = vmatprep.subr.mxu0 0.0
  %2521 = vmatpush1.msra.mxu0 0.0
  %2522 = vmatprep.subr.mxu0 0.0
  %2523 = vmatpush1.msra.mxu0 0.0
  %2524 = vmatprep.subr.mxu0 0.0
  %2525 = vmatpush1.msra.mxu0 0.0
  %2526 = vmatprep.subr.mxu0 0.0
  %2527 = vmatpush1.msra.mxu0 0.0
  %2528 = vmatprep.subr.mxu0 0.0
  %2529 = vmatpush1.msra.mxu0 0.0
  %2530 = vmatprep.subr.mxu0 0.0
  %2531 = vmatpush1.msra.mxu0 0.0
  %2532 = vmatprep.subr.mxu0 0.0
  %2533 = vmatpush1.msra.mxu0 0.0
  %2534 = vmatprep.subr.mxu0 0.0
  %2535 = vmatpush1.msra.mxu0 0.0
  %2536 = vmatprep.subr.mxu0 0.0
  %2537 = vmatpush1.msra.mxu0 %v2487
  %2538 = vmatprep.subr.mxu0 0.0
  %2539 = vmatpush1.msra.mxu0 %v2485
  %2540 = vmatprep.subr.mxu0 0.0
  %2541 = vmatpush1.msra.mxu0 %v2483
  %2542 = vmatprep.subr.mxu0 0.0
  %2543 = vmatpush1.msra.mxu0 %v2481
  %2544 = vmatprep.subr.mxu0 0.0
  %2545 = vmatpush1.msra.mxu0 %v2479
  %2546 = vmatprep.subr.mxu0 0.0
  %2547 = vmatpush1.msra.mxu0 %v2477
  %2548 = vmatprep.subr.mxu0 0.0
  %2549 = vmatpush1.msra.mxu0 %v2475
  %2550 = vmatprep.subr.mxu0 0.0
  %2551 = vmatpush1.msra.mxu0 %v2473
  %2552 = vmatprep.subr.mxu0 0.0
  %2553 = vmatpush2.msra.mxu0 0.0
  %2554 = vmatprep.subr.mxu0 0.0
  %2555 = vmatpush2.msra.mxu0 0.0
  %2556 = vmatprep.subr.mxu0 0.0
  %2557 = vmatpush2.msra.mxu0 0.0
  %2558 = vmatprep.subr.mxu0 0.0
  %2559 = vmatpush2.msra.mxu0 0.0
  %2560 = vmatprep.subr.mxu0 0.0
  %2561 = vmatpush2.msra.mxu0 0.0
  %2562 = vmatprep.subr.mxu0 0.0
  %2563 = vmatpush2.msra.mxu0 0.0
  %2564 = vmatprep.subr.mxu0 0.0
  %2565 = vmatpush2.msra.mxu0 0.0
  %2566 = vmatprep.subr.mxu0 0.0
  %2567 = vmatpush2.msra.mxu0 0.0
  %2568 = vmatprep.subr.mxu0 0.0
  %2569 = vmatpush2.msra.mxu0 0.0
  %2570 = vmatprep.subr.mxu0 0.0
  %2571 = vmatpush2.msra.mxu0 0.0
  %2572 = vmatprep.subr.mxu0 0.0
  %2573 = vmatpush2.msra.mxu0 0.0
  %2574 = vmatprep.subr.mxu0 0.0
  %2575 = vmatpush2.msra.mxu0 0.0
  %2576 = vmatprep.subr.mxu0 0.0
  %2577 = vmatpush2.msra.mxu0 0.0
  %2578 = vmatprep.subr.mxu0 0.0
  %2579 = vmatpush2.msra.mxu0 0.0
  %2580 = vmatprep.subr.mxu0 0.0
  %2581 = vmatpush2.msra.mxu0 0.0
  %2582 = vmatprep.subr.mxu0 0.0
  %2583 = vmatpush2.msra.mxu0 0.0
  %2584 = vmatprep.mubr.f32.mxu0 0.0
  %2585 = vmatmul.mubr.f32.gmra.mxu0 %v2497
  %v2586 = vpop.f32.mrf.mxu0
  %v2587 = vadd.f32 0.0, %v2586
  %v2588 = vpop.f32.mrf.mxu0
  %2589 = vmatprep.mubr.f32.mxu0 0.0
  %2590 = vmatmul.mubr.f32.gmra.mxu0 %v2500
  %v2591 = vpop.f32.mrf.mxu0
  %v2592 = vadd.f32 0.0, %v2591
  %v2593 = vpop.f32.mrf.mxu0
  %2594 = vmatprep.mubr.f32.mxu0 0.0
  %2595 = vmatmul.mubr.f32.gmra.mxu0 %v2503
  %v2596 = vpop.f32.mrf.mxu0
  %v2597 = vadd.f32 0.0, %v2596
  %v2598 = vpop.f32.mrf.mxu0
  %2599 = vmatprep.mubr.f32.mxu0 0.0
  %2600 = vmatmul.mubr.f32.gmra.mxu0 %v2506
  %v2601 = vpop.f32.mrf.mxu0
  %v2602 = vadd.f32 0.0, %v2601
  %v2603 = vpop.f32.mrf.mxu0
  %2604 = vmatprep.mubr.f32.mxu0 0.0
  %2605 = vmatmul.mubr.f32.gmra.mxu0 %v2509
  %v2606 = vpop.f32.mrf.mxu0
  %v2607 = vadd.f32 0.0, %v2606
  %v2608 = vpop.f32.mrf.mxu0
  %2609 = vmatprep.mubr.f32.mxu0 0.0
  %2610 = vmatmul.mubr.f32.gmra.mxu0 %v2512
  %v2611 = vpop.f32.mrf.mxu0
  %v2612 = vadd.f32 0.0, %v2611
  %v2613 = vpop.f32.mrf.mxu0
  %2614 = vmatprep.mubr.f32.mxu0 0.0
  %2615 = vmatmul.mubr.f32.gmra.mxu0 %v2515
  %v2616 = vpop.f32.mrf.mxu0
  %v2617 = vadd.f32 0.0, %v2616
  %v2618 = vpop.f32.mrf.mxu0
  %2619 = vmatprep.mubr.f32.mxu0 0.0
  %2620 = vmatmul.mubr.f32.gmra.mxu0 %v2518
  %v2621 = vpop.f32.mrf.mxu0
  %v2622 = vadd.f32 0.0, %v2621
  %v2623 = vpop.f32.mrf.mxu0
  %2624 = vdwg.mxu0
  %v2625 = vsel %vm669, %v2457, 0.0
  %2626 = vadd.xlane.f32.xlu0 %v2625
  %v2627 = vpop.xlane.xlu0 %2626
  %v2628 = vsel %vm669, %v2459, 0.0
  %2629 = vadd.xlane.f32.xlu0 %v2628
  %v2630 = vpop.xlane.xlu0 %2629
  %v2631 = vsel %vm669, %v2461, 0.0
  %2632 = vadd.xlane.f32.xlu0 %v2631
  %v2633 = vpop.xlane.xlu0 %2632
  %v2634 = vsel %vm669, %v2463, 0.0
  %2635 = vadd.xlane.f32.xlu0 %v2634
  %v2636 = vpop.xlane.xlu0 %2635
  %v2637 = vsel %vm669, %v2465, 0.0
  %2638 = vadd.xlane.f32.xlu0 %v2637
  %v2639 = vpop.xlane.xlu0 %2638
  %v2640 = vsel %vm669, %v2467, 0.0
  %2641 = vadd.xlane.f32.xlu0 %v2640
  %v2642 = vpop.xlane.xlu0 %2641
  %v2643 = vsel %vm669, %v2469, 0.0
  %2644 = vadd.xlane.f32.xlu0 %v2643
  %v2645 = vpop.xlane.xlu0 %2644
  %v2646 = vsel %vm669, %v2471, 0.0
  %2647 = vadd.xlane.f32.xlu0 %v2646
  %v2648 = vpop.xlane.xlu0 %2647
  %v2649 = vrcp.pop %v2627
  %v2650 = vmul.f32 %v2587, %v2649
  %v2651 = vrcp.pop %v2630
  %v2652 = vmul.f32 %v2592, %v2651
  %v2653 = vrcp.pop %v2633
  %v2654 = vmul.f32 %v2597, %v2653
  %v2655 = vrcp.pop %v2636
  %v2656 = vmul.f32 %v2602, %v2655
  %v2657 = vrcp.pop %v2639
  %v2658 = vmul.f32 %v2607, %v2657
  %v2659 = vrcp.pop %v2642
  %v2660 = vmul.f32 %v2612, %v2659
  %v2661 = vrcp.pop %v2645
  %v2662 = vmul.f32 %v2617, %v2661
  %v2663 = vrcp.pop %v2648
  %v2664 = vmul.f32 %v2622, %v2663
  %2665 = vrot.lane.b32.xlu0 %v469, 120
  %v2666 = vpop.permute.xlu0 %2665
  %2667 = vrot.lane.b32.xlu0 %v474, 120
  %v2668 = vpop.permute.xlu0 %2667
  %2669 = vrot.lane.b32.xlu0 %v479, 120
  %v2670 = vpop.permute.xlu0 %2669
  %2671 = vrot.lane.b32.xlu0 %v484, 120
  %v2672 = vpop.permute.xlu0 %2671
  %2673 = vrot.lane.b32.xlu0 %v489, 120
  %v2674 = vpop.permute.xlu0 %2673
  %2675 = vrot.lane.b32.xlu0 %v494, 120
  %v2676 = vpop.permute.xlu0 %2675
  %2677 = vrot.lane.b32.xlu0 %v499, 120
  %v2678 = vpop.permute.xlu0 %2677
  %2679 = vrot.lane.b32.xlu0 %v504, 120
  %v2680 = vpop.permute.xlu0 %2679
  %2681 = vrot.lane.b32.xlu0 %v469, 88
  %v2682 = vpop.permute.xlu0 %2681
  %2683 = vrot.lane.b32.xlu0 %v474, 88
  %v2684 = vpop.permute.xlu0 %2683
  %2685 = vrot.lane.b32.xlu0 %v479, 88
  %v2686 = vpop.permute.xlu0 %2685
  %2687 = vrot.lane.b32.xlu0 %v484, 88
  %v2688 = vpop.permute.xlu0 %2687
  %2689 = vrot.lane.b32.xlu0 %v489, 88
  %v2690 = vpop.permute.xlu0 %2689
  %2691 = vrot.lane.b32.xlu0 %v494, 88
  %v2692 = vpop.permute.xlu0 %2691
  %2693 = vrot.lane.b32.xlu0 %v499, 88
  %v2694 = vpop.permute.xlu0 %2693
  %2695 = vrot.lane.b32.xlu0 %v504, 88
  %v2696 = vpop.permute.xlu0 %2695
  %v2697 = vsel %vm531, %v2666, 0
  %v2699 = vsel %vm531, %v2668, 0
  %v2701 = vsel %vm531, %v2670, 0
  %v2703 = vsel %vm531, %v2672, 0
  %v2705 = vsel %vm531, %v2674, 0
  %v2707 = vsel %vm531, %v2676, 0
  %v2709 = vsel %vm531, %v2678, 0
  %v2711 = vsel %vm531, %v2680, 0
  %v2713 = vsel %vm531, %v2682, 0
  %v2715 = vsel %vm531, %v2684, 0
  %v2717 = vsel %vm531, %v2686, 0
  %v2719 = vsel %vm531, %v2688, 0
  %v2721 = vsel %vm531, %v2690, 0
  %v2723 = vsel %vm531, %v2692, 0
  %v2725 = vsel %vm531, %v2694, 0
  %v2727 = vsel %vm531, %v2696, 0
  %2729 = vmatprep.subr.mxu0 0.0
  %2730 = vmatpush1.xpose.msra.mxu0 0.0
  %2731 = vmatprep.subr.mxu0 0.0
  %2732 = vmatpush1.xpose.msra.mxu0 0.0
  %2733 = vmatprep.subr.mxu0 0.0
  %2734 = vmatpush1.xpose.msra.mxu0 0.0
  %2735 = vmatprep.subr.mxu0 0.0
  %2736 = vmatpush1.xpose.msra.mxu0 0.0
  %2737 = vmatprep.subr.mxu0 0.0
  %2738 = vmatpush1.xpose.msra.mxu0 0.0
  %2739 = vmatprep.subr.mxu0 0.0
  %2740 = vmatpush1.xpose.msra.mxu0 0.0
  %2741 = vmatprep.subr.mxu0 0.0
  %2742 = vmatpush1.xpose.msra.mxu0 0.0
  %2743 = vmatprep.subr.mxu0 0.0
  %2744 = vmatpush1.xpose.msra.mxu0 0.0
  %2745 = vmatprep.subr.mxu0 0.0
  %2746 = vmatpush1.xpose.msra.mxu0 %v2727
  %2747 = vmatprep.subr.mxu0 0.0
  %2748 = vmatpush1.xpose.msra.mxu0 %v2725
  %2749 = vmatprep.subr.mxu0 0.0
  %2750 = vmatpush1.xpose.msra.mxu0 %v2723
  %2751 = vmatprep.subr.mxu0 0.0
  %2752 = vmatpush1.xpose.msra.mxu0 %v2721
  %2753 = vmatprep.subr.mxu0 0.0
  %2754 = vmatpush1.xpose.msra.mxu0 %v2719
  %2755 = vmatprep.subr.mxu0 0.0
  %2756 = vmatpush1.xpose.msra.mxu0 %v2717
  %2757 = vmatprep.subr.mxu0 0.0
  %2758 = vmatpush1.xpose.msra.mxu0 %v2715
  %2759 = vmatprep.subr.mxu0 0.0
  %2760 = vmatpush1.xpose.msra.mxu0 %v2713
  %2761 = vmatprep.subr.mxu0 0.0
  %2762 = vmatpush2.xpose.msra.mxu0 0.0
  %2763 = vmatprep.subr.mxu0 0.0
  %2764 = vmatpush2.xpose.msra.mxu0 0.0
  %2765 = vmatprep.subr.mxu0 0.0
  %2766 = vmatpush2.xpose.msra.mxu0 0.0
  %2767 = vmatprep.subr.mxu0 0.0
  %2768 = vmatpush2.xpose.msra.mxu0 0.0
  %2769 = vmatprep.subr.mxu0 0.0
  %2770 = vmatpush2.xpose.msra.mxu0 0.0
  %2771 = vmatprep.subr.mxu0 0.0
  %2772 = vmatpush2.xpose.msra.mxu0 0.0
  %2773 = vmatprep.subr.mxu0 0.0
  %2774 = vmatpush2.xpose.msra.mxu0 0.0
  %2775 = vmatprep.subr.mxu0 0.0
  %2776 = vmatpush2.xpose.msra.mxu0 0.0
  %2777 = vmatprep.subr.mxu0 0.0
  %2778 = vmatpush2.xpose.msra.mxu0 0.0
  %2779 = vmatprep.subr.mxu0 0.0
  %2780 = vmatpush2.xpose.msra.mxu0 0.0
  %2781 = vmatprep.subr.mxu0 0.0
  %2782 = vmatpush2.xpose.msra.mxu0 0.0
  %2783 = vmatprep.subr.mxu0 0.0
  %2784 = vmatpush2.xpose.msra.mxu0 0.0
  %2785 = vmatprep.subr.mxu0 0.0
  %2786 = vmatpush2.xpose.msra.mxu0 0.0
  %2787 = vmatprep.subr.mxu0 0.0
  %2788 = vmatpush2.xpose.msra.mxu0 0.0
  %2789 = vmatprep.subr.mxu0 0.0
  %2790 = vmatpush2.xpose.msra.mxu0 0.0
  %2791 = vmatprep.subr.mxu0 0.0
  %2792 = vmatpush2.xpose.msra.mxu0 0.0
  %2793 = vmatprep.mubr.f32.mxu0 0.0
  %2794 = vmatmul.mubr.f32.gmra.mxu0 %v2697
  %v2795 = vpop.f32.mrf.mxu0
  %v2796 = vadd.f32 0.0, %v2795
  %v2797 = vpop.f32.mrf.mxu0
  %2798 = vmatprep.mubr.f32.mxu0 0.0
  %2799 = vmatmul.mubr.f32.gmra.mxu0 %v2699
  %v2800 = vpop.f32.mrf.mxu0
  %v2801 = vadd.f32 0.0, %v2800
  %v2802 = vpop.f32.mrf.mxu0
  %2803 = vmatprep.mubr.f32.mxu0 0.0
  %2804 = vmatmul.mubr.f32.gmra.mxu0 %v2701
  %v2805 = vpop.f32.mrf.mxu0
  %v2806 = vadd.f32 0.0, %v2805
  %v2807 = vpop.f32.mrf.mxu0
  %2808 = vmatprep.mubr.f32.mxu0 0.0
  %2809 = vmatmul.mubr.f32.gmra.mxu0 %v2703
  %v2810 = vpop.f32.mrf.mxu0
  %v2811 = vadd.f32 0.0, %v2810
  %v2812 = vpop.f32.mrf.mxu0
  %2813 = vmatprep.mubr.f32.mxu0 0.0
  %2814 = vmatmul.mubr.f32.gmra.mxu0 %v2705
  %v2815 = vpop.f32.mrf.mxu0
  %v2816 = vadd.f32 0.0, %v2815
  %v2817 = vpop.f32.mrf.mxu0
  %2818 = vmatprep.mubr.f32.mxu0 0.0
  %2819 = vmatmul.mubr.f32.gmra.mxu0 %v2707
  %v2820 = vpop.f32.mrf.mxu0
  %v2821 = vadd.f32 0.0, %v2820
  %v2822 = vpop.f32.mrf.mxu0
  %2823 = vmatprep.mubr.f32.mxu0 0.0
  %2824 = vmatmul.mubr.f32.gmra.mxu0 %v2709
  %v2825 = vpop.f32.mrf.mxu0
  %v2826 = vadd.f32 0.0, %v2825
  %v2827 = vpop.f32.mrf.mxu0
  %2828 = vmatprep.mubr.f32.mxu0 0.0
  %2829 = vmatmul.mubr.f32.gmra.mxu0 %v2711
  %v2830 = vpop.f32.mrf.mxu0
  %v2831 = vadd.f32 0.0, %v2830
  %v2832 = vpop.f32.mrf.mxu0
  %2833 = vdwg.mxu0
  %v2834 = vsel %vm669, %v2796, -inf
  %2835 = vmax.xlane.f32.xlu0 %v2834
  %v2836 = vpop.xlane.xlu0 %2835
  %v2837 = vsel %vm669, %v2801, -inf
  %2838 = vmax.xlane.f32.xlu0 %v2837
  %v2839 = vpop.xlane.xlu0 %2838
  %v2840 = vsel %vm669, %v2806, -inf
  %2841 = vmax.xlane.f32.xlu0 %v2840
  %v2842 = vpop.xlane.xlu0 %2841
  %v2843 = vsel %vm669, %v2811, -inf
  %2844 = vmax.xlane.f32.xlu0 %v2843
  %v2845 = vpop.xlane.xlu0 %2844
  %v2846 = vsel %vm669, %v2816, -inf
  %2847 = vmax.xlane.f32.xlu0 %v2846
  %v2848 = vpop.xlane.xlu0 %2847
  %v2849 = vsel %vm669, %v2821, -inf
  %2850 = vmax.xlane.f32.xlu0 %v2849
  %v2851 = vpop.xlane.xlu0 %2850
  %v2852 = vsel %vm669, %v2826, -inf
  %2853 = vmax.xlane.f32.xlu0 %v2852
  %v2854 = vpop.xlane.xlu0 %2853
  %v2855 = vsel %vm669, %v2831, -inf
  %2856 = vmax.xlane.f32.xlu0 %v2855
  %v2857 = vpop.xlane.xlu0 %2856
  %v2858 = vsub.f32 %v2796, %v2836
  %v2859 = vsub.f32 %v2801, %v2839
  %v2860 = vsub.f32 %v2806, %v2842
  %v2861 = vsub.f32 %v2811, %v2845
  %v2862 = vsub.f32 %v2816, %v2848
  %v2863 = vsub.f32 %v2821, %v2851
  %v2864 = vsub.f32 %v2826, %v2854
  %v2865 = vsub.f32 %v2831, %v2857
  %v2866 = vmul.f32 %v2858, 1.442695
  %v2867 = vpow.pop %v2866
  %v2868 = vmul.f32 %v2859, 1.442695
  %v2869 = vpow.pop %v2868
  %v2870 = vmul.f32 %v2860, 1.442695
  %v2871 = vpow.pop %v2870
  %v2872 = vmul.f32 %v2861, 1.442695
  %v2873 = vpow.pop %v2872
  %v2874 = vmul.f32 %v2862, 1.442695
  %v2875 = vpow.pop %v2874
  %v2876 = vmul.f32 %v2863, 1.442695
  %v2877 = vpow.pop %v2876
  %v2878 = vmul.f32 %v2864, 1.442695
  %v2879 = vpow.pop %v2878
  %v2880 = vmul.f32 %v2865, 1.442695
  %v2881 = vpow.pop %v2880
  %2882 = vrot.lane.b32.xlu0 %v469, 56
  %v2883 = vpop.permute.xlu0 %2882
  %2884 = vrot.lane.b32.xlu0 %v474, 56
  %v2885 = vpop.permute.xlu0 %2884
  %2886 = vrot.lane.b32.xlu0 %v479, 56
  %v2887 = vpop.permute.xlu0 %2886
  %2888 = vrot.lane.b32.xlu0 %v484, 56
  %v2889 = vpop.permute.xlu0 %2888
  %2890 = vrot.lane.b32.xlu0 %v489, 56
  %v2891 = vpop.permute.xlu0 %2890
  %2892 = vrot.lane.b32.xlu0 %v494, 56
  %v2893 = vpop.permute.xlu0 %2892
  %2894 = vrot.lane.b32.xlu0 %v499, 56
  %v2895 = vpop.permute.xlu0 %2894
  %2896 = vrot.lane.b32.xlu0 %v504, 56
  %v2897 = vpop.permute.xlu0 %2896
  %v2907 = vsel %vm669, %v2867, 0
  %v2910 = vsel %vm669, %v2869, 0
  %v2913 = vsel %vm669, %v2871, 0
  %v2916 = vsel %vm669, %v2873, 0
  %v2919 = vsel %vm669, %v2875, 0
  %v2922 = vsel %vm669, %v2877, 0
  %v2925 = vsel %vm669, %v2879, 0
  %v2928 = vsel %vm669, %v2881, 0
  %2930 = vmatprep.subr.mxu0 0.0
  %2931 = vmatpush1.msra.mxu0 0.0
  %2932 = vmatprep.subr.mxu0 0.0
  %2933 = vmatpush1.msra.mxu0 0.0
  %2934 = vmatprep.subr.mxu0 0.0
  %2935 = vmatpush1.msra.mxu0 0.0
  %2936 = vmatprep.subr.mxu0 0.0
  %2937 = vmatpush1.msra.mxu0 0.0
  %2938 = vmatprep.subr.mxu0 0.0
  %2939 = vmatpush1.msra.mxu0 0.0
  %2940 = vmatprep.subr.mxu0 0.0
  %2941 = vmatpush1.msra.mxu0 0.0
  %2942 = vmatprep.subr.mxu0 0.0
  %2943 = vmatpush1.msra.mxu0 0.0
  %2944 = vmatprep.subr.mxu0 0.0
  %2945 = vmatpush1.msra.mxu0 0.0
  %2946 = vmatprep.subr.mxu0 0.0
  %2947 = vmatpush1.msra.mxu0 %v2897
  %2948 = vmatprep.subr.mxu0 0.0
  %2949 = vmatpush1.msra.mxu0 %v2895
  %2950 = vmatprep.subr.mxu0 0.0
  %2951 = vmatpush1.msra.mxu0 %v2893
  %2952 = vmatprep.subr.mxu0 0.0
  %2953 = vmatpush1.msra.mxu0 %v2891
  %2954 = vmatprep.subr.mxu0 0.0
  %2955 = vmatpush1.msra.mxu0 %v2889
  %2956 = vmatprep.subr.mxu0 0.0
  %2957 = vmatpush1.msra.mxu0 %v2887
  %2958 = vmatprep.subr.mxu0 0.0
  %2959 = vmatpush1.msra.mxu0 %v2885
  %2960 = vmatprep.subr.mxu0 0.0
  %2961 = vmatpush1.msra.mxu0 %v2883
  %2962 = vmatprep.subr.mxu0 0.0
  %2963 = vmatpush2.msra.mxu0 0.0
  %2964 = vmatprep.subr.mxu0 0.0
  %2965 = vmatpush2.msra.mxu0 0.0
  %2966 = vmatprep.subr.mxu0 0.0
  %2967 = vmatpush2.msra.mxu0 0.0
  %2968 = vmatprep.subr.mxu0 0.0
  %2969 = vmatpush2.msra.mxu0 0.0
  %2970 = vmatprep.subr.mxu0 0.0
  %2971 = vmatpush2.msra.mxu0 0.0
  %2972 = vmatprep.subr.mxu0 0.0
  %2973 = vmatpush2.msra.mxu0 0.0
  %2974 = vmatprep.subr.mxu0 0.0
  %2975 = vmatpush2.msra.mxu0 0.0
  %2976 = vmatprep.subr.mxu0 0.0
  %2977 = vmatpush2.msra.mxu0 0.0
  %2978 = vmatprep.subr.mxu0 0.0
  %2979 = vmatpush2.msra.mxu0 0.0
  %2980 = vmatprep.subr.mxu0 0.0
  %2981 = vmatpush2.msra.mxu0 0.0
  %2982 = vmatprep.subr.mxu0 0.0
  %2983 = vmatpush2.msra.mxu0 0.0
  %2984 = vmatprep.subr.mxu0 0.0
  %2985 = vmatpush2.msra.mxu0 0.0
  %2986 = vmatprep.subr.mxu0 0.0
  %2987 = vmatpush2.msra.mxu0 0.0
  %2988 = vmatprep.subr.mxu0 0.0
  %2989 = vmatpush2.msra.mxu0 0.0
  %2990 = vmatprep.subr.mxu0 0.0
  %2991 = vmatpush2.msra.mxu0 0.0
  %2992 = vmatprep.subr.mxu0 0.0
  %2993 = vmatpush2.msra.mxu0 0.0
  %2994 = vmatprep.mubr.f32.mxu0 0.0
  %2995 = vmatmul.mubr.f32.gmra.mxu0 %v2907
  %v2996 = vpop.f32.mrf.mxu0
  %v2997 = vadd.f32 0.0, %v2996
  %v2998 = vpop.f32.mrf.mxu0
  %2999 = vmatprep.mubr.f32.mxu0 0.0
  %3000 = vmatmul.mubr.f32.gmra.mxu0 %v2910
  %v3001 = vpop.f32.mrf.mxu0
  %v3002 = vadd.f32 0.0, %v3001
  %v3003 = vpop.f32.mrf.mxu0
  %3004 = vmatprep.mubr.f32.mxu0 0.0
  %3005 = vmatmul.mubr.f32.gmra.mxu0 %v2913
  %v3006 = vpop.f32.mrf.mxu0
  %v3007 = vadd.f32 0.0, %v3006
  %v3008 = vpop.f32.mrf.mxu0
  %3009 = vmatprep.mubr.f32.mxu0 0.0
  %3010 = vmatmul.mubr.f32.gmra.mxu0 %v2916
  %v3011 = vpop.f32.mrf.mxu0
  %v3012 = vadd.f32 0.0, %v3011
  %v3013 = vpop.f32.mrf.mxu0
  %3014 = vmatprep.mubr.f32.mxu0 0.0
  %3015 = vmatmul.mubr.f32.gmra.mxu0 %v2919
  %v3016 = vpop.f32.mrf.mxu0
  %v3017 = vadd.f32 0.0, %v3016
  %v3018 = vpop.f32.mrf.mxu0
  %3019 = vmatprep.mubr.f32.mxu0 0.0
  %3020 = vmatmul.mubr.f32.gmra.mxu0 %v2922
  %v3021 = vpop.f32.mrf.mxu0
  %v3022 = vadd.f32 0.0, %v3021
  %v3023 = vpop.f32.mrf.mxu0
  %3024 = vmatprep.mubr.f32.mxu0 0.0
  %3025 = vmatmul.mubr.f32.gmra.mxu0 %v2925
  %v3026 = vpop.f32.mrf.mxu0
  %v3027 = vadd.f32 0.0, %v3026
  %v3028 = vpop.f32.mrf.mxu0
  %3029 = vmatprep.mubr.f32.mxu0 0.0
  %3030 = vmatmul.mubr.f32.gmra.mxu0 %v2928
  %v3031 = vpop.f32.mrf.mxu0
  %v3032 = vadd.f32 0.0, %v3031
  %v3033 = vpop.f32.mrf.mxu0
  %3034 = vdwg.mxu0
  %v3035 = vsel %vm669, %v2867, 0.0
  %3036 = vadd.xlane.f32.xlu0 %v3035
  %v3037 = vpop.xlane.xlu0 %3036
  %v3038 = vsel %vm669, %v2869, 0.0
  %3039 = vadd.xlane.f32.xlu0 %v3038
  %v3040 = vpop.xlane.xlu0 %3039
  %v3041 = vsel %vm669, %v2871, 0.0
  %3042 = vadd.xlane.f32.xlu0 %v3041
  %v3043 = vpop.xlane.xlu0 %3042
  %v3044 = vsel %vm669, %v2873, 0.0
  %3045 = vadd.xlane.f32.xlu0 %v3044
  %v3046 = vpop.xlane.xlu0 %3045
  %v3047 = vsel %vm669, %v2875, 0.0
  %3048 = vadd.xlane.f32.xlu0 %v3047
  %v3049 = vpop.xlane.xlu0 %3048
  %v3050 = vsel %vm669, %v2877, 0.0
  %3051 = vadd.xlane.f32.xlu0 %v3050
  %v3052 = vpop.xlane.xlu0 %3051
  %v3053 = vsel %vm669, %v2879, 0.0
  %3054 = vadd.xlane.f32.xlu0 %v3053
  %v3055 = vpop.xlane.xlu0 %3054
  %v3056 = vsel %vm669, %v2881, 0.0
  %3057 = vadd.xlane.f32.xlu0 %v3056
  %v3058 = vpop.xlane.xlu0 %3057
  %v3059 = vrcp.pop %v3037
  %v3060 = vmul.f32 %v2997, %v3059
  %v3061 = vrcp.pop %v3040
  %v3062 = vmul.f32 %v3002, %v3061
  %v3063 = vrcp.pop %v3043
  %v3064 = vmul.f32 %v3007, %v3063
  %v3065 = vrcp.pop %v3046
  %v3066 = vmul.f32 %v3012, %v3065
  %v3067 = vrcp.pop %v3049
  %v3068 = vmul.f32 %v3017, %v3067
  %v3069 = vrcp.pop %v3052
  %v3070 = vmul.f32 %v3022, %v3069
  %v3071 = vrcp.pop %v3055
  %v3072 = vmul.f32 %v3027, %v3071
  %v3073 = vrcp.pop %v3058
  %v3074 = vmul.f32 %v3032, %v3073
  %3075 = vrot.lane.b32.xlu0 %v469, 112
  %v3076 = vpop.permute.xlu0 %3075
  %3077 = vrot.lane.b32.xlu0 %v474, 112
  %v3078 = vpop.permute.xlu0 %3077
  %3079 = vrot.lane.b32.xlu0 %v479, 112
  %v3080 = vpop.permute.xlu0 %3079
  %3081 = vrot.lane.b32.xlu0 %v484, 112
  %v3082 = vpop.permute.xlu0 %3081
  %3083 = vrot.lane.b32.xlu0 %v489, 112
  %v3084 = vpop.permute.xlu0 %3083
  %3085 = vrot.lane.b32.xlu0 %v494, 112
  %v3086 = vpop.permute.xlu0 %3085
  %3087 = vrot.lane.b32.xlu0 %v499, 112
  %v3088 = vpop.permute.xlu0 %3087
  %3089 = vrot.lane.b32.xlu0 %v504, 112
  %v3090 = vpop.permute.xlu0 %3089
  %3091 = vrot.lane.b32.xlu0 %v469, 80
  %v3092 = vpop.permute.xlu0 %3091
  %3093 = vrot.lane.b32.xlu0 %v474, 80
  %v3094 = vpop.permute.xlu0 %3093
  %3095 = vrot.lane.b32.xlu0 %v479, 80
  %v3096 = vpop.permute.xlu0 %3095
  %3097 = vrot.lane.b32.xlu0 %v484, 80
  %v3098 = vpop.permute.xlu0 %3097
  %3099 = vrot.lane.b32.xlu0 %v489, 80
  %v3100 = vpop.permute.xlu0 %3099
  %3101 = vrot.lane.b32.xlu0 %v494, 80
  %v3102 = vpop.permute.xlu0 %3101
  %3103 = vrot.lane.b32.xlu0 %v499, 80
  %v3104 = vpop.permute.xlu0 %3103
  %3105 = vrot.lane.b32.xlu0 %v504, 80
  %v3106 = vpop.permute.xlu0 %3105
  %v3107 = vsel %vm531, %v3076, 0
  %v3109 = vsel %vm531, %v3078, 0
  %v3111 = vsel %vm531, %v3080, 0
  %v3113 = vsel %vm531, %v3082, 0
  %v3115 = vsel %vm531, %v3084, 0
  %v3117 = vsel %vm531, %v3086, 0
  %v3119 = vsel %vm531, %v3088, 0
  %v3121 = vsel %vm531, %v3090, 0
  %v3123 = vsel %vm531, %v3092, 0
  %v3125 = vsel %vm531, %v3094, 0
  %v3127 = vsel %vm531, %v3096, 0
  %v3129 = vsel %vm531, %v3098, 0
  %v3131 = vsel %vm531, %v3100, 0
  %v3133 = vsel %vm531, %v3102, 0
  %v3135 = vsel %vm531, %v3104, 0
  %v3137 = vsel %vm531, %v3106, 0
  %3139 = vmatprep.subr.mxu0 0.0
  %3140 = vmatpush1.xpose.msra.mxu0 0.0
  %3141 = vmatprep.subr.mxu0 0.0
  %3142 = vmatpush1.xpose.msra.mxu0 0.0
  %3143 = vmatprep.subr.mxu0 0.0
  %3144 = vmatpush1.xpose.msra.mxu0 0.0
  %3145 = vmatprep.subr.mxu0 0.0
  %3146 = vmatpush1.xpose.msra.mxu0 0.0
  %3147 = vmatprep.subr.mxu0 0.0
  %3148 = vmatpush1.xpose.msra.mxu0 0.0
  %3149 = vmatprep.subr.mxu0 0.0
  %3150 = vmatpush1.xpose.msra.mxu0 0.0
  %3151 = vmatprep.subr.mxu0 0.0
  %3152 = vmatpush1.xpose.msra.mxu0 0.0
  %3153 = vmatprep.subr.mxu0 0.0
  %3154 = vmatpush1.xpose.msra.mxu0 0.0
  %3155 = vmatprep.subr.mxu0 0.0
  %3156 = vmatpush1.xpose.msra.mxu0 %v3137
  %3157 = vmatprep.subr.mxu0 0.0
  %3158 = vmatpush1.xpose.msra.mxu0 %v3135
  %3159 = vmatprep.subr.mxu0 0.0
  %3160 = vmatpush1.xpose.msra.mxu0 %v3133
  %3161 = vmatprep.subr.mxu0 0.0
  %3162 = vmatpush1.xpose.msra.mxu0 %v3131
  %3163 = vmatprep.subr.mxu0 0.0
  %3164 = vmatpush1.xpose.msra.mxu0 %v3129
  %3165 = vmatprep.subr.mxu0 0.0
  %3166 = vmatpush1.xpose.msra.mxu0 %v3127
  %3167 = vmatprep.subr.mxu0 0.0
  %3168 = vmatpush1.xpose.msra.mxu0 %v3125
  %3169 = vmatprep.subr.mxu0 0.0
  %3170 = vmatpush1.xpose.msra.mxu0 %v3123
  %3171 = vmatprep.subr.mxu0 0.0
  %3172 = vmatpush2.xpose.msra.mxu0 0.0
  %3173 = vmatprep.subr.mxu0 0.0
  %3174 = vmatpush2.xpose.msra.mxu0 0.0
  %3175 = vmatprep.subr.mxu0 0.0
  %3176 = vmatpush2.xpose.msra.mxu0 0.0
  %3177 = vmatprep.subr.mxu0 0.0
  %3178 = vmatpush2.xpose.msra.mxu0 0.0
  %3179 = vmatprep.subr.mxu0 0.0
  %3180 = vmatpush2.xpose.msra.mxu0 0.0
  %3181 = vmatprep.subr.mxu0 0.0
  %3182 = vmatpush2.xpose.msra.mxu0 0.0
  %3183 = vmatprep.subr.mxu0 0.0
  %3184 = vmatpush2.xpose.msra.mxu0 0.0
  %3185 = vmatprep.subr.mxu0 0.0
  %3186 = vmatpush2.xpose.msra.mxu0 0.0
  %3187 = vmatprep.subr.mxu0 0.0
  %3188 = vmatpush2.xpose.msra.mxu0 0.0
  %3189 = vmatprep.subr.mxu0 0.0
  %3190 = vmatpush2.xpose.msra.mxu0 0.0
  %3191 = vmatprep.subr.mxu0 0.0
  %3192 = vmatpush2.xpose.msra.mxu0 0.0
  %3193 = vmatprep.subr.mxu0 0.0
  %3194 = vmatpush2.xpose.msra.mxu0 0.0
  %3195 = vmatprep.subr.mxu0 0.0
  %3196 = vmatpush2.xpose.msra.mxu0 0.0
  %3197 = vmatprep.subr.mxu0 0.0
  %3198 = vmatpush2.xpose.msra.mxu0 0.0
  %3199 = vmatprep.subr.mxu0 0.0
  %3200 = vmatpush2.xpose.msra.mxu0 0.0
  %3201 = vmatprep.subr.mxu0 0.0
  %3202 = vmatpush2.xpose.msra.mxu0 0.0
  %3203 = vmatprep.mubr.f32.mxu0 0.0
  %3204 = vmatmul.mubr.f32.gmra.mxu0 %v3107
  %v3205 = vpop.f32.mrf.mxu0
  %v3206 = vadd.f32 0.0, %v3205
  %v3207 = vpop.f32.mrf.mxu0
  %3208 = vmatprep.mubr.f32.mxu0 0.0
  %3209 = vmatmul.mubr.f32.gmra.mxu0 %v3109
  %v3210 = vpop.f32.mrf.mxu0
  %v3211 = vadd.f32 0.0, %v3210
  %v3212 = vpop.f32.mrf.mxu0
  %3213 = vmatprep.mubr.f32.mxu0 0.0
  %3214 = vmatmul.mubr.f32.gmra.mxu0 %v3111
  %v3215 = vpop.f32.mrf.mxu0
  %v3216 = vadd.f32 0.0, %v3215
  %v3217 = vpop.f32.mrf.mxu0
  %3218 = vmatprep.mubr.f32.mxu0 0.0
  %3219 = vmatmul.mubr.f32.gmra.mxu0 %v3113
  %v3220 = vpop.f32.mrf.mxu0
  %v3221 = vadd.f32 0.0, %v3220
  %v3222 = vpop.f32.mrf.mxu0
  %3223 = vmatprep.mubr.f32.mxu0 0.0
  %3224 = vmatmul.mubr.f32.gmra.mxu0 %v3115
  %v3225 = vpop.f32.mrf.mxu0
  %v3226 = vadd.f32 0.0, %v3225
  %v3227 = vpop.f32.mrf.mxu0
  %3228 = vmatprep.mubr.f32.mxu0 0.0
  %3229 = vmatmul.mubr.f32.gmra.mxu0 %v3117
  %v3230 = vpop.f32.mrf.mxu0
  %v3231 = vadd.f32 0.0, %v3230
  %v3232 = vpop.f32.mrf.mxu0
  %3233 = vmatprep.mubr.f32.mxu0 0.0
  %3234 = vmatmul.mubr.f32.gmra.mxu0 %v3119
  %v3235 = vpop.f32.mrf.mxu0
  %v3236 = vadd.f32 0.0, %v3235
  %v3237 = vpop.f32.mrf.mxu0
  %3238 = vmatprep.mubr.f32.mxu0 0.0
  %3239 = vmatmul.mubr.f32.gmra.mxu0 %v3121
  %v3240 = vpop.f32.mrf.mxu0
  %v3241 = vadd.f32 0.0, %v3240
  %v3242 = vpop.f32.mrf.mxu0
  %3243 = vdwg.mxu0
  %v3244 = vsel %vm669, %v3206, -inf
  %3245 = vmax.xlane.f32.xlu0 %v3244
  %v3246 = vpop.xlane.xlu0 %3245
  %v3247 = vsel %vm669, %v3211, -inf
  %3248 = vmax.xlane.f32.xlu0 %v3247
  %v3249 = vpop.xlane.xlu0 %3248
  %v3250 = vsel %vm669, %v3216, -inf
  %3251 = vmax.xlane.f32.xlu0 %v3250
  %v3252 = vpop.xlane.xlu0 %3251
  %v3253 = vsel %vm669, %v3221, -inf
  %3254 = vmax.xlane.f32.xlu0 %v3253
  %v3255 = vpop.xlane.xlu0 %3254
  %v3256 = vsel %vm669, %v3226, -inf
  %3257 = vmax.xlane.f32.xlu0 %v3256
  %v3258 = vpop.xlane.xlu0 %3257
  %v3259 = vsel %vm669, %v3231, -inf
  %3260 = vmax.xlane.f32.xlu0 %v3259
  %v3261 = vpop.xlane.xlu0 %3260
  %v3262 = vsel %vm669, %v3236, -inf
  %3263 = vmax.xlane.f32.xlu0 %v3262
  %v3264 = vpop.xlane.xlu0 %3263
  %v3265 = vsel %vm669, %v3241, -inf
  %3266 = vmax.xlane.f32.xlu0 %v3265
  %v3267 = vpop.xlane.xlu0 %3266
  %v3268 = vsub.f32 %v3206, %v3246
  %v3269 = vsub.f32 %v3211, %v3249
  %v3270 = vsub.f32 %v3216, %v3252
  %v3271 = vsub.f32 %v3221, %v3255
  %v3272 = vsub.f32 %v3226, %v3258
  %v3273 = vsub.f32 %v3231, %v3261
  %v3274 = vsub.f32 %v3236, %v3264
  %v3275 = vsub.f32 %v3241, %v3267
  %v3276 = vmul.f32 %v3268, 1.442695
  %v3277 = vpow.pop %v3276
  %v3278 = vmul.f32 %v3269, 1.442695
  %v3279 = vpow.pop %v3278
  %v3280 = vmul.f32 %v3270, 1.442695
  %v3281 = vpow.pop %v3280
  %v3282 = vmul.f32 %v3271, 1.442695
  %v3283 = vpow.pop %v3282
  %v3284 = vmul.f32 %v3272, 1.442695
  %v3285 = vpow.pop %v3284
  %v3286 = vmul.f32 %v3273, 1.442695
  %v3287 = vpow.pop %v3286
  %v3288 = vmul.f32 %v3274, 1.442695
  %v3289 = vpow.pop %v3288
  %v3290 = vmul.f32 %v3275, 1.442695
  %v3291 = vpow.pop %v3290
  %3292 = vrot.lane.b32.xlu0 %v469, 48
  %v3293 = vpop.permute.xlu0 %3292
  %3294 = vrot.lane.b32.xlu0 %v474, 48
  %v3295 = vpop.permute.xlu0 %3294
  %3296 = vrot.lane.b32.xlu0 %v479, 48
  %v3297 = vpop.permute.xlu0 %3296
  %3298 = vrot.lane.b32.xlu0 %v484, 48
  %v3299 = vpop.permute.xlu0 %3298
  %3300 = vrot.lane.b32.xlu0 %v489, 48
  %v3301 = vpop.permute.xlu0 %3300
  %3302 = vrot.lane.b32.xlu0 %v494, 48
  %v3303 = vpop.permute.xlu0 %3302
  %3304 = vrot.lane.b32.xlu0 %v499, 48
  %v3305 = vpop.permute.xlu0 %3304
  %3306 = vrot.lane.b32.xlu0 %v504, 48
  %v3307 = vpop.permute.xlu0 %3306
  %v3317 = vsel %vm669, %v3277, 0
  %v3320 = vsel %vm669, %v3279, 0
  %v3323 = vsel %vm669, %v3281, 0
  %v3326 = vsel %vm669, %v3283, 0
  %v3329 = vsel %vm669, %v3285, 0
  %v3332 = vsel %vm669, %v3287, 0
  %v3335 = vsel %vm669, %v3289, 0
  %v3338 = vsel %vm669, %v3291, 0
  %3340 = vmatprep.subr.mxu0 0.0
  %3341 = vmatpush1.msra.mxu0 0.0
  %3342 = vmatprep.subr.mxu0 0.0
  %3343 = vmatpush1.msra.mxu0 0.0
  %3344 = vmatprep.subr.mxu0 0.0
  %3345 = vmatpush1.msra.mxu0 0.0
  %3346 = vmatprep.subr.mxu0 0.0
  %3347 = vmatpush1.msra.mxu0 0.0
  %3348 = vmatprep.subr.mxu0 0.0
  %3349 = vmatpush1.msra.mxu0 0.0
  %3350 = vmatprep.subr.mxu0 0.0
  %3351 = vmatpush1.msra.mxu0 0.0
  %3352 = vmatprep.subr.mxu0 0.0
  %3353 = vmatpush1.msra.mxu0 0.0
  %3354 = vmatprep.subr.mxu0 0.0
  %3355 = vmatpush1.msra.mxu0 0.0
  %3356 = vmatprep.subr.mxu0 0.0
  %3357 = vmatpush1.msra.mxu0 %v3307
  %3358 = vmatprep.subr.mxu0 0.0
  %3359 = vmatpush1.msra.mxu0 %v3305
  %3360 = vmatprep.subr.mxu0 0.0
  %3361 = vmatpush1.msra.mxu0 %v3303
  %3362 = vmatprep.subr.mxu0 0.0
  %3363 = vmatpush1.msra.mxu0 %v3301
  %3364 = vmatprep.subr.mxu0 0.0
  %3365 = vmatpush1.msra.mxu0 %v3299
  %3366 = vmatprep.subr.mxu0 0.0
  %3367 = vmatpush1.msra.mxu0 %v3297
  %3368 = vmatprep.subr.mxu0 0.0
  %3369 = vmatpush1.msra.mxu0 %v3295
  %3370 = vmatprep.subr.mxu0 0.0
  %3371 = vmatpush1.msra.mxu0 %v3293
  %3372 = vmatprep.subr.mxu0 0.0
  %3373 = vmatpush2.msra.mxu0 0.0
  %3374 = vmatprep.subr.mxu0 0.0
  %3375 = vmatpush2.msra.mxu0 0.0
  %3376 = vmatprep.subr.mxu0 0.0
  %3377 = vmatpush2.msra.mxu0 0.0
  %3378 = vmatprep.subr.mxu0 0.0
  %3379 = vmatpush2.msra.mxu0 0.0
  %3380 = vmatprep.subr.mxu0 0.0
  %3381 = vmatpush2.msra.mxu0 0.0
  %3382 = vmatprep.subr.mxu0 0.0
  %3383 = vmatpush2.msra.mxu0 0.0
  %3384 = vmatprep.subr.mxu0 0.0
  %3385 = vmatpush2.msra.mxu0 0.0
  %3386 = vmatprep.subr.mxu0 0.0
  %3387 = vmatpush2.msra.mxu0 0.0
  %3388 = vmatprep.subr.mxu0 0.0
  %3389 = vmatpush2.msra.mxu0 0.0
  %3390 = vmatprep.subr.mxu0 0.0
  %3391 = vmatpush2.msra.mxu0 0.0
  %3392 = vmatprep.subr.mxu0 0.0
  %3393 = vmatpush2.msra.mxu0 0.0
  %3394 = vmatprep.subr.mxu0 0.0
  %3395 = vmatpush2.msra.mxu0 0.0
  %3396 = vmatprep.subr.mxu0 0.0
  %3397 = vmatpush2.msra.mxu0 0.0
  %3398 = vmatprep.subr.mxu0 0.0
  %3399 = vmatpush2.msra.mxu0 0.0
  %3400 = vmatprep.subr.mxu0 0.0
  %3401 = vmatpush2.msra.mxu0 0.0
  %3402 = vmatprep.subr.mxu0 0.0
  %3403 = vmatpush2.msra.mxu0 0.0
  %3404 = vmatprep.mubr.f32.mxu0 0.0
  %3405 = vmatmul.mubr.f32.gmra.mxu0 %v3317
  %v3406 = vpop.f32.mrf.mxu0
  %v3407 = vadd.f32 0.0, %v3406
  %v3408 = vpop.f32.mrf.mxu0
  %3409 = vmatprep.mubr.f32.mxu0 0.0
  %3410 = vmatmul.mubr.f32.gmra.mxu0 %v3320
  %v3411 = vpop.f32.mrf.mxu0
  %v3412 = vadd.f32 0.0, %v3411
  %v3413 = vpop.f32.mrf.mxu0
  %3414 = vmatprep.mubr.f32.mxu0 0.0
  %3415 = vmatmul.mubr.f32.gmra.mxu0 %v3323
  %v3416 = vpop.f32.mrf.mxu0
  %v3417 = vadd.f32 0.0, %v3416
  %v3418 = vpop.f32.mrf.mxu0
  %3419 = vmatprep.mubr.f32.mxu0 0.0
  %3420 = vmatmul.mubr.f32.gmra.mxu0 %v3326
  %v3421 = vpop.f32.mrf.mxu0
  %v3422 = vadd.f32 0.0, %v3421
  %v3423 = vpop.f32.mrf.mxu0
  %3424 = vmatprep.mubr.f32.mxu0 0.0
  %3425 = vmatmul.mubr.f32.gmra.mxu0 %v3329
  %v3426 = vpop.f32.mrf.mxu0
  %v3427 = vadd.f32 0.0, %v3426
  %v3428 = vpop.f32.mrf.mxu0
  %3429 = vmatprep.mubr.f32.mxu0 0.0
  %3430 = vmatmul.mubr.f32.gmra.mxu0 %v3332
  %v3431 = vpop.f32.mrf.mxu0
  %v3432 = vadd.f32 0.0, %v3431
  %v3433 = vpop.f32.mrf.mxu0
  %3434 = vmatprep.mubr.f32.mxu0 0.0
  %3435 = vmatmul.mubr.f32.gmra.mxu0 %v3335
  %v3436 = vpop.f32.mrf.mxu0
  %v3437 = vadd.f32 0.0, %v3436
  %v3438 = vpop.f32.mrf.mxu0
  %3439 = vmatprep.mubr.f32.mxu0 0.0
  %3440 = vmatmul.mubr.f32.gmra.mxu0 %v3338
  %v3441 = vpop.f32.mrf.mxu0
  %v3442 = vadd.f32 0.0, %v3441
  %v3443 = vpop.f32.mrf.mxu0
  %3444 = vdwg.mxu0
  %v3445 = vsel %vm669, %v3277, 0.0
  %3446 = vadd.xlane.f32.xlu0 %v3445
  %v3447 = vpop.xlane.xlu0 %3446
  %v3448 = vsel %vm669, %v3279, 0.0
  %3449 = vadd.xlane.f32.xlu0 %v3448
  %v3450 = vpop.xlane.xlu0 %3449
  %v3451 = vsel %vm669, %v3281, 0.0
  %3452 = vadd.xlane.f32.xlu0 %v3451
  %v3453 = vpop.xlane.xlu0 %3452
  %v3454 = vsel %vm669, %v3283, 0.0
  %3455 = vadd.xlane.f32.xlu0 %v3454
  %v3456 = vpop.xlane.xlu0 %3455
  %v3457 = vsel %vm669, %v3285, 0.0
  %3458 = vadd.xlane.f32.xlu0 %v3457
  %v3459 = vpop.xlane.xlu0 %3458
  %v3460 = vsel %vm669, %v3287, 0.0
  %3461 = vadd.xlane.f32.xlu0 %v3460
  %v3462 = vpop.xlane.xlu0 %3461
  %v3463 = vsel %vm669, %v3289, 0.0
  %3464 = vadd.xlane.f32.xlu0 %v3463
  %v3465 = vpop.xlane.xlu0 %3464
  %v3466 = vsel %vm669, %v3291, 0.0
  %3467 = vadd.xlane.f32.xlu0 %v3466
  %v3468 = vpop.xlane.xlu0 %3467
  %v3469 = vrcp.pop %v3447
  %v3470 = vmul.f32 %v3407, %v3469
  %v3471 = vrcp.pop %v3450
  %v3472 = vmul.f32 %v3412, %v3471
  %v3473 = vrcp.pop %v3453
  %v3474 = vmul.f32 %v3417, %v3473
  %v3475 = vrcp.pop %v3456
  %v3476 = vmul.f32 %v3422, %v3475
  %v3477 = vrcp.pop %v3459
  %v3478 = vmul.f32 %v3427, %v3477
  %v3479 = vrcp.pop %v3462
  %v3480 = vmul.f32 %v3432, %v3479
  %v3481 = vrcp.pop %v3465
  %v3482 = vmul.f32 %v3437, %v3481
  %v3483 = vrcp.pop %v3468
  %v3484 = vmul.f32 %v3442, %v3483
  %3485 = vrot.lane.b32.xlu0 %v469, 104
  %v3486 = vpop.permute.xlu0 %3485
  %3487 = vrot.lane.b32.xlu0 %v474, 104
  %v3488 = vpop.permute.xlu0 %3487
  %3489 = vrot.lane.b32.xlu0 %v479, 104
  %v3490 = vpop.permute.xlu0 %3489
  %3491 = vrot.lane.b32.xlu0 %v484, 104
  %v3492 = vpop.permute.xlu0 %3491
  %3493 = vrot.lane.b32.xlu0 %v489, 104
  %v3494 = vpop.permute.xlu0 %3493
  %3495 = vrot.lane.b32.xlu0 %v494, 104
  %v3496 = vpop.permute.xlu0 %3495
  %3497 = vrot.lane.b32.xlu0 %v499, 104
  %v3498 = vpop.permute.xlu0 %3497
  %3499 = vrot.lane.b32.xlu0 %v504, 104
  %v3500 = vpop.permute.xlu0 %3499
  %3501 = vrot.lane.b32.xlu0 %v469, 72
  %v3502 = vpop.permute.xlu0 %3501
  %3503 = vrot.lane.b32.xlu0 %v474, 72
  %v3504 = vpop.permute.xlu0 %3503
  %3505 = vrot.lane.b32.xlu0 %v479, 72
  %v3506 = vpop.permute.xlu0 %3505
  %3507 = vrot.lane.b32.xlu0 %v484, 72
  %v3508 = vpop.permute.xlu0 %3507
  %3509 = vrot.lane.b32.xlu0 %v489, 72
  %v3510 = vpop.permute.xlu0 %3509
  %3511 = vrot.lane.b32.xlu0 %v494, 72
  %v3512 = vpop.permute.xlu0 %3511
  %3513 = vrot.lane.b32.xlu0 %v499, 72
  %v3514 = vpop.permute.xlu0 %3513
  %3515 = vrot.lane.b32.xlu0 %v504, 72
  %v3516 = vpop.permute.xlu0 %3515
  %v3517 = vsel %vm531, %v3486, 0
  %v3519 = vsel %vm531, %v3488, 0
  %v3521 = vsel %vm531, %v3490, 0
  %v3523 = vsel %vm531, %v3492, 0
  %v3525 = vsel %vm531, %v3494, 0
  %v3527 = vsel %vm531, %v3496, 0
  %v3529 = vsel %vm531, %v3498, 0
  %v3531 = vsel %vm531, %v3500, 0
  %v3533 = vsel %vm531, %v3502, 0
  %v3535 = vsel %vm531, %v3504, 0
  %v3537 = vsel %vm531, %v3506, 0
  %v3539 = vsel %vm531, %v3508, 0
  %v3541 = vsel %vm531, %v3510, 0
  %v3543 = vsel %vm531, %v3512, 0
  %v3545 = vsel %vm531, %v3514, 0
  %v3547 = vsel %vm531, %v3516, 0
  %3549 = vmatprep.subr.mxu0 0.0
  %3550 = vmatpush1.xpose.msra.mxu0 0.0
  %3551 = vmatprep.subr.mxu0 0.0
  %3552 = vmatpush1.xpose.msra.mxu0 0.0
  %3553 = vmatprep.subr.mxu0 0.0
  %3554 = vmatpush1.xpose.msra.mxu0 0.0
  %3555 = vmatprep.subr.mxu0 0.0
  %3556 = vmatpush1.xpose.msra.mxu0 0.0
  %3557 = vmatprep.subr.mxu0 0.0
  %3558 = vmatpush1.xpose.msra.mxu0 0.0
  %3559 = vmatprep.subr.mxu0 0.0
  %3560 = vmatpush1.xpose.msra.mxu0 0.0
  %3561 = vmatprep.subr.mxu0 0.0
  %3562 = vmatpush1.xpose.msra.mxu0 0.0
  %3563 = vmatprep.subr.mxu0 0.0
  %3564 = vmatpush1.xpose.msra.mxu0 0.0
  %3565 = vmatprep.subr.mxu0 0.0
  %3566 = vmatpush1.xpose.msra.mxu0 %v3547
  %3567 = vmatprep.subr.mxu0 0.0
  %3568 = vmatpush1.xpose.msra.mxu0 %v3545
  %3569 = vmatprep.subr.mxu0 0.0
  %3570 = vmatpush1.xpose.msra.mxu0 %v3543
  %3571 = vmatprep.subr.mxu0 0.0
  %3572 = vmatpush1.xpose.msra.mxu0 %v3541
  %3573 = vmatprep.subr.mxu0 0.0
  %3574 = vmatpush1.xpose.msra.mxu0 %v3539
  %3575 = vmatprep.subr.mxu0 0.0
  %3576 = vmatpush1.xpose.msra.mxu0 %v3537
  %3577 = vmatprep.subr.mxu0 0.0
  %3578 = vmatpush1.xpose.msra.mxu0 %v3535
  %3579 = vmatprep.subr.mxu0 0.0
  %3580 = vmatpush1.xpose.msra.mxu0 %v3533
  %3581 = vmatprep.subr.mxu0 0.0
  %3582 = vmatpush2.xpose.msra.mxu0 0.0
  %3583 = vmatprep.subr.mxu0 0.0
  %3584 = vmatpush2.xpose.msra.mxu0 0.0
  %3585 = vmatprep.subr.mxu0 0.0
  %3586 = vmatpush2.xpose.msra.mxu0 0.0
  %3587 = vmatprep.subr.mxu0 0.0
  %3588 = vmatpush2.xpose.msra.mxu0 0.0
  %3589 = vmatprep.subr.mxu0 0.0
  %3590 = vmatpush2.xpose.msra.mxu0 0.0
  %3591 = vmatprep.subr.mxu0 0.0
  %3592 = vmatpush2.xpose.msra.mxu0 0.0
  %3593 = vmatprep.subr.mxu0 0.0
  %3594 = vmatpush2.xpose.msra.mxu0 0.0
  %3595 = vmatprep.subr.mxu0 0.0
  %3596 = vmatpush2.xpose.msra.mxu0 0.0
  %3597 = vmatprep.subr.mxu0 0.0
  %3598 = vmatpush2.xpose.msra.mxu0 0.0
  %3599 = vmatprep.subr.mxu0 0.0
  %3600 = vmatpush2.xpose.msra.mxu0 0.0
  %3601 = vmatprep.subr.mxu0 0.0
  %3602 = vmatpush2.xpose.msra.mxu0 0.0
  %3603 = vmatprep.subr.mxu0 0.0
  %3604 = vmatpush2.xpose.msra.mxu0 0.0
  %3605 = vmatprep.subr.mxu0 0.0
  %3606 = vmatpush2.xpose.msra.mxu0 0.0
  %3607 = vmatprep.subr.mxu0 0.0
  %3608 = vmatpush2.xpose.msra.mxu0 0.0
  %3609 = vmatprep.subr.mxu0 0.0
  %3610 = vmatpush2.xpose.msra.mxu0 0.0
  %3611 = vmatprep.subr.mxu0 0.0
  %3612 = vmatpush2.xpose.msra.mxu0 0.0
  %3613 = vmatprep.mubr.f32.mxu0 0.0
  %3614 = vmatmul.mubr.f32.gmra.mxu0 %v3517
  %v3615 = vpop.f32.mrf.mxu0
  %v3616 = vadd.f32 0.0, %v3615
  %v3617 = vpop.f32.mrf.mxu0
  %3618 = vmatprep.mubr.f32.mxu0 0.0
  %3619 = vmatmul.mubr.f32.gmra.mxu0 %v3519
  %v3620 = vpop.f32.mrf.mxu0
  %v3621 = vadd.f32 0.0, %v3620
  %v3622 = vpop.f32.mrf.mxu0
  %3623 = vmatprep.mubr.f32.mxu0 0.0
  %3624 = vmatmul.mubr.f32.gmra.mxu0 %v3521
  %v3625 = vpop.f32.mrf.mxu0
  %v3626 = vadd.f32 0.0, %v3625
  %v3627 = vpop.f32.mrf.mxu0
  %3628 = vmatprep.mubr.f32.mxu0 0.0
  %3629 = vmatmul.mubr.f32.gmra.mxu0 %v3523
  %v3630 = vpop.f32.mrf.mxu0
  %v3631 = vadd.f32 0.0, %v3630
  %v3632 = vpop.f32.mrf.mxu0
  %3633 = vmatprep.mubr.f32.mxu0 0.0
  %3634 = vmatmul.mubr.f32.gmra.mxu0 %v3525
  %v3635 = vpop.f32.mrf.mxu0
  %v3636 = vadd.f32 0.0, %v3635
  %v3637 = vpop.f32.mrf.mxu0
  %3638 = vmatprep.mubr.f32.mxu0 0.0
  %3639 = vmatmul.mubr.f32.gmra.mxu0 %v3527
  %v3640 = vpop.f32.mrf.mxu0
  %v3641 = vadd.f32 0.0, %v3640
  %v3642 = vpop.f32.mrf.mxu0
  %3643 = vmatprep.mubr.f32.mxu0 0.0
  %3644 = vmatmul.mubr.f32.gmra.mxu0 %v3529
  %v3645 = vpop.f32.mrf.mxu0
  %v3646 = vadd.f32 0.0, %v3645
  %v3647 = vpop.f32.mrf.mxu0
  %3648 = vmatprep.mubr.f32.mxu0 0.0
  %3649 = vmatmul.mubr.f32.gmra.mxu0 %v3531
  %v3650 = vpop.f32.mrf.mxu0
  %v3651 = vadd.f32 0.0, %v3650
  %v3652 = vpop.f32.mrf.mxu0
  %3653 = vdwg.mxu0
  %v3654 = vsel %vm669, %v3616, -inf
  %3655 = vmax.xlane.f32.xlu0 %v3654
  %v3656 = vpop.xlane.xlu0 %3655
  %v3657 = vsel %vm669, %v3621, -inf
  %3658 = vmax.xlane.f32.xlu0 %v3657
  %v3659 = vpop.xlane.xlu0 %3658
  %v3660 = vsel %vm669, %v3626, -inf
  %3661 = vmax.xlane.f32.xlu0 %v3660
  %v3662 = vpop.xlane.xlu0 %3661
  %v3663 = vsel %vm669, %v3631, -inf
  %3664 = vmax.xlane.f32.xlu0 %v3663
  %v3665 = vpop.xlane.xlu0 %3664
  %v3666 = vsel %vm669, %v3636, -inf
  %3667 = vmax.xlane.f32.xlu0 %v3666
  %v3668 = vpop.xlane.xlu0 %3667
  %v3669 = vsel %vm669, %v3641, -inf
  %3670 = vmax.xlane.f32.xlu0 %v3669
  %v3671 = vpop.xlane.xlu0 %3670
  %v3672 = vsel %vm669, %v3646, -inf
  %3673 = vmax.xlane.f32.xlu0 %v3672
  %v3674 = vpop.xlane.xlu0 %3673
  %v3675 = vsel %vm669, %v3651, -inf
  %3676 = vmax.xlane.f32.xlu0 %v3675
  %v3677 = vpop.xlane.xlu0 %3676
  %v3678 = vsub.f32 %v3616, %v3656
  %v3679 = vsub.f32 %v3621, %v3659
  %v3680 = vsub.f32 %v3626, %v3662
  %v3681 = vsub.f32 %v3631, %v3665
  %v3682 = vsub.f32 %v3636, %v3668
  %v3683 = vsub.f32 %v3641, %v3671
  %v3684 = vsub.f32 %v3646, %v3674
  %v3685 = vsub.f32 %v3651, %v3677
  %v3686 = vmul.f32 %v3678, 1.442695
  %v3687 = vpow.pop %v3686
  %v3688 = vmul.f32 %v3679, 1.442695
  %v3689 = vpow.pop %v3688
  %v3690 = vmul.f32 %v3680, 1.442695
  %v3691 = vpow.pop %v3690
  %v3692 = vmul.f32 %v3681, 1.442695
  %v3693 = vpow.pop %v3692
  %v3694 = vmul.f32 %v3682, 1.442695
  %v3695 = vpow.pop %v3694
  %v3696 = vmul.f32 %v3683, 1.442695
  %v3697 = vpow.pop %v3696
  %v3698 = vmul.f32 %v3684, 1.442695
  %v3699 = vpow.pop %v3698
  %v3700 = vmul.f32 %v3685, 1.442695
  %v3701 = vpow.pop %v3700
  %3702 = vrot.lane.b32.xlu0 %v469, 40
  %v3703 = vpop.permute.xlu0 %3702
  %3704 = vrot.lane.b32.xlu0 %v474, 40
  %v3705 = vpop.permute.xlu0 %3704
  %3706 = vrot.lane.b32.xlu0 %v479, 40
  %v3707 = vpop.permute.xlu0 %3706
  %3708 = vrot.lane.b32.xlu0 %v484, 40
  %v3709 = vpop.permute.xlu0 %3708
  %3710 = vrot.lane.b32.xlu0 %v489, 40
  %v3711 = vpop.permute.xlu0 %3710
  %3712 = vrot.lane.b32.xlu0 %v494, 40
  %v3713 = vpop.permute.xlu0 %3712
  %3714 = vrot.lane.b32.xlu0 %v499, 40
  %v3715 = vpop.permute.xlu0 %3714
  %3716 = vrot.lane.b32.xlu0 %v504, 40
  %v3717 = vpop.permute.xlu0 %3716
  %v3727 = vsel %vm669, %v3687, 0
  %v3730 = vsel %vm669, %v3689, 0
  %v3733 = vsel %vm669, %v3691, 0
  %v3736 = vsel %vm669, %v3693, 0
  %v3739 = vsel %vm669, %v3695, 0
  %v3742 = vsel %vm669, %v3697, 0
  %v3745 = vsel %vm669, %v3699, 0
  %v3748 = vsel %vm669, %v3701, 0
  %3750 = vmatprep.subr.mxu0 0.0
  %3751 = vmatpush1.msra.mxu0 0.0
  %3752 = vmatprep.subr.mxu0 0.0
  %3753 = vmatpush1.msra.mxu0 0.0
  %3754 = vmatprep.subr.mxu0 0.0
  %3755 = vmatpush1.msra.mxu0 0.0
  %3756 = vmatprep.subr.mxu0 0.0
  %3757 = vmatpush1.msra.mxu0 0.0
  %3758 = vmatprep.subr.mxu0 0.0
  %3759 = vmatpush1.msra.mxu0 0.0
  %3760 = vmatprep.subr.mxu0 0.0
  %3761 = vmatpush1.msra.mxu0 0.0
  %3762 = vmatprep.subr.mxu0 0.0
  %3763 = vmatpush1.msra.mxu0 0.0
  %3764 = vmatprep.subr.mxu0 0.0
  %3765 = vmatpush1.msra.mxu0 0.0
  %3766 = vmatprep.subr.mxu0 0.0
  %3767 = vmatpush1.msra.mxu0 %v3717
  %3768 = vmatprep.subr.mxu0 0.0
  %3769 = vmatpush1.msra.mxu0 %v3715
  %3770 = vmatprep.subr.mxu0 0.0
  %3771 = vmatpush1.msra.mxu0 %v3713
  %3772 = vmatprep.subr.mxu0 0.0
  %3773 = vmatpush1.msra.mxu0 %v3711
  %3774 = vmatprep.subr.mxu0 0.0
  %3775 = vmatpush1.msra.mxu0 %v3709
  %3776 = vmatprep.subr.mxu0 0.0
  %3777 = vmatpush1.msra.mxu0 %v3707
  %3778 = vmatprep.subr.mxu0 0.0
  %3779 = vmatpush1.msra.mxu0 %v3705
  %3780 = vmatprep.subr.mxu0 0.0
  %3781 = vmatpush1.msra.mxu0 %v3703
  %3782 = vmatprep.subr.mxu0 0.0
  %3783 = vmatpush2.msra.mxu0 0.0
  %3784 = vmatprep.subr.mxu0 0.0
  %3785 = vmatpush2.msra.mxu0 0.0
  %3786 = vmatprep.subr.mxu0 0.0
  %3787 = vmatpush2.msra.mxu0 0.0
  %3788 = vmatprep.subr.mxu0 0.0
  %3789 = vmatpush2.msra.mxu0 0.0
  %3790 = vmatprep.subr.mxu0 0.0
  %3791 = vmatpush2.msra.mxu0 0.0
  %3792 = vmatprep.subr.mxu0 0.0
  %3793 = vmatpush2.msra.mxu0 0.0
  %3794 = vmatprep.subr.mxu0 0.0
  %3795 = vmatpush2.msra.mxu0 0.0
  %3796 = vmatprep.subr.mxu0 0.0
  %3797 = vmatpush2.msra.mxu0 0.0
  %3798 = vmatprep.subr.mxu0 0.0
  %3799 = vmatpush2.msra.mxu0 0.0
  %3800 = vmatprep.subr.mxu0 0.0
  %3801 = vmatpush2.msra.mxu0 0.0
  %3802 = vmatprep.subr.mxu0 0.0
  %3803 = vmatpush2.msra.mxu0 0.0
  %3804 = vmatprep.subr.mxu0 0.0
  %3805 = vmatpush2.msra.mxu0 0.0
  %3806 = vmatprep.subr.mxu0 0.0
  %3807 = vmatpush2.msra.mxu0 0.0
  %3808 = vmatprep.subr.mxu0 0.0
  %3809 = vmatpush2.msra.mxu0 0.0
  %3810 = vmatprep.subr.mxu0 0.0
  %3811 = vmatpush2.msra.mxu0 0.0
  %3812 = vmatprep.subr.mxu0 0.0
  %3813 = vmatpush2.msra.mxu0 0.0
  %3814 = vmatprep.mubr.f32.mxu0 0.0
  %3815 = vmatmul.mubr.f32.gmra.mxu0 %v3727
  %v3816 = vpop.f32.mrf.mxu0
  %v3817 = vadd.f32 0.0, %v3816
  %v3818 = vpop.f32.mrf.mxu0
  %3819 = vmatprep.mubr.f32.mxu0 0.0
  %3820 = vmatmul.mubr.f32.gmra.mxu0 %v3730
  %v3821 = vpop.f32.mrf.mxu0
  %v3822 = vadd.f32 0.0, %v3821
  %v3823 = vpop.f32.mrf.mxu0
  %3824 = vmatprep.mubr.f32.mxu0 0.0
  %3825 = vmatmul.mubr.f32.gmra.mxu0 %v3733
  %v3826 = vpop.f32.mrf.mxu0
  %v3827 = vadd.f32 0.0, %v3826
  %v3828 = vpop.f32.mrf.mxu0
  %3829 = vmatprep.mubr.f32.mxu0 0.0
  %3830 = vmatmul.mubr.f32.gmra.mxu0 %v3736
  %v3831 = vpop.f32.mrf.mxu0
  %v3832 = vadd.f32 0.0, %v3831
  %v3833 = vpop.f32.mrf.mxu0
  %3834 = vmatprep.mubr.f32.mxu0 0.0
  %3835 = vmatmul.mubr.f32.gmra.mxu0 %v3739
  %v3836 = vpop.f32.mrf.mxu0
  %v3837 = vadd.f32 0.0, %v3836
  %v3838 = vpop.f32.mrf.mxu0
  %3839 = vmatprep.mubr.f32.mxu0 0.0
  %3840 = vmatmul.mubr.f32.gmra.mxu0 %v3742
  %v3841 = vpop.f32.mrf.mxu0
  %v3842 = vadd.f32 0.0, %v3841
  %v3843 = vpop.f32.mrf.mxu0
  %3844 = vmatprep.mubr.f32.mxu0 0.0
  %3845 = vmatmul.mubr.f32.gmra.mxu0 %v3745
  %v3846 = vpop.f32.mrf.mxu0
  %v3847 = vadd.f32 0.0, %v3846
  %v3848 = vpop.f32.mrf.mxu0
  %3849 = vmatprep.mubr.f32.mxu0 0.0
  %3850 = vmatmul.mubr.f32.gmra.mxu0 %v3748
  %v3851 = vpop.f32.mrf.mxu0
  %v3852 = vadd.f32 0.0, %v3851
  %v3853 = vpop.f32.mrf.mxu0
  %3854 = vdwg.mxu0
  %v3855 = vsel %vm669, %v3687, 0.0
  %3856 = vadd.xlane.f32.xlu0 %v3855
  %v3857 = vpop.xlane.xlu0 %3856
  %v3858 = vsel %vm669, %v3689, 0.0
  %3859 = vadd.xlane.f32.xlu0 %v3858
  %v3860 = vpop.xlane.xlu0 %3859
  %v3861 = vsel %vm669, %v3691, 0.0
  %3862 = vadd.xlane.f32.xlu0 %v3861
  %v3863 = vpop.xlane.xlu0 %3862
  %v3864 = vsel %vm669, %v3693, 0.0
  %3865 = vadd.xlane.f32.xlu0 %v3864
  %v3866 = vpop.xlane.xlu0 %3865
  %v3867 = vsel %vm669, %v3695, 0.0
  %3868 = vadd.xlane.f32.xlu0 %v3867
  %v3869 = vpop.xlane.xlu0 %3868
  %v3870 = vsel %vm669, %v3697, 0.0
  %3871 = vadd.xlane.f32.xlu0 %v3870
  %v3872 = vpop.xlane.xlu0 %3871
  %v3873 = vsel %vm669, %v3699, 0.0
  %3874 = vadd.xlane.f32.xlu0 %v3873
  %v3875 = vpop.xlane.xlu0 %3874
  %v3876 = vsel %vm669, %v3701, 0.0
  %3877 = vadd.xlane.f32.xlu0 %v3876
  %v3878 = vpop.xlane.xlu0 %3877
  %v3879 = vrcp.pop %v3857
  %v3880 = vmul.f32 %v3817, %v3879
  %v3881 = vrcp.pop %v3860
  %v3882 = vmul.f32 %v3822, %v3881
  %v3883 = vrcp.pop %v3863
  %v3884 = vmul.f32 %v3827, %v3883
  %v3885 = vrcp.pop %v3866
  %v3886 = vmul.f32 %v3832, %v3885
  %v3887 = vrcp.pop %v3869
  %v3888 = vmul.f32 %v3837, %v3887
  %v3889 = vrcp.pop %v3872
  %v3890 = vmul.f32 %v3842, %v3889
  %v3891 = vrcp.pop %v3875
  %v3892 = vmul.f32 %v3847, %v3891
  %v3893 = vrcp.pop %v3878
  %v3894 = vmul.f32 %v3852, %v3893
  %3903 = vrot.lane.b32.xlu0 %v3060, 8
  %v3904 = vpop.permute.xlu0 %3903
  %3905 = vrot.lane.b32.xlu0 %v3062, 8
  %v3906 = vpop.permute.xlu0 %3905
  %3907 = vrot.lane.b32.xlu0 %v3064, 8
  %v3908 = vpop.permute.xlu0 %3907
  %3909 = vrot.lane.b32.xlu0 %v3066, 8
  %v3910 = vpop.permute.xlu0 %3909
  %3911 = vrot.lane.b32.xlu0 %v3068, 8
  %v3912 = vpop.permute.xlu0 %3911
  %3913 = vrot.lane.b32.xlu0 %v3070, 8
  %v3914 = vpop.permute.xlu0 %3913
  %3915 = vrot.lane.b32.xlu0 %v3072, 8
  %v3916 = vpop.permute.xlu0 %3915
  %3917 = vrot.lane.b32.xlu0 %v3074, 8
  %v3918 = vpop.permute.xlu0 %3917
  %3935 = vrot.lane.b32.xlu0 %v3470, 16
  %v3936 = vpop.permute.xlu0 %3935
  %3937 = vrot.lane.b32.xlu0 %v3472, 16
  %v3938 = vpop.permute.xlu0 %3937
  %3939 = vrot.lane.b32.xlu0 %v3474, 16
  %v3940 = vpop.permute.xlu0 %3939
  %3941 = vrot.lane.b32.xlu0 %v3476, 16
  %v3942 = vpop.permute.xlu0 %3941
  %3943 = vrot.lane.b32.xlu0 %v3478, 16
  %v3944 = vpop.permute.xlu0 %3943
  %3945 = vrot.lane.b32.xlu0 %v3480, 16
  %v3946 = vpop.permute.xlu0 %3945
  %3947 = vrot.lane.b32.xlu0 %v3482, 16
  %v3948 = vpop.permute.xlu0 %3947
  %3949 = vrot.lane.b32.xlu0 %v3484, 16
  %v3950 = vpop.permute.xlu0 %3949
  %3967 = vrot.lane.b32.xlu0 %v3880, 24
  %v3968 = vpop.permute.xlu0 %3967
  %3969 = vrot.lane.b32.xlu0 %v3882, 24
  %v3970 = vpop.permute.xlu0 %3969
  %3971 = vrot.lane.b32.xlu0 %v3884, 24
  %v3972 = vpop.permute.xlu0 %3971
  %3973 = vrot.lane.b32.xlu0 %v3886, 24
  %v3974 = vpop.permute.xlu0 %3973
  %3975 = vrot.lane.b32.xlu0 %v3888, 24
  %v3976 = vpop.permute.xlu0 %3975
  %3977 = vrot.lane.b32.xlu0 %v3890, 24
  %v3978 = vpop.permute.xlu0 %3977
  %3979 = vrot.lane.b32.xlu0 %v3892, 24
  %v3980 = vpop.permute.xlu0 %3979
  %3981 = vrot.lane.b32.xlu0 %v3894, 24
  %v3982 = vpop.permute.xlu0 %3981
  %v3991 = vsel %vm531, %v2650, %v3904
  %v3992 = vsel %vm531, %v2652, %v3906
  %v3993 = vsel %vm531, %v2654, %v3908
  %v3994 = vsel %vm531, %v2656, %v3910
  %v3995 = vsel %vm531, %v2658, %v3912
  %v3996 = vsel %vm531, %v2660, %v3914
  %v3997 = vsel %vm531, %v2662, %v3916
  %v3998 = vsel %vm531, %v2664, %v3918
  %v3999 = vsel %vm2245, %v3991, %v3936
  %v4000 = vsel %vm2245, %v3992, %v3938
  %v4001 = vsel %vm2245, %v3993, %v3940
  %v4002 = vsel %vm2245, %v3994, %v3942
  %v4003 = vsel %vm2245, %v3995, %v3944
  %v4004 = vsel %vm2245, %v3996, %v3946
  %v4005 = vsel %vm2245, %v3997, %v3948
  %v4006 = vsel %vm2245, %v3998, %v3950
  %v4007 = vsel %vm2254, %v3999, %v3968
  %v4008 = vsel %vm2254, %v4000, %v3970
  %v4009 = vsel %vm2254, %v4001, %v3972
  %v4010 = vsel %vm2254, %v4002, %v3974
  %v4011 = vsel %vm2254, %v4003, %v3976
  %v4012 = vsel %vm2254, %v4004, %v3978
  %v4013 = vsel %vm2254, %v4005, %v3980
  %v4014 = vsel %vm2254, %v4006, %v3982
  %v4015 = vld [vmem:[%s2] sm:$0xff]
  %v4016 = vld [vmem:[%s2 + $0x8] sm:$0xff]
  %v4017 = vld [vmem:[%s2 + $0x10] sm:$0xff]
  %v4018 = vld [vmem:[%s2 + $0x18] sm:$0xff]
  %v4020 = vsel %vm54, %v2255, 0
  %v4023 = vsel %vm54, %v2256, 0
  %v4026 = vsel %vm54, %v2257, 0
  %v4029 = vsel %vm54, %v2258, 0
  %v4032 = vsel %vm54, %v2259, 0
  %v4035 = vsel %vm54, %v2260, 0
  %v4038 = vsel %vm54, %v2261, 0
  %v4041 = vsel %vm54, %v2262, 0
  %v4044 = vsel %vm54, %v4007, 0
  %v4047 = vsel %vm54, %v4008, 0
  %v4050 = vsel %vm54, %v4009, 0
  %v4053 = vsel %vm54, %v4010, 0
  %v4056 = vsel %vm54, %v4011, 0
  %v4059 = vsel %vm54, %v4012, 0
  %v4062 = vsel %vm54, %v4013, 0
  %v4065 = vsel %vm54, %v4014, 0
  %4067 = vmatprep.subr.mxu0 0.0
  %4068 = vmatpush1.msra.mxu0 0.0
  %4069 = vmatprep.subr.mxu0 0.0
  %4070 = vmatpush1.msra.mxu0 0.0
  %4071 = vmatprep.subr.mxu0 0.0
  %4072 = vmatpush1.msra.mxu0 0.0
  %4073 = vmatprep.subr.mxu0 0.0
  %4074 = vmatpush1.msra.mxu0 0.0
  %4075 = vmatprep.subr.mxu0 0.0
  %4076 = vmatpush1.msra.mxu0 0.0
  %4077 = vmatprep.subr.mxu0 0.0
  %4078 = vmatpush1.msra.mxu0 0.0
  %4079 = vmatprep.subr.mxu0 0.0
  %4080 = vmatpush1.msra.mxu0 0.0
  %4081 = vmatprep.subr.mxu0 0.0
  %4082 = vmatpush1.msra.mxu0 0.0
  %4083 = vmatprep.subr.mxu0 0.0
  %4084 = vmatpush1.msra.mxu0 0.0
  %4085 = vmatprep.subr.mxu0 0.0
  %4086 = vmatpush1.msra.mxu0 0.0
  %4087 = vmatprep.subr.mxu0 0.0
  %4088 = vmatpush1.msra.mxu0 0.0
  %4089 = vmatprep.subr.mxu0 0.0
  %4090 = vmatpush1.msra.mxu0 0.0
  %4091 = vmatprep.subr.mxu0 0.0
  %4092 = vmatpush1.msra.mxu0 %v4018
  %4093 = vmatprep.subr.mxu0 0.0
  %4094 = vmatpush1.msra.mxu0 %v4017
  %4095 = vmatprep.subr.mxu0 0.0
  %4096 = vmatpush1.msra.mxu0 %v4016
  %4097 = vmatprep.subr.mxu0 0.0
  %4098 = vmatpush1.msra.mxu0 %v4015
  %4099 = vmatprep.subr.mxu0 0.0
  %4100 = vmatpush2.msra.mxu0 0.0
  %4101 = vmatprep.subr.mxu0 0.0
  %4102 = vmatpush2.msra.mxu0 0.0
  %4103 = vmatprep.subr.mxu0 0.0
  %4104 = vmatpush2.msra.mxu0 0.0
  %4105 = vmatprep.subr.mxu0 0.0
  %4106 = vmatpush2.msra.mxu0 0.0
  %4107 = vmatprep.subr.mxu0 0.0
  %4108 = vmatpush2.msra.mxu0 0.0
  %4109 = vmatprep.subr.mxu0 0.0
  %4110 = vmatpush2.msra.mxu0 0.0
  %4111 = vmatprep.subr.mxu0 0.0
  %4112 = vmatpush2.msra.mxu0 0.0
  %4113 = vmatprep.subr.mxu0 0.0
  %4114 = vmatpush2.msra.mxu0 0.0
  %4115 = vmatprep.subr.mxu0 0.0
  %4116 = vmatpush2.msra.mxu0 0.0
  %4117 = vmatprep.subr.mxu0 0.0
  %4118 = vmatpush2.msra.mxu0 0.0
  %4119 = vmatprep.subr.mxu0 0.0
  %4120 = vmatpush2.msra.mxu0 0.0
  %4121 = vmatprep.subr.mxu0 0.0
  %4122 = vmatpush2.msra.mxu0 0.0
  %4123 = vmatprep.subr.mxu0 0.0
  %4124 = vmatpush2.msra.mxu0 0.0
  %4125 = vmatprep.subr.mxu0 0.0
  %4126 = vmatpush2.msra.mxu0 0.0
  %4127 = vmatprep.subr.mxu0 0.0
  %4128 = vmatpush2.msra.mxu0 0.0
  %4129 = vmatprep.subr.mxu0 0.0
  %4130 = vmatpush2.msra.mxu0 0.0
  %4131 = vmatprep.mubr.f32.mxu0 0.0
  %4132 = vmatmul.mubr.f32.gmra.mxu0 %v4020
  %v4133 = vpop.f32.mrf.mxu0
  %v4134 = vadd.f32 0.0, %v4133
  %v4135 = vpop.f32.mrf.mxu0
  %4136 = vmatprep.mubr.f32.mxu0 0.0
  %4137 = vmatmul.mubr.f32.gmra.mxu0 %v4023
  %v4138 = vpop.f32.mrf.mxu0
  %v4139 = vadd.f32 0.0, %v4138
  %v4140 = vpop.f32.mrf.mxu0
  %4141 = vmatprep.mubr.f32.mxu0 0.0
  %4142 = vmatmul.mubr.f32.gmra.mxu0 %v4026
  %v4143 = vpop.f32.mrf.mxu0
  %v4144 = vadd.f32 0.0, %v4143
  %v4145 = vpop.f32.mrf.mxu0
  %4146 = vmatprep.mubr.f32.mxu0 0.0
  %4147 = vmatmul.mubr.f32.gmra.mxu0 %v4029
  %v4148 = vpop.f32.mrf.mxu0
  %v4149 = vadd.f32 0.0, %v4148
  %v4150 = vpop.f32.mrf.mxu0
  %4151 = vmatprep.mubr.f32.mxu0 0.0
  %4152 = vmatmul.mubr.f32.gmra.mxu0 %v4032
  %v4153 = vpop.f32.mrf.mxu0
  %v4154 = vadd.f32 0.0, %v4153
  %v4155 = vpop.f32.mrf.mxu0
  %4156 = vmatprep.mubr.f32.mxu0 0.0
  %4157 = vmatmul.mubr.f32.gmra.mxu0 %v4035
  %v4158 = vpop.f32.mrf.mxu0
  %v4159 = vadd.f32 0.0, %v4158
  %v4160 = vpop.f32.mrf.mxu0
  %4161 = vmatprep.mubr.f32.mxu0 0.0
  %4162 = vmatmul.mubr.f32.gmra.mxu0 %v4038
  %v4163 = vpop.f32.mrf.mxu0
  %v4164 = vadd.f32 0.0, %v4163
  %v4165 = vpop.f32.mrf.mxu0
  %4166 = vmatprep.mubr.f32.mxu0 0.0
  %4167 = vmatmul.mubr.f32.gmra.mxu0 %v4041
  %v4168 = vpop.f32.mrf.mxu0
  %v4169 = vadd.f32 0.0, %v4168
  %v4170 = vpop.f32.mrf.mxu0
  %4171 = vmatprep.mubr.f32.mxu0 0.0
  %4172 = vmatmul.mubr.f32.gmra.mxu0 %v4044
  %v4173 = vpop.f32.mrf.mxu0
  %v4174 = vadd.f32 0.0, %v4173
  %v4175 = vpop.f32.mrf.mxu0
  %4176 = vmatprep.mubr.f32.mxu0 0.0
  %4177 = vmatmul.mubr.f32.gmra.mxu0 %v4047
  %v4178 = vpop.f32.mrf.mxu0
  %v4179 = vadd.f32 0.0, %v4178
  %v4180 = vpop.f32.mrf.mxu0
  %4181 = vmatprep.mubr.f32.mxu0 0.0
  %4182 = vmatmul.mubr.f32.gmra.mxu0 %v4050
  %v4183 = vpop.f32.mrf.mxu0
  %v4184 = vadd.f32 0.0, %v4183
  %v4185 = vpop.f32.mrf.mxu0
  %4186 = vmatprep.mubr.f32.mxu0 0.0
  %4187 = vmatmul.mubr.f32.gmra.mxu0 %v4053
  %v4188 = vpop.f32.mrf.mxu0
  %v4189 = vadd.f32 0.0, %v4188
  %v4190 = vpop.f32.mrf.mxu0
  %4191 = vmatprep.mubr.f32.mxu0 0.0
  %4192 = vmatmul.mubr.f32.gmra.mxu0 %v4056
  %v4193 = vpop.f32.mrf.mxu0
  %v4194 = vadd.f32 0.0, %v4193
  %v4195 = vpop.f32.mrf.mxu0
  %4196 = vmatprep.mubr.f32.mxu0 0.0
  %4197 = vmatmul.mubr.f32.gmra.mxu0 %v4059
  %v4198 = vpop.f32.mrf.mxu0
  %v4199 = vadd.f32 0.0, %v4198
  %v4200 = vpop.f32.mrf.mxu0
  %4201 = vmatprep.mubr.f32.mxu0 0.0
  %4202 = vmatmul.mubr.f32.gmra.mxu0 %v4062
  %v4203 = vpop.f32.mrf.mxu0
  %v4204 = vadd.f32 0.0, %v4203
  %v4205 = vpop.f32.mrf.mxu0
  %4206 = vmatprep.mubr.f32.mxu0 0.0
  %4207 = vmatmul.mubr.f32.gmra.mxu0 %v4065
  %v4208 = vpop.f32.mrf.mxu0
  %v4209 = vadd.f32 0.0, %v4208
  %v4210 = vpop.f32.mrf.mxu0
  %4211 = vdwg.mxu0
  %v4212 = vadd.f32 %v38, %v4134
  %v4213 = vadd.f32 %v39, %v4139
  %v4214 = vadd.f32 %v40, %v4144
  %v4215 = vadd.f32 %v41, %v4149
  %v4216 = vadd.f32 %v42, %v4154
  %v4217 = vadd.f32 %v43, %v4159
  %v4218 = vadd.f32 %v44, %v4164
  %v4219 = vadd.f32 %v45, %v4169
  %v4220 = vadd.f32 %v46, %v4174
  %v4221 = vadd.f32 %v47, %v4179
  %v4222 = vadd.f32 %v48, %v4184
  %v4223 = vadd.f32 %v49, %v4189
  %v4224 = vadd.f32 %v50, %v4194
  %v4225 = vadd.f32 %v51, %v4199
  %v4226 = vadd.f32 %v52, %v4204
  %v4227 = vadd.f32 %v53, %v4209
  %v4228 = vsel %vm54, %v4212, 0.0
  %4229 = vadd.xlane.f32.xlu0 %v4228
  %v4230 = vpop.xlane.xlu0 %4229
  %v4231 = vsel %vm54, %v4213, 0.0
  %4232 = vadd.xlane.f32.xlu0 %v4231
  %v4233 = vpop.xlane.xlu0 %4232
  %v4234 = vsel %vm54, %v4214, 0.0
  %4235 = vadd.xlane.f32.xlu0 %v4234
  %v4236 = vpop.xlane.xlu0 %4235
  %v4237 = vsel %vm54, %v4215, 0.0
  %4238 = vadd.xlane.f32.xlu0 %v4237
  %v4239 = vpop.xlane.xlu0 %4238
  %v4240 = vsel %vm54, %v4216, 0.0
  %4241 = vadd.xlane.f32.xlu0 %v4240
  %v4242 = vpop.xlane.xlu0 %4241
  %v4243 = vsel %vm54, %v4217, 0.0
  %4244 = vadd.xlane.f32.xlu0 %v4243
  %v4245 = vpop.xlane.xlu0 %4244
  %v4246 = vsel %vm54, %v4218, 0.0
  %4247 = vadd.xlane.f32.xlu0 %v4246
  %v4248 = vpop.xlane.xlu0 %4247
  %v4249 = vsel %vm54, %v4219, 0.0
  %4250 = vadd.xlane.f32.xlu0 %v4249
  %v4251 = vpop.xlane.xlu0 %4250
  %v4252 = vsel %vm54, %v4220, 0.0
  %4253 = vadd.xlane.f32.xlu0 %v4252
  %v4254 = vpop.xlane.xlu0 %4253
  %v4255 = vsel %vm54, %v4221, 0.0
  %4256 = vadd.xlane.f32.xlu0 %v4255
  %v4257 = vpop.xlane.xlu0 %4256
  %v4258 = vsel %vm54, %v4222, 0.0
  %4259 = vadd.xlane.f32.xlu0 %v4258
  %v4260 = vpop.xlane.xlu0 %4259
  %v4261 = vsel %vm54, %v4223, 0.0
  %4262 = vadd.xlane.f32.xlu0 %v4261
  %v4263 = vpop.xlane.xlu0 %4262
  %v4264 = vsel %vm54, %v4224, 0.0
  %4265 = vadd.xlane.f32.xlu0 %v4264
  %v4266 = vpop.xlane.xlu0 %4265
  %v4267 = vsel %vm54, %v4225, 0.0
  %4268 = vadd.xlane.f32.xlu0 %v4267
  %v4269 = vpop.xlane.xlu0 %4268
  %v4270 = vsel %vm54, %v4226, 0.0
  %4271 = vadd.xlane.f32.xlu0 %v4270
  %v4272 = vpop.xlane.xlu0 %4271
  %v4273 = vsel %vm54, %v4227, 0.0
  %4274 = vadd.xlane.f32.xlu0 %v4273
  %v4275 = vpop.xlane.xlu0 %4274
  %v4276 = vmul.f32 %v4230, %v103
  %v4277 = vmul.f32 %v4233, %v103
  %v4278 = vmul.f32 %v4236, %v103
  %v4279 = vmul.f32 %v4239, %v103
  %v4280 = vmul.f32 %v4242, %v103
  %v4281 = vmul.f32 %v4245, %v103
  %v4282 = vmul.f32 %v4248, %v103
  %v4283 = vmul.f32 %v4251, %v103
  %v4284 = vmul.f32 %v4254, %v103
  %v4285 = vmul.f32 %v4257, %v103
  %v4286 = vmul.f32 %v4260, %v103
  %v4287 = vmul.f32 %v4263, %v103
  %v4288 = vmul.f32 %v4266, %v103
  %v4289 = vmul.f32 %v4269, %v103
  %v4290 = vmul.f32 %v4272, %v103
  %v4291 = vmul.f32 %v4275, %v103
  %v4292 = vsub.f32 %v4212, %v4276
  %v4293 = vsub.f32 %v4213, %v4277
  %v4294 = vsub.f32 %v4214, %v4278
  %v4295 = vsub.f32 %v4215, %v4279
  %v4296 = vsub.f32 %v4216, %v4280
  %v4297 = vsub.f32 %v4217, %v4281
  %v4298 = vsub.f32 %v4218, %v4282
  %v4299 = vsub.f32 %v4219, %v4283
  %v4300 = vsub.f32 %v4220, %v4284
  %v4301 = vsub.f32 %v4221, %v4285
  %v4302 = vsub.f32 %v4222, %v4286
  %v4303 = vsub.f32 %v4223, %v4287
  %v4304 = vsub.f32 %v4224, %v4288
  %v4305 = vsub.f32 %v4225, %v4289
  %v4306 = vsub.f32 %v4226, %v4290
  %v4307 = vsub.f32 %v4227, %v4291
  %v4308 = vmul.f32 %v4292, %v4292
  %v4309 = vmul.f32 %v4293, %v4293
  %v4310 = vmul.f32 %v4294, %v4294
  %v4311 = vmul.f32 %v4295, %v4295
  %v4312 = vmul.f32 %v4296, %v4296
  %v4313 = vmul.f32 %v4297, %v4297
  %v4314 = vmul.f32 %v4298, %v4298
  %v4315 = vmul.f32 %v4299, %v4299
  %v4316 = vmul.f32 %v4300, %v4300
  %v4317 = vmul.f32 %v4301, %v4301
  %v4318 = vmul.f32 %v4302, %v4302
  %v4319 = vmul.f32 %v4303, %v4303
  %v4320 = vmul.f32 %v4304, %v4304
  %v4321 = vmul.f32 %v4305, %v4305
  %v4322 = vmul.f32 %v4306, %v4306
  %v4323 = vmul.f32 %v4307, %v4307
  %v4324 = vsel %vm54, %v4308, 0.0
  %4325 = vadd.xlane.f32.xlu0 %v4324
  %v4326 = vpop.xlane.xlu0 %4325
  %v4327 = vsel %vm54, %v4309, 0.0
  %4328 = vadd.xlane.f32.xlu0 %v4327
  %v4329 = vpop.xlane.xlu0 %4328
  %v4330 = vsel %vm54, %v4310, 0.0
  %4331 = vadd.xlane.f32.xlu0 %v4330
  %v4332 = vpop.xlane.xlu0 %4331
  %v4333 = vsel %vm54, %v4311, 0.0
  %4334 = vadd.xlane.f32.xlu0 %v4333
  %v4335 = vpop.xlane.xlu0 %4334
  %v4336 = vsel %vm54, %v4312, 0.0
  %4337 = vadd.xlane.f32.xlu0 %v4336
  %v4338 = vpop.xlane.xlu0 %4337
  %v4339 = vsel %vm54, %v4313, 0.0
  %4340 = vadd.xlane.f32.xlu0 %v4339
  %v4341 = vpop.xlane.xlu0 %4340
  %v4342 = vsel %vm54, %v4314, 0.0
  %4343 = vadd.xlane.f32.xlu0 %v4342
  %v4344 = vpop.xlane.xlu0 %4343
  %v4345 = vsel %vm54, %v4315, 0.0
  %4346 = vadd.xlane.f32.xlu0 %v4345
  %v4347 = vpop.xlane.xlu0 %4346
  %v4348 = vsel %vm54, %v4316, 0.0
  %4349 = vadd.xlane.f32.xlu0 %v4348
  %v4350 = vpop.xlane.xlu0 %4349
  %v4351 = vsel %vm54, %v4317, 0.0
  %4352 = vadd.xlane.f32.xlu0 %v4351
  %v4353 = vpop.xlane.xlu0 %4352
  %v4354 = vsel %vm54, %v4318, 0.0
  %4355 = vadd.xlane.f32.xlu0 %v4354
  %v4356 = vpop.xlane.xlu0 %4355
  %v4357 = vsel %vm54, %v4319, 0.0
  %4358 = vadd.xlane.f32.xlu0 %v4357
  %v4359 = vpop.xlane.xlu0 %4358
  %v4360 = vsel %vm54, %v4320, 0.0
  %4361 = vadd.xlane.f32.xlu0 %v4360
  %v4362 = vpop.xlane.xlu0 %4361
  %v4363 = vsel %vm54, %v4321, 0.0
  %4364 = vadd.xlane.f32.xlu0 %v4363
  %v4365 = vpop.xlane.xlu0 %4364
  %v4366 = vsel %vm54, %v4322, 0.0
  %4367 = vadd.xlane.f32.xlu0 %v4366
  %v4368 = vpop.xlane.xlu0 %4367
  %v4369 = vsel %vm54, %v4323, 0.0
  %4370 = vadd.xlane.f32.xlu0 %v4369
  %v4371 = vpop.xlane.xlu0 %4370
  %v4372 = vmul.f32 %v4326, %v103
  %v4373 = vmul.f32 %v4329, %v103
  %v4374 = vmul.f32 %v4332, %v103
  %v4375 = vmul.f32 %v4335, %v103
  %v4376 = vmul.f32 %v4338, %v103
  %v4377 = vmul.f32 %v4341, %v103
  %v4378 = vmul.f32 %v4344, %v103
  %v4379 = vmul.f32 %v4347, %v103
  %v4380 = vmul.f32 %v4350, %v103
  %v4381 = vmul.f32 %v4353, %v103
  %v4382 = vmul.f32 %v4356, %v103
  %v4383 = vmul.f32 %v4359, %v103
  %v4384 = vmul.f32 %v4362, %v103
  %v4385 = vmul.f32 %v4365, %v103
  %v4386 = vmul.f32 %v4368, %v103
  %v4387 = vmul.f32 %v4371, %v103
  %v4388 = vadd.f32 %v4372, 1e-05
  %v4389 = vadd.f32 %v4373, 1e-05
  %v4390 = vadd.f32 %v4374, 1e-05
  %v4391 = vadd.f32 %v4375, 1e-05
  %v4392 = vadd.f32 %v4376, 1e-05
  %v4393 = vadd.f32 %v4377, 1e-05
  %v4394 = vadd.f32 %v4378, 1e-05
  %v4395 = vadd.f32 %v4379, 1e-05
  %v4396 = vadd.f32 %v4380, 1e-05
  %v4397 = vadd.f32 %v4381, 1e-05
  %v4398 = vadd.f32 %v4382, 1e-05
  %v4399 = vadd.f32 %v4383, 1e-05
  %v4400 = vadd.f32 %v4384, 1e-05
  %v4401 = vadd.f32 %v4385, 1e-05
  %v4402 = vadd.f32 %v4386, 1e-05
  %v4403 = vadd.f32 %v4387, 1e-05
  %v4404 = vrsqrt.pop %v4388
  %v4405 = vrsqrt.pop %v4389
  %v4406 = vrsqrt.pop %v4390
  %v4407 = vrsqrt.pop %v4391
  %v4408 = vrsqrt.pop %v4392
  %v4409 = vrsqrt.pop %v4393
  %v4410 = vrsqrt.pop %v4394
  %v4411 = vrsqrt.pop %v4395
  %v4412 = vrsqrt.pop %v4396
  %v4413 = vrsqrt.pop %v4397
  %v4414 = vrsqrt.pop %v4398
  %v4415 = vrsqrt.pop %v4399
  %v4416 = vrsqrt.pop %v4400
  %v4417 = vrsqrt.pop %v4401
  %v4418 = vrsqrt.pop %v4402
  %v4419 = vrsqrt.pop %v4403
  %v4420 = vmul.f32 %v4292, %v4404
  %v4421 = vmul.f32 %v4293, %v4405
  %v4422 = vmul.f32 %v4294, %v4406
  %v4423 = vmul.f32 %v4295, %v4407
  %v4424 = vmul.f32 %v4296, %v4408
  %v4425 = vmul.f32 %v4297, %v4409
  %v4426 = vmul.f32 %v4298, %v4410
  %v4427 = vmul.f32 %v4299, %v4411
  %v4428 = vmul.f32 %v4300, %v4412
  %v4429 = vmul.f32 %v4301, %v4413
  %v4430 = vmul.f32 %v4302, %v4414
  %v4431 = vmul.f32 %v4303, %v4415
  %v4432 = vmul.f32 %v4304, %v4416
  %v4433 = vmul.f32 %v4305, %v4417
  %v4434 = vmul.f32 %v4306, %v4418
  %v4435 = vmul.f32 %v4307, %v4419
  %v4436 = vld [vmem:[%s5] sm:$0x1]
  %v4438 = vlaneseq
  %v4439 = vshrl.u32 %v4438, 7
  %v4440 = vsub.s32 0, %v4439
  %v4441 = vrot.slane %v4436, %v4440
  %v4443 = vmul.f32 %v4420, %v4441
  %v4444 = vmul.f32 %v4421, %v4441
  %v4445 = vmul.f32 %v4422, %v4441
  %v4446 = vmul.f32 %v4423, %v4441
  %v4447 = vmul.f32 %v4424, %v4441
  %v4448 = vmul.f32 %v4425, %v4441
  %v4449 = vmul.f32 %v4426, %v4441
  %v4450 = vmul.f32 %v4427, %v4441
  %v4451 = vmul.f32 %v4428, %v4441
  %v4452 = vmul.f32 %v4429, %v4441
  %v4453 = vmul.f32 %v4430, %v4441
  %v4454 = vmul.f32 %v4431, %v4441
  %v4455 = vmul.f32 %v4432, %v4441
  %v4456 = vmul.f32 %v4433, %v4441
  %v4457 = vmul.f32 %v4434, %v4441
  %v4458 = vmul.f32 %v4435, %v4441
  %v4459 = vld [vmem:[%s6] sm:$0x1]
  %v4461 = vlaneseq
  %v4462 = vshrl.u32 %v4461, 7
  %v4463 = vsub.s32 0, %v4462
  %v4464 = vrot.slane %v4459, %v4463
  %v4466 = vadd.f32 %v4443, %v4464
  %v4467 = vadd.f32 %v4444, %v4464
  %v4468 = vadd.f32 %v4445, %v4464
  %v4469 = vadd.f32 %v4446, %v4464
  %v4470 = vadd.f32 %v4447, %v4464
  %v4471 = vadd.f32 %v4448, %v4464
  %v4472 = vadd.f32 %v4449, %v4464
  %v4473 = vadd.f32 %v4450, %v4464
  %v4474 = vadd.f32 %v4451, %v4464
  %v4475 = vadd.f32 %v4452, %v4464
  %v4476 = vadd.f32 %v4453, %v4464
  %v4477 = vadd.f32 %v4454, %v4464
  %v4478 = vadd.f32 %v4455, %v4464
  %v4479 = vadd.f32 %v4456, %v4464
  %v4480 = vadd.f32 %v4457, %v4464
  %v4481 = vadd.f32 %v4458, %v4464
  %v4482 = vld [vmem:[%s7] sm:$0xff]
  %v4483 = vld [vmem:[%s7 + $0x8] sm:$0xff]
  %v4484 = vld [vmem:[%s7 + $0x10] sm:$0xff]
  %v4485 = vld [vmem:[%s7 + $0x18] sm:$0xff]
  %v4486 = vld [vmem:[%s8] sm:$0x1]
  %v4488 = vlaneseq
  %v4489 = vshrl.u32 %v4488, 7
  %v4490 = vsub.s32 0, %v4489
  %v4491 = vrot.slane %v4486, %v4490
  %v4494 = vsel %vm54, %v4466, 0
  %v4497 = vsel %vm54, %v4467, 0
  %v4500 = vsel %vm54, %v4468, 0
  %v4503 = vsel %vm54, %v4469, 0
  %v4506 = vsel %vm54, %v4470, 0
  %v4509 = vsel %vm54, %v4471, 0
  %v4512 = vsel %vm54, %v4472, 0
  %v4515 = vsel %vm54, %v4473, 0
  %v4518 = vsel %vm54, %v4474, 0
  %v4521 = vsel %vm54, %v4475, 0
  %v4524 = vsel %vm54, %v4476, 0
  %v4527 = vsel %vm54, %v4477, 0
  %v4530 = vsel %vm54, %v4478, 0
  %v4533 = vsel %vm54, %v4479, 0
  %v4536 = vsel %vm54, %v4480, 0
  %v4539 = vsel %vm54, %v4481, 0
  %4541 = vmatprep.subr.mxu0 0.0
  %4542 = vmatpush1.msra.mxu0 0.0
  %4543 = vmatprep.subr.mxu0 0.0
  %4544 = vmatpush1.msra.mxu0 0.0
  %4545 = vmatprep.subr.mxu0 0.0
  %4546 = vmatpush1.msra.mxu0 0.0
  %4547 = vmatprep.subr.mxu0 0.0
  %4548 = vmatpush1.msra.mxu0 0.0
  %4549 = vmatprep.subr.mxu0 0.0
  %4550 = vmatpush1.msra.mxu0 0.0
  %4551 = vmatprep.subr.mxu0 0.0
  %4552 = vmatpush1.msra.mxu0 0.0
  %4553 = vmatprep.subr.mxu0 0.0
  %4554 = vmatpush1.msra.mxu0 0.0
  %4555 = vmatprep.subr.mxu0 0.0
  %4556 = vmatpush1.msra.mxu0 0.0
  %4557 = vmatprep.subr.mxu0 0.0
  %4558 = vmatpush1.msra.mxu0 0.0
  %4559 = vmatprep.subr.mxu0 0.0
  %4560 = vmatpush1.msra.mxu0 0.0
  %4561 = vmatprep.subr.mxu0 0.0
  %4562 = vmatpush1.msra.mxu0 0.0
  %4563 = vmatprep.subr.mxu0 0.0
  %4564 = vmatpush1.msra.mxu0 0.0
  %4565 = vmatprep.subr.mxu0 0.0
  %4566 = vmatpush1.msra.mxu0 %v4485
  %4567 = vmatprep.subr.mxu0 0.0
  %4568 = vmatpush1.msra.mxu0 %v4484
  %4569 = vmatprep.subr.mxu0 0.0
  %4570 = vmatpush1.msra.mxu0 %v4483
  %4571 = vmatprep.subr.mxu0 0.0
  %4572 = vmatpush1.msra.mxu0 %v4482
  %4573 = vmatprep.subr.mxu0 0.0
  %4574 = vmatpush2.msra.mxu0 0.0
  %4575 = vmatprep.subr.mxu0 0.0
  %4576 = vmatpush2.msra.mxu0 0.0
  %4577 = vmatprep.subr.mxu0 0.0
  %4578 = vmatpush2.msra.mxu0 0.0
  %4579 = vmatprep.subr.mxu0 0.0
  %4580 = vmatpush2.msra.mxu0 0.0
  %4581 = vmatprep.subr.mxu0 0.0
  %4582 = vmatpush2.msra.mxu0 0.0
  %4583 = vmatprep.subr.mxu0 0.0
  %4584 = vmatpush2.msra.mxu0 0.0
  %4585 = vmatprep.subr.mxu0 0.0
  %4586 = vmatpush2.msra.mxu0 0.0
  %4587 = vmatprep.subr.mxu0 0.0
  %4588 = vmatpush2.msra.mxu0 0.0
  %4589 = vmatprep.subr.mxu0 0.0
  %4590 = vmatpush2.msra.mxu0 0.0
  %4591 = vmatprep.subr.mxu0 0.0
  %4592 = vmatpush2.msra.mxu0 0.0
  %4593 = vmatprep.subr.mxu0 0.0
  %4594 = vmatpush2.msra.mxu0 0.0
  %4595 = vmatprep.subr.mxu0 0.0
  %4596 = vmatpush2.msra.mxu0 0.0
  %4597 = vmatprep.subr.mxu0 0.0
  %4598 = vmatpush2.msra.mxu0 0.0
  %4599 = vmatprep.subr.mxu0 0.0
  %4600 = vmatpush2.msra.mxu0 0.0
  %4601 = vmatprep.subr.mxu0 0.0
  %4602 = vmatpush2.msra.mxu0 0.0
  %4603 = vmatprep.subr.mxu0 0.0
  %4604 = vmatpush2.msra.mxu0 0.0
  %4605 = vmatprep.mubr.f32.mxu0 0.0
  %4606 = vmatmul.mubr.f32.gmra.mxu0 %v4494
  %v4607 = vpop.f32.mrf.mxu0
  %v4608 = vadd.f32 %v4491, %v4607
  %v4609 = vpop.f32.mrf.mxu0
  %4610 = vmatprep.mubr.f32.mxu0 0.0
  %4611 = vmatmul.mubr.f32.gmra.mxu0 %v4497
  %v4612 = vpop.f32.mrf.mxu0
  %v4613 = vadd.f32 %v4491, %v4612
  %v4614 = vpop.f32.mrf.mxu0
  %4615 = vmatprep.mubr.f32.mxu0 0.0
  %4616 = vmatmul.mubr.f32.gmra.mxu0 %v4500
  %v4617 = vpop.f32.mrf.mxu0
  %v4618 = vadd.f32 %v4491, %v4617
  %v4619 = vpop.f32.mrf.mxu0
  %4620 = vmatprep.mubr.f32.mxu0 0.0
  %4621 = vmatmul.mubr.f32.gmra.mxu0 %v4503
  %v4622 = vpop.f32.mrf.mxu0
  %v4623 = vadd.f32 %v4491, %v4622
  %v4624 = vpop.f32.mrf.mxu0
  %4625 = vmatprep.mubr.f32.mxu0 0.0
  %4626 = vmatmul.mubr.f32.gmra.mxu0 %v4506
  %v4627 = vpop.f32.mrf.mxu0
  %v4628 = vadd.f32 %v4491, %v4627
  %v4629 = vpop.f32.mrf.mxu0
  %4630 = vmatprep.mubr.f32.mxu0 0.0
  %4631 = vmatmul.mubr.f32.gmra.mxu0 %v4509
  %v4632 = vpop.f32.mrf.mxu0
  %v4633 = vadd.f32 %v4491, %v4632
  %v4634 = vpop.f32.mrf.mxu0
  %4635 = vmatprep.mubr.f32.mxu0 0.0
  %4636 = vmatmul.mubr.f32.gmra.mxu0 %v4512
  %v4637 = vpop.f32.mrf.mxu0
  %v4638 = vadd.f32 %v4491, %v4637
  %v4639 = vpop.f32.mrf.mxu0
  %4640 = vmatprep.mubr.f32.mxu0 0.0
  %4641 = vmatmul.mubr.f32.gmra.mxu0 %v4515
  %v4642 = vpop.f32.mrf.mxu0
  %v4643 = vadd.f32 %v4491, %v4642
  %v4644 = vpop.f32.mrf.mxu0
  %4645 = vmatprep.mubr.f32.mxu0 0.0
  %4646 = vmatmul.mubr.f32.gmra.mxu0 %v4518
  %v4647 = vpop.f32.mrf.mxu0
  %v4648 = vadd.f32 %v4491, %v4647
  %v4649 = vpop.f32.mrf.mxu0
  %4650 = vmatprep.mubr.f32.mxu0 0.0
  %4651 = vmatmul.mubr.f32.gmra.mxu0 %v4521
  %v4652 = vpop.f32.mrf.mxu0
  %v4653 = vadd.f32 %v4491, %v4652
  %v4654 = vpop.f32.mrf.mxu0
  %4655 = vmatprep.mubr.f32.mxu0 0.0
  %4656 = vmatmul.mubr.f32.gmra.mxu0 %v4524
  %v4657 = vpop.f32.mrf.mxu0
  %v4658 = vadd.f32 %v4491, %v4657
  %v4659 = vpop.f32.mrf.mxu0
  %4660 = vmatprep.mubr.f32.mxu0 0.0
  %4661 = vmatmul.mubr.f32.gmra.mxu0 %v4527
  %v4662 = vpop.f32.mrf.mxu0
  %v4663 = vadd.f32 %v4491, %v4662
  %v4664 = vpop.f32.mrf.mxu0
  %4665 = vmatprep.mubr.f32.mxu0 0.0
  %4666 = vmatmul.mubr.f32.gmra.mxu0 %v4530
  %v4667 = vpop.f32.mrf.mxu0
  %v4668 = vadd.f32 %v4491, %v4667
  %v4669 = vpop.f32.mrf.mxu0
  %4670 = vmatprep.mubr.f32.mxu0 0.0
  %4671 = vmatmul.mubr.f32.gmra.mxu0 %v4533
  %v4672 = vpop.f32.mrf.mxu0
  %v4673 = vadd.f32 %v4491, %v4672
  %v4674 = vpop.f32.mrf.mxu0
  %4675 = vmatprep.mubr.f32.mxu0 0.0
  %4676 = vmatmul.mubr.f32.gmra.mxu0 %v4536
  %v4677 = vpop.f32.mrf.mxu0
  %v4678 = vadd.f32 %v4491, %v4677
  %v4679 = vpop.f32.mrf.mxu0
  %4680 = vmatprep.mubr.f32.mxu0 0.0
  %4681 = vmatmul.mubr.f32.gmra.mxu0 %v4539
  %v4682 = vpop.f32.mrf.mxu0
  %v4683 = vadd.f32 %v4491, %v4682
  %v4684 = vpop.f32.mrf.mxu0
  %4685 = vdwg.mxu0
  %v4686 = vmul.f32 %v4608, 0.5
  %v4687 = vmul.f32 %v4613, 0.5
  %v4688 = vmul.f32 %v4618, 0.5
  %v4689 = vmul.f32 %v4623, 0.5
  %v4690 = vmul.f32 %v4628, 0.5
  %v4691 = vmul.f32 %v4633, 0.5
  %v4692 = vmul.f32 %v4638, 0.5
  %v4693 = vmul.f32 %v4643, 0.5
  %v4694 = vmul.f32 %v4648, 0.5
  %v4695 = vmul.f32 %v4653, 0.5
  %v4696 = vmul.f32 %v4658, 0.5
  %v4697 = vmul.f32 %v4663, 0.5
  %v4698 = vmul.f32 %v4668, 0.5
  %v4699 = vmul.f32 %v4673, 0.5
  %v4700 = vmul.f32 %v4678, 0.5
  %v4701 = vmul.f32 %v4683, 0.5
  %v4702 = vmul.f32 %v4608, 0.70710677
  %v4703 = vmul.f32 %v4613, 0.70710677
  %v4704 = vmul.f32 %v4618, 0.70710677
  %v4705 = vmul.f32 %v4623, 0.70710677
  %v4706 = vmul.f32 %v4628, 0.70710677
  %v4707 = vmul.f32 %v4633, 0.70710677
  %v4708 = vmul.f32 %v4638, 0.70710677
  %v4709 = vmul.f32 %v4643, 0.70710677
  %v4710 = vmul.f32 %v4648, 0.70710677
  %v4711 = vmul.f32 %v4653, 0.70710677
  %v4712 = vmul.f32 %v4658, 0.70710677
  %v4713 = vmul.f32 %v4663, 0.70710677
  %v4714 = vmul.f32 %v4668, 0.70710677
  %v4715 = vmul.f32 %v4673, 0.70710677
  %v4716 = vmul.f32 %v4678, 0.70710677
  %v4717 = vmul.f32 %v4683, 0.70710677
  %v4718 = vand.u32 2147483647, %v4702
  %v4719 = vand.u32 2147483647, %v4703
  %v4720 = vand.u32 2147483647, %v4704
  %v4721 = vand.u32 2147483647, %v4705
  %v4722 = vand.u32 2147483647, %v4706
  %v4723 = vand.u32 2147483647, %v4707
  %v4724 = vand.u32 2147483647, %v4708
  %v4725 = vand.u32 2147483647, %v4709
  %v4726 = vand.u32 2147483647, %v4710
  %v4727 = vand.u32 2147483647, %v4711
  %v4728 = vand.u32 2147483647, %v4712
  %v4729 = vand.u32 2147483647, %v4713
  %v4730 = vand.u32 2147483647, %v4714
  %v4731 = vand.u32 2147483647, %v4715
  %v4732 = vand.u32 2147483647, %v4716
  %v4733 = vand.u32 2147483647, %v4717
  %v4734 = vmul.f32 %v4718, 0.3275911
  %v4735 = vmul.f32 %v4719, 0.3275911
  %v4736 = vmul.f32 %v4720, 0.3275911
  %v4737 = vmul.f32 %v4721, 0.3275911
  %v4738 = vmul.f32 %v4722, 0.3275911
  %v4739 = vmul.f32 %v4723, 0.3275911
  %v4740 = vmul.f32 %v4724, 0.3275911
  %v4741 = vmul.f32 %v4725, 0.3275911
  %v4742 = vmul.f32 %v4726, 0.3275911
  %v4743 = vmul.f32 %v4727, 0.3275911
  %v4744 = vmul.f32 %v4728, 0.3275911
  %v4745 = vmul.f32 %v4729, 0.3275911
  %v4746 = vmul.f32 %v4730, 0.3275911
  %v4747 = vmul.f32 %v4731, 0.3275911
  %v4748 = vmul.f32 %v4732, 0.3275911
  %v4749 = vmul.f32 %v4733, 0.3275911
  %v4750 = vadd.f32 %v4734, 1.0
  %v4751 = vadd.f32 %v4735, 1.0
  %v4752 = vadd.f32 %v4736, 1.0
  %v4753 = vadd.f32 %v4737, 1.0
  %v4754 = vadd.f32 %v4738, 1.0
  %v4755 = vadd.f32 %v4739, 1.0
  %v4756 = vadd.f32 %v4740, 1.0
  %v4757 = vadd.f32 %v4741, 1.0
  %v4758 = vadd.f32 %v4742, 1.0
  %v4759 = vadd.f32 %v4743, 1.0
  %v4760 = vadd.f32 %v4744, 1.0
  %v4761 = vadd.f32 %v4745, 1.0
  %v4762 = vadd.f32 %v4746, 1.0
  %v4763 = vadd.f32 %v4747, 1.0
  %v4764 = vadd.f32 %v4748, 1.0
  %v4765 = vadd.f32 %v4749, 1.0
  %v4766 = vrcp.pop %v4750
  %v4767 = vmul.f32 1.0, %v4766
  %v4768 = vrcp.pop %v4751
  %v4769 = vmul.f32 1.0, %v4768
  %v4770 = vrcp.pop %v4752
  %v4771 = vmul.f32 1.0, %v4770
  %v4772 = vrcp.pop %v4753
  %v4773 = vmul.f32 1.0, %v4772
  %v4774 = vrcp.pop %v4754
  %v4775 = vmul.f32 1.0, %v4774
  %v4776 = vrcp.pop %v4755
  %v4777 = vmul.f32 1.0, %v4776
  %v4778 = vrcp.pop %v4756
  %v4779 = vmul.f32 1.0, %v4778
  %v4780 = vrcp.pop %v4757
  %v4781 = vmul.f32 1.0, %v4780
  %v4782 = vrcp.pop %v4758
  %v4783 = vmul.f32 1.0, %v4782
  %v4784 = vrcp.pop %v4759
  %v4785 = vmul.f32 1.0, %v4784
  %v4786 = vrcp.pop %v4760
  %v4787 = vmul.f32 1.0, %v4786
  %v4788 = vrcp.pop %v4761
  %v4789 = vmul.f32 1.0, %v4788
  %v4790 = vrcp.pop %v4762
  %v4791 = vmul.f32 1.0, %v4790
  %v4792 = vrcp.pop %v4763
  %v4793 = vmul.f32 1.0, %v4792
  %v4794 = vrcp.pop %v4764
  %v4795 = vmul.f32 1.0, %v4794
  %v4796 = vrcp.pop %v4765
  %v4797 = vmul.f32 1.0, %v4796
  %v4798 = vmul.f32 %v4767, 1.0614054
  %v4799 = vmul.f32 %v4769, 1.0614054
  %v4800 = vmul.f32 %v4771, 1.0614054
  %v4801 = vmul.f32 %v4773, 1.0614054
  %v4802 = vmul.f32 %v4775, 1.0614054
  %v4803 = vmul.f32 %v4777, 1.0614054
  %v4804 = vmul.f32 %v4779, 1.0614054
  %v4805 = vmul.f32 %v4781, 1.0614054
  %v4806 = vmul.f32 %v4783, 1.0614054
  %v4807 = vmul.f32 %v4785, 1.0614054
  %v4808 = vmul.f32 %v4787, 1.0614054
  %v4809 = vmul.f32 %v4789, 1.0614054
  %v4810 = vmul.f32 %v4791, 1.0614054
  %v4811 = vmul.f32 %v4793, 1.0614054
  %v4812 = vmul.f32 %v4795, 1.0614054
  %v4813 = vmul.f32 %v4797, 1.0614054
  %v4814 = vadd.f32 %v4798, -1.4531521
  %v4815 = vadd.f32 %v4799, -1.4531521
  %v4816 = vadd.f32 %v4800, -1.4531521
  %v4817 = vadd.f32 %v4801, -1.4531521
  %v4818 = vadd.f32 %v4802, -1.4531521
  %v4819 = vadd.f32 %v4803, -1.4531521
  %v4820 = vadd.f32 %v4804, -1.4531521
  %v4821 = vadd.f32 %v4805, -1.4531521
  %v4822 = vadd.f32 %v4806, -1.4531521
  %v4823 = vadd.f32 %v4807, -1.4531521
  %v4824 = vadd.f32 %v4808, -1.4531521
  %v4825 = vadd.f32 %v4809, -1.4531521
  %v4826 = vadd.f32 %v4810, -1.4531521
  %v4827 = vadd.f32 %v4811, -1.4531521
  %v4828 = vadd.f32 %v4812, -1.4531521
  %v4829 = vadd.f32 %v4813, -1.4531521
  %v4830 = vmul.f32 %v4814, %v4767
  %v4831 = vmul.f32 %v4815, %v4769
  %v4832 = vmul.f32 %v4816, %v4771
  %v4833 = vmul.f32 %v4817, %v4773
  %v4834 = vmul.f32 %v4818, %v4775
  %v4835 = vmul.f32 %v4819, %v4777
  %v4836 = vmul.f32 %v4820, %v4779
  %v4837 = vmul.f32 %v4821, %v4781
  %v4838 = vmul.f32 %v4822, %v4783
  %v4839 = vmul.f32 %v4823, %v4785
  %v4840 = vmul.f32 %v4824, %v4787
  %v4841 = vmul.f32 %v4825, %v4789
  %v4842 = vmul.f32 %v4826, %v4791
  %v4843 = vmul.f32 %v4827, %v4793
  %v4844 = vmul.f32 %v4828, %v4795
  %v4845 = vmul.f32 %v4829, %v4797
  %v4846 = vadd.f32 %v4830, 1.4214138
  %v4847 = vadd.f32 %v4831, 1.4214138
  %v4848 = vadd.f32 %v4832, 1.4214138
  %v4849 = vadd.f32 %v4833, 1.4214138
  %v4850 = vadd.f32 %v4834, 1.4214138
  %v4851 = vadd.f32 %v4835, 1.4214138
  %v4852 = vadd.f32 %v4836, 1.4214138
  %v4853 = vadd.f32 %v4837, 1.4214138
  %v4854 = vadd.f32 %v4838, 1.4214138
  %v4855 = vadd.f32 %v4839, 1.4214138
  %v4856 = vadd.f32 %v4840, 1.4214138
  %v4857 = vadd.f32 %v4841, 1.4214138
  %v4858 = vadd.f32 %v4842, 1.4214138
  %v4859 = vadd.f32 %v4843, 1.4214138
  %v4860 = vadd.f32 %v4844, 1.4214138
  %v4861 = vadd.f32 %v4845, 1.4214138
  %v4862 = vmul.f32 %v4846, %v4767
  %v4863 = vmul.f32 %v4847, %v4769
  %v4864 = vmul.f32 %v4848, %v4771
  %v4865 = vmul.f32 %v4849, %v4773
  %v4866 = vmul.f32 %v4850, %v4775
  %v4867 = vmul.f32 %v4851, %v4777
  %v4868 = vmul.f32 %v4852, %v4779
  %v4869 = vmul.f32 %v4853, %v4781
  %v4870 = vmul.f32 %v4854, %v4783
  %v4871 = vmul.f32 %v4855, %v4785
  %v4872 = vmul.f32 %v4856, %v4787
  %v4873 = vmul.f32 %v4857, %v4789
  %v4874 = vmul.f32 %v4858, %v4791
  %v4875 = vmul.f32 %v4859, %v4793
  %v4876 = vmul.f32 %v4860, %v4795
  %v4877 = vmul.f32 %v4861, %v4797
  %v4878 = vadd.f32 %v4862, -0.28449672
  %v4879 = vadd.f32 %v4863, -0.28449672
  %v4880 = vadd.f32 %v4864, -0.28449672
  %v4881 = vadd.f32 %v4865, -0.28449672
  %v4882 = vadd.f32 %v4866, -0.28449672
  %v4883 = vadd.f32 %v4867, -0.28449672
  %v4884 = vadd.f32 %v4868, -0.28449672
  %v4885 = vadd.f32 %v4869, -0.28449672
  %v4886 = vadd.f32 %v4870, -0.28449672
  %v4887 = vadd.f32 %v4871, -0.28449672
  %v4888 = vadd.f32 %v4872, -0.28449672
  %v4889 = vadd.f32 %v4873, -0.28449672
  %v4890 = vadd.f32 %v4874, -0.28449672
  %v4891 = vadd.f32 %v4875, -0.28449672
  %v4892 = vadd.f32 %v4876, -0.28449672
  %v4893 = vadd.f32 %v4877, -0.28449672
  %v4894 = vmul.f32 %v4878, %v4767
  %v4895 = vmul.f32 %v4879, %v4769
  %v4896 = vmul.f32 %v4880, %v4771
  %v4897 = vmul.f32 %v4881, %v4773
  %v4898 = vmul.f32 %v4882, %v4775
  %v4899 = vmul.f32 %v4883, %v4777
  %v4900 = vmul.f32 %v4884, %v4779
  %v4901 = vmul.f32 %v4885, %v4781
  %v4902 = vmul.f32 %v4886, %v4783
  %v4903 = vmul.f32 %v4887, %v4785
  %v4904 = vmul.f32 %v4888, %v4787
  %v4905 = vmul.f32 %v4889, %v4789
  %v4906 = vmul.f32 %v4890, %v4791
  %v4907 = vmul.f32 %v4891, %v4793
  %v4908 = vmul.f32 %v4892, %v4795
  %v4909 = vmul.f32 %v4893, %v4797
  %v4910 = vadd.f32 %v4894, 0.2548296
  %v4911 = vadd.f32 %v4895, 0.2548296
  %v4912 = vadd.f32 %v4896, 0.2548296
  %v4913 = vadd.f32 %v4897, 0.2548296
  %v4914 = vadd.f32 %v4898, 0.2548296
  %v4915 = vadd.f32 %v4899, 0.2548296
  %v4916 = vadd.f32 %v4900, 0.2548296
  %v4917 = vadd.f32 %v4901, 0.2548296
  %v4918 = vadd.f32 %v4902, 0.2548296
  %v4919 = vadd.f32 %v4903, 0.2548296
  %v4920 = vadd.f32 %v4904, 0.2548296
  %v4921 = vadd.f32 %v4905, 0.2548296
  %v4922 = vadd.f32 %v4906, 0.2548296
  %v4923 = vadd.f32 %v4907, 0.2548296
  %v4924 = vadd.f32 %v4908, 0.2548296
  %v4925 = vadd.f32 %v4909, 0.2548296
  %v4926 = vmul.f32 %v4910, %v4767
  %v4927 = vmul.f32 %v4911, %v4769
  %v4928 = vmul.f32 %v4912, %v4771
  %v4929 = vmul.f32 %v4913, %v4773
  %v4930 = vmul.f32 %v4914, %v4775
  %v4931 = vmul.f32 %v4915, %v4777
  %v4932 = vmul.f32 %v4916, %v4779
  %v4933 = vmul.f32 %v4917, %v4781
  %v4934 = vmul.f32 %v4918, %v4783
  %v4935 = vmul.f32 %v4919, %v4785
  %v4936 = vmul.f32 %v4920, %v4787
  %v4937 = vmul.f32 %v4921, %v4789
  %v4938 = vmul.f32 %v4922, %v4791
  %v4939 = vmul.f32 %v4923, %v4793
  %v4940 = vmul.f32 %v4924, %v4795
  %v4941 = vmul.f32 %v4925, %v4797
  %v4942 = vmul.f32 %v4718, %v4718
  %v4943 = vmul.f32 %v4719, %v4719
  %v4944 = vmul.f32 %v4720, %v4720
  %v4945 = vmul.f32 %v4721, %v4721
  %v4946 = vmul.f32 %v4722, %v4722
  %v4947 = vmul.f32 %v4723, %v4723
  %v4948 = vmul.f32 %v4724, %v4724
  %v4949 = vmul.f32 %v4725, %v4725
  %v4950 = vmul.f32 %v4726, %v4726
  %v4951 = vmul.f32 %v4727, %v4727
  %v4952 = vmul.f32 %v4728, %v4728
  %v4953 = vmul.f32 %v4729, %v4729
  %v4954 = vmul.f32 %v4730, %v4730
  %v4955 = vmul.f32 %v4731, %v4731
  %v4956 = vmul.f32 %v4732, %v4732
  %v4957 = vmul.f32 %v4733, %v4733
  %v4958 = vsub.f32 0.0, %v4942
  %v4959 = vsub.f32 0.0, %v4943
  %v4960 = vsub.f32 0.0, %v4944
  %v4961 = vsub.f32 0.0, %v4945
  %v4962 = vsub.f32 0.0, %v4946
  %v4963 = vsub.f32 0.0, %v4947
  %v4964 = vsub.f32 0.0, %v4948
  %v4965 = vsub.f32 0.0, %v4949
  %v4966 = vsub.f32 0.0, %v4950
  %v4967 = vsub.f32 0.0, %v4951
  %v4968 = vsub.f32 0.0, %v4952
  %v4969 = vsub.f32 0.0, %v4953
  %v4970 = vsub.f32 0.0, %v4954
  %v4971 = vsub.f32 0.0, %v4955
  %v4972 = vsub.f32 0.0, %v4956
  %v4973 = vsub.f32 0.0, %v4957
  %v4974 = vmul.f32 %v4958, 1.442695
  %v4975 = vpow.pop %v4974
  %v4976 = vmul.f32 %v4959, 1.442695
  %v4977 = vpow.pop %v4976
  %v4978 = vmul.f32 %v4960, 1.442695
  %v4979 = vpow.pop %v4978
  %v4980 = vmul.f32 %v4961, 1.442695
  %v4981 = vpow.pop %v4980
  %v4982 = vmul.f32 %v4962, 1.442695
  %v4983 = vpow.pop %v4982
  %v4984 = vmul.f32 %v4963, 1.442695
  %v4985 = vpow.pop %v4984
  %v4986 = vmul.f32 %v4964, 1.442695
  %v4987 = vpow.pop %v4986
  %v4988 = vmul.f32 %v4965, 1.442695
  %v4989 = vpow.pop %v4988
  %v4990 = vmul.f32 %v4966, 1.442695
  %v4991 = vpow.pop %v4990
  %v4992 = vmul.f32 %v4967, 1.442695
  %v4993 = vpow.pop %v4992
  %v4994 = vmul.f32 %v4968, 1.442695
  %v4995 = vpow.pop %v4994
  %v4996 = vmul.f32 %v4969, 1.442695
  %v4997 = vpow.pop %v4996
  %v4998 = vmul.f32 %v4970, 1.442695
  %v4999 = vpow.pop %v4998
  %v5000 = vmul.f32 %v4971, 1.442695
  %v5001 = vpow.pop %v5000
  %v5002 = vmul.f32 %v4972, 1.442695
  %v5003 = vpow.pop %v5002
  %v5004 = vmul.f32 %v4973, 1.442695
  %v5005 = vpow.pop %v5004
  %v5006 = vmul.f32 %v4926, %v4975
  %v5007 = vmul.f32 %v4927, %v4977
  %v5008 = vmul.f32 %v4928, %v4979
  %v5009 = vmul.f32 %v4929, %v4981
  %v5010 = vmul.f32 %v4930, %v4983
  %v5011 = vmul.f32 %v4931, %v4985
  %v5012 = vmul.f32 %v4932, %v4987
  %v5013 = vmul.f32 %v4933, %v4989
  %v5014 = vmul.f32 %v4934, %v4991
  %v5015 = vmul.f32 %v4935, %v4993
  %v5016 = vmul.f32 %v4936, %v4995
  %v5017 = vmul.f32 %v4937, %v4997
  %v5018 = vmul.f32 %v4938, %v4999
  %v5019 = vmul.f32 %v4939, %v5001
  %v5020 = vmul.f32 %v4940, %v5003
  %v5021 = vmul.f32 %v4941, %v5005
  %v5022 = vsub.f32 1.0, %v5006
  %v5023 = vsub.f32 1.0, %v5007
  %v5024 = vsub.f32 1.0, %v5008
  %v5025 = vsub.f32 1.0, %v5009
  %v5026 = vsub.f32 1.0, %v5010
  %v5027 = vsub.f32 1.0, %v5011
  %v5028 = vsub.f32 1.0, %v5012
  %v5029 = vsub.f32 1.0, %v5013
  %v5030 = vsub.f32 1.0, %v5014
  %v5031 = vsub.f32 1.0, %v5015
  %v5032 = vsub.f32 1.0, %v5016
  %v5033 = vsub.f32 1.0, %v5017
  %v5034 = vsub.f32 1.0, %v5018
  %v5035 = vsub.f32 1.0, %v5019
  %v5036 = vsub.f32 1.0, %v5020
  %v5037 = vsub.f32 1.0, %v5021
  %vm5038 = vcmp.ge.f32.partialorder %v4702, 0.0
  %vm5039 = vcmp.ge.f32.partialorder %v4703, 0.0
  %vm5040 = vcmp.ge.f32.partialorder %v4704, 0.0
  %vm5041 = vcmp.ge.f32.partialorder %v4705, 0.0
  %vm5042 = vcmp.ge.f32.partialorder %v4706, 0.0
  %vm5043 = vcmp.ge.f32.partialorder %v4707, 0.0
  %vm5044 = vcmp.ge.f32.partialorder %v4708, 0.0
  %vm5045 = vcmp.ge.f32.partialorder %v4709, 0.0
  %vm5046 = vcmp.ge.f32.partialorder %v4710, 0.0
  %vm5047 = vcmp.ge.f32.partialorder %v4711, 0.0
  %vm5048 = vcmp.ge.f32.partialorder %v4712, 0.0
  %vm5049 = vcmp.ge.f32.partialorder %v4713, 0.0
  %vm5050 = vcmp.ge.f32.partialorder %v4714, 0.0
  %vm5051 = vcmp.ge.f32.partialorder %v4715, 0.0
  %vm5052 = vcmp.ge.f32.partialorder %v4716, 0.0
  %vm5053 = vcmp.ge.f32.partialorder %v4717, 0.0
  %v5054 = vsub.f32 0.0, %v5022
  %v5055 = vsub.f32 0.0, %v5023
  %v5056 = vsub.f32 0.0, %v5024
  %v5057 = vsub.f32 0.0, %v5025
  %v5058 = vsub.f32 0.0, %v5026
  %v5059 = vsub.f32 0.0, %v5027
  %v5060 = vsub.f32 0.0, %v5028
  %v5061 = vsub.f32 0.0, %v5029
  %v5062 = vsub.f32 0.0, %v5030
  %v5063 = vsub.f32 0.0, %v5031
  %v5064 = vsub.f32 0.0, %v5032
  %v5065 = vsub.f32 0.0, %v5033
  %v5066 = vsub.f32 0.0, %v5034
  %v5067 = vsub.f32 0.0, %v5035
  %v5068 = vsub.f32 0.0, %v5036
  %v5069 = vsub.f32 0.0, %v5037
  %v5070 = vsel %vm5038, %v5022, %v5054
  %v5071 = vsel %vm5039, %v5023, %v5055
  %v5072 = vsel %vm5040, %v5024, %v5056
  %v5073 = vsel %vm5041, %v5025, %v5057
  %v5074 = vsel %vm5042, %v5026, %v5058
  %v5075 = vsel %vm5043, %v5027, %v5059
  %v5076 = vsel %vm5044, %v5028, %v5060
  %v5077 = vsel %vm5045, %v5029, %v5061
  %v5078 = vsel %vm5046, %v5030, %v5062
  %v5079 = vsel %vm5047, %v5031, %v5063
  %v5080 = vsel %vm5048, %v5032, %v5064
  %v5081 = vsel %vm5049, %v5033, %v5065
  %v5082 = vsel %vm5050, %v5034, %v5066
  %v5083 = vsel %vm5051, %v5035, %v5067
  %v5084 = vsel %vm5052, %v5036, %v5068
  %v5085 = vsel %vm5053, %v5037, %v5069
  %v5086 = vadd.f32 %v5070, 1.0
  %v5087 = vadd.f32 %v5071, 1.0
  %v5088 = vadd.f32 %v5072, 1.0
  %v5089 = vadd.f32 %v5073, 1.0
  %v5090 = vadd.f32 %v5074, 1.0
  %v5091 = vadd.f32 %v5075, 1.0
  %v5092 = vadd.f32 %v5076, 1.0
  %v5093 = vadd.f32 %v5077, 1.0
  %v5094 = vadd.f32 %v5078, 1.0
  %v5095 = vadd.f32 %v5079, 1.0
  %v5096 = vadd.f32 %v5080, 1.0
  %v5097 = vadd.f32 %v5081, 1.0
  %v5098 = vadd.f32 %v5082, 1.0
  %v5099 = vadd.f32 %v5083, 1.0
  %v5100 = vadd.f32 %v5084, 1.0
  %v5101 = vadd.f32 %v5085, 1.0
  %v5102 = vmul.f32 %v4686, %v5086
  %v5103 = vmul.f32 %v4687, %v5087
  %v5104 = vmul.f32 %v4688, %v5088
  %v5105 = vmul.f32 %v4689, %v5089
  %v5106 = vmul.f32 %v4690, %v5090
  %v5107 = vmul.f32 %v4691, %v5091
  %v5108 = vmul.f32 %v4692, %v5092
  %v5109 = vmul.f32 %v4693, %v5093
  %v5110 = vmul.f32 %v4694, %v5094
  %v5111 = vmul.f32 %v4695, %v5095
  %v5112 = vmul.f32 %v4696, %v5096
  %v5113 = vmul.f32 %v4697, %v5097
  %v5114 = vmul.f32 %v4698, %v5098
  %v5115 = vmul.f32 %v4699, %v5099
  %v5116 = vmul.f32 %v4700, %v5100
  %v5117 = vmul.f32 %v4701, %v5101
  %v5118 = vld [vmem:[%s9] sm:$0xff]
  %v5119 = vld [vmem:[%s9 + $0x8] sm:$0xff]
  %v5120 = vld [vmem:[%s9 + $0x10] sm:$0xff]
  %v5121 = vld [vmem:[%s9 + $0x18] sm:$0xff]
  %v5122 = vld [vmem:[%s9 + $0x20] sm:$0xff]
  %v5123 = vld [vmem:[%s9 + $0x28] sm:$0xff]
  %v5124 = vld [vmem:[%s9 + $0x30] sm:$0xff]
  %v5125 = vld [vmem:[%s9 + $0x38] sm:$0xff]
  %v5126 = vld [vmem:[%s10] sm:$0x1]
  %v5128 = vlaneseq
  %v5129 = vshrl.u32 %v5128, 7
  %v5130 = vsub.s32 0, %v5129
  %v5131 = vrot.slane %v5126, %v5130
  %v5134 = vsel %vm669, %v5102, 0
  %v5137 = vsel %vm669, %v5103, 0
  %v5140 = vsel %vm669, %v5104, 0
  %v5143 = vsel %vm669, %v5105, 0
  %v5146 = vsel %vm669, %v5106, 0
  %v5149 = vsel %vm669, %v5107, 0
  %v5152 = vsel %vm669, %v5108, 0
  %v5155 = vsel %vm669, %v5109, 0
  %v5158 = vsel %vm669, %v5110, 0
  %v5161 = vsel %vm669, %v5111, 0
  %v5164 = vsel %vm669, %v5112, 0
  %v5167 = vsel %vm669, %v5113, 0
  %v5170 = vsel %vm669, %v5114, 0
  %v5173 = vsel %vm669, %v5115, 0
  %v5176 = vsel %vm669, %v5116, 0
  %v5179 = vsel %vm669, %v5117, 0
  %5181 = vmatprep.subr.mxu0 0.0
  %5182 = vmatpush1.msra.mxu0 0.0
  %5183 = vmatprep.subr.mxu0 0.0
  %5184 = vmatpush1.msra.mxu0 0.0
  %5185 = vmatprep.subr.mxu0 0.0
  %5186 = vmatpush1.msra.mxu0 0.0
  %5187 = vmatprep.subr.mxu0 0.0
  %5188 = vmatpush1.msra.mxu0 0.0
  %5189 = vmatprep.subr.mxu0 0.0
  %5190 = vmatpush1.msra.mxu0 0.0
  %5191 = vmatprep.subr.mxu0 0.0
  %5192 = vmatpush1.msra.mxu0 0.0
  %5193 = vmatprep.subr.mxu0 0.0
  %5194 = vmatpush1.msra.mxu0 0.0
  %5195 = vmatprep.subr.mxu0 0.0
  %5196 = vmatpush1.msra.mxu0 0.0
  %5197 = vmatprep.subr.mxu0 0.0
  %5198 = vmatpush1.msra.mxu0 %v5125
  %5199 = vmatprep.subr.mxu0 0.0
  %5200 = vmatpush1.msra.mxu0 %v5124
  %5201 = vmatprep.subr.mxu0 0.0
  %5202 = vmatpush1.msra.mxu0 %v5123
  %5203 = vmatprep.subr.mxu0 0.0
  %5204 = vmatpush1.msra.mxu0 %v5122
  %5205 = vmatprep.subr.mxu0 0.0
  %5206 = vmatpush1.msra.mxu0 %v5121
  %5207 = vmatprep.subr.mxu0 0.0
  %5208 = vmatpush1.msra.mxu0 %v5120
  %5209 = vmatprep.subr.mxu0 0.0
  %5210 = vmatpush1.msra.mxu0 %v5119
  %5211 = vmatprep.subr.mxu0 0.0
  %5212 = vmatpush1.msra.mxu0 %v5118
  %5213 = vmatprep.subr.mxu0 0.0
  %5214 = vmatpush2.msra.mxu0 0.0
  %5215 = vmatprep.subr.mxu0 0.0
  %5216 = vmatpush2.msra.mxu0 0.0
  %5217 = vmatprep.subr.mxu0 0.0
  %5218 = vmatpush2.msra.mxu0 0.0
  %5219 = vmatprep.subr.mxu0 0.0
  %5220 = vmatpush2.msra.mxu0 0.0
  %5221 = vmatprep.subr.mxu0 0.0
  %5222 = vmatpush2.msra.mxu0 0.0
  %5223 = vmatprep.subr.mxu0 0.0
  %5224 = vmatpush2.msra.mxu0 0.0
  %5225 = vmatprep.subr.mxu0 0.0
  %5226 = vmatpush2.msra.mxu0 0.0
  %5227 = vmatprep.subr.mxu0 0.0
  %5228 = vmatpush2.msra.mxu0 0.0
  %5229 = vmatprep.subr.mxu0 0.0
  %5230 = vmatpush2.msra.mxu0 0.0
  %5231 = vmatprep.subr.mxu0 0.0
  %5232 = vmatpush2.msra.mxu0 0.0
  %5233 = vmatprep.subr.mxu0 0.0
  %5234 = vmatpush2.msra.mxu0 0.0
  %5235 = vmatprep.subr.mxu0 0.0
  %5236 = vmatpush2.msra.mxu0 0.0
  %5237 = vmatprep.subr.mxu0 0.0
  %5238 = vmatpush2.msra.mxu0 0.0
  %5239 = vmatprep.subr.mxu0 0.0
  %5240 = vmatpush2.msra.mxu0 0.0
  %5241 = vmatprep.subr.mxu0 0.0
  %5242 = vmatpush2.msra.mxu0 0.0
  %5243 = vmatprep.subr.mxu0 0.0
  %5244 = vmatpush2.msra.mxu0 0.0
  %5245 = vmatprep.mubr.f32.mxu0 0.0
  %5246 = vmatmul.mubr.f32.gmra.mxu0 %v5134
  %v5247 = vpop.f32.mrf.mxu0
  %v5248 = vadd.f32 %v5131, %v5247
  %v5249 = vpop.f32.mrf.mxu0
  %5250 = vmatprep.mubr.f32.mxu0 0.0
  %5251 = vmatmul.mubr.f32.gmra.mxu0 %v5137
  %v5252 = vpop.f32.mrf.mxu0
  %v5253 = vadd.f32 %v5131, %v5252
  %v5254 = vpop.f32.mrf.mxu0
  %5255 = vmatprep.mubr.f32.mxu0 0.0
  %5256 = vmatmul.mubr.f32.gmra.mxu0 %v5140
  %v5257 = vpop.f32.mrf.mxu0
  %v5258 = vadd.f32 %v5131, %v5257
  %v5259 = vpop.f32.mrf.mxu0
  %5260 = vmatprep.mubr.f32.mxu0 0.0
  %5261 = vmatmul.mubr.f32.gmra.mxu0 %v5143
  %v5262 = vpop.f32.mrf.mxu0
  %v5263 = vadd.f32 %v5131, %v5262
  %v5264 = vpop.f32.mrf.mxu0
  %5265 = vmatprep.mubr.f32.mxu0 0.0
  %5266 = vmatmul.mubr.f32.gmra.mxu0 %v5146
  %v5267 = vpop.f32.mrf.mxu0
  %v5268 = vadd.f32 %v5131, %v5267
  %v5269 = vpop.f32.mrf.mxu0
  %5270 = vmatprep.mubr.f32.mxu0 0.0
  %5271 = vmatmul.mubr.f32.gmra.mxu0 %v5149
  %v5272 = vpop.f32.mrf.mxu0
  %v5273 = vadd.f32 %v5131, %v5272
  %v5274 = vpop.f32.mrf.mxu0
  %5275 = vmatprep.mubr.f32.mxu0 0.0
  %5276 = vmatmul.mubr.f32.gmra.mxu0 %v5152
  %v5277 = vpop.f32.mrf.mxu0
  %v5278 = vadd.f32 %v5131, %v5277
  %v5279 = vpop.f32.mrf.mxu0
  %5280 = vmatprep.mubr.f32.mxu0 0.0
  %5281 = vmatmul.mubr.f32.gmra.mxu0 %v5155
  %v5282 = vpop.f32.mrf.mxu0
  %v5283 = vadd.f32 %v5131, %v5282
  %v5284 = vpop.f32.mrf.mxu0
  %5285 = vmatprep.mubr.f32.mxu0 0.0
  %5286 = vmatmul.mubr.f32.gmra.mxu0 %v5158
  %v5287 = vpop.f32.mrf.mxu0
  %v5288 = vadd.f32 %v5131, %v5287
  %v5289 = vpop.f32.mrf.mxu0
  %5290 = vmatprep.mubr.f32.mxu0 0.0
  %5291 = vmatmul.mubr.f32.gmra.mxu0 %v5161
  %v5292 = vpop.f32.mrf.mxu0
  %v5293 = vadd.f32 %v5131, %v5292
  %v5294 = vpop.f32.mrf.mxu0
  %5295 = vmatprep.mubr.f32.mxu0 0.0
  %5296 = vmatmul.mubr.f32.gmra.mxu0 %v5164
  %v5297 = vpop.f32.mrf.mxu0
  %v5298 = vadd.f32 %v5131, %v5297
  %v5299 = vpop.f32.mrf.mxu0
  %5300 = vmatprep.mubr.f32.mxu0 0.0
  %5301 = vmatmul.mubr.f32.gmra.mxu0 %v5167
  %v5302 = vpop.f32.mrf.mxu0
  %v5303 = vadd.f32 %v5131, %v5302
  %v5304 = vpop.f32.mrf.mxu0
  %5305 = vmatprep.mubr.f32.mxu0 0.0
  %5306 = vmatmul.mubr.f32.gmra.mxu0 %v5170
  %v5307 = vpop.f32.mrf.mxu0
  %v5308 = vadd.f32 %v5131, %v5307
  %v5309 = vpop.f32.mrf.mxu0
  %5310 = vmatprep.mubr.f32.mxu0 0.0
  %5311 = vmatmul.mubr.f32.gmra.mxu0 %v5173
  %v5312 = vpop.f32.mrf.mxu0
  %v5313 = vadd.f32 %v5131, %v5312
  %v5314 = vpop.f32.mrf.mxu0
  %5315 = vmatprep.mubr.f32.mxu0 0.0
  %5316 = vmatmul.mubr.f32.gmra.mxu0 %v5176
  %v5317 = vpop.f32.mrf.mxu0
  %v5318 = vadd.f32 %v5131, %v5317
  %v5319 = vpop.f32.mrf.mxu0
  %5320 = vmatprep.mubr.f32.mxu0 0.0
  %5321 = vmatmul.mubr.f32.gmra.mxu0 %v5179
  %v5322 = vpop.f32.mrf.mxu0
  %v5323 = vadd.f32 %v5131, %v5322
  %v5324 = vpop.f32.mrf.mxu0
  %5325 = vdwg.mxu0
  %v5326 = vadd.f32 %v4212, %v5248
  %v5327 = vadd.f32 %v4213, %v5253
  %v5328 = vadd.f32 %v4214, %v5258
  %v5329 = vadd.f32 %v4215, %v5263
  %v5330 = vadd.f32 %v4216, %v5268
  %v5331 = vadd.f32 %v4217, %v5273
  %v5332 = vadd.f32 %v4218, %v5278
  %v5333 = vadd.f32 %v4219, %v5283
  %v5334 = vadd.f32 %v4220, %v5288
  %v5335 = vadd.f32 %v4221, %v5293
  %v5336 = vadd.f32 %v4222, %v5298
  %v5337 = vadd.f32 %v4223, %v5303
  %v5338 = vadd.f32 %v4224, %v5308
  %v5339 = vadd.f32 %v4225, %v5313
  %v5340 = vadd.f32 %v4226, %v5318
  %v5341 = vadd.f32 %v4227, %v5323
  %5342 = vst.msk [vmem:[%s11] sm:$0xff] %vm54, %v5326
  %5343 = vst.msk [vmem:[%s11 + $0x8] sm:$0xff] %vm54, %v5327
  %5344 = vst.msk [vmem:[%s11 + $0x10] sm:$0xff] %vm54, %v5328
  %5345 = vst.msk [vmem:[%s11 + $0x18] sm:$0xff] %vm54, %v5329
  %5346 = vst.msk [vmem:[%s11 + $0x20] sm:$0xff] %vm54, %v5330
  %5347 = vst.msk [vmem:[%s11 + $0x28] sm:$0xff] %vm54, %v5331
  %5348 = vst.msk [vmem:[%s11 + $0x30] sm:$0xff] %vm54, %v5332
  %5349 = vst.msk [vmem:[%s11 + $0x38] sm:$0xff] %vm54, %v5333
  %5350 = vst.msk [vmem:[%s11 + $0x40] sm:$0xff] %vm54, %v5334
  %5351 = vst.msk [vmem:[%s11 + $0x48] sm:$0xff] %vm54, %v5335
  %5352 = vst.msk [vmem:[%s11 + $0x50] sm:$0xff] %vm54, %v5336
  %5353 = vst.msk [vmem:[%s11 + $0x58] sm:$0xff] %vm54, %v5337
  %5354 = vst.msk [vmem:[%s11 + $0x60] sm:$0xff] %vm54, %v5338
  %5355 = vst.msk [vmem:[%s11 + $0x68] sm:$0xff] %vm54, %v5339
  %5356 = vst.msk [vmem:[%s11 + $0x70] sm:$0xff] %vm54, %v5340
  %5357 = vst.msk [vmem:[%s11 + $0x78] sm:$0xff] %vm54, %v5341
  // Predicated region
  $region46: #{tpu_custom_call.1} parent=0 // pred_check
    _
  $region47: #{tpu_custom_call.1} parent=0 // pred_check_branch
    %5359 = sbr.rel (0) target = $region49
  $region48: #{tpu_custom_call.1} parent=0 // pred_region
    _
  $region49: #{tpu_custom_call.1} parent=0 // pred_fallthru
    _
  // Predicated region
  $region50: #{tpu_custom_call.1} parent=0 // pred_check
    _
  $region51: #{tpu_custom_call.1} parent=0 // pred_check_branch
    %5361 = sbr.rel (0) target = $region53
  $region52: #{tpu_custom_call.1} parent=0 // pred_region
    _
  $region53: #{tpu_custom_call.1} parent=0 // pred_fallthru
    _

</llo_original>
